<compile_context>
chip_gen: v6e
topology: v6e:2x2x1
jax: 0.10.0
libtpu: 0.0.40
codegen_flags: <defaults>
</compile_context>

<pallas_src>
import numpy as np

import jax
import jax.numpy as jnp
from jax.experimental import pallas as pl
from jax.experimental.pallas import tpu as pltpu

# ----------------------------------------------------------------------------
# Synthetic hyperparameters (stand-ins for hyp.*) at small shapes.
# ----------------------------------------------------------------------------
B = 2
S = 3
Z = Y = X = 16                 # full-resolution voxel grid
ZZ = ZY = ZX = 8               # object ("zoom") crop resolution
XMIN, XMAX = -8.0, 8.0
YMIN, YMAX = -4.0, 4.0
ZMIN, ZMAX = -8.0, 8.0
VOX_X = (XMAX - XMIN) / X
VOX_Y = (YMAX - YMIN) / Y
VOX_Z = (ZMAX - ZMIN) / Z
MID = 16                       # featnet hidden channels
FEAT_DIM = 8                   # featnet output channels
DOWN = 4                       # featnet spatial downsample factor
LEAKY = 0.01                   # nn.LeakyReLU default slope

# object length, exactly as in the module: lx = ZZ*vox_size_Z, etc.
OBJ_LX = ZZ * VOX_Z
OBJ_LY = ZY * VOX_Y
OBJ_LZ = ZX * VOX_X

# derived object/locnet sizes (fixed for these hyperparams)
K3 = 27                        # 3x3x3 conv offsets
OD1 = ZZ // 2                  # object conv1 output spatial extent (4)
OD2 = ZZ // 4                  # object conv2 output spatial extent (2) == template size
N1 = OD1 ** 3                  # 64 conv1 output voxels
N2 = OD2 ** 3                  # 8  conv2 output voxels (== template offsets)
SD2 = Z // DOWN                # scene feature spatial extent (4)
PH = SD2 - OD2 + 1             # correlation heat extent (3)
NHEAT = PH ** 3                # 27 correlation positions


def _leaky(x):
    return jnp.where(x > 0.0, x, LEAKY * x)


# ----------------------------------------------------------------------------
# Constant tables for the fused object kernel (host-side numpy).
# ----------------------------------------------------------------------------
def _build_s2_np():
    """0/1 selection matrix (K3*N2, N1): row k*N2+j picks the conv1-output
    voxel feeding conv2 output voxel j at kernel offset k (0 where padded)."""
    s2 = np.zeros((K3 * N2, N1), np.float32)
    k = 0
    for dz in range(3):
        for dy in range(3):
            for dx in range(3):
                j = 0
                for oz in range(OD2):
                    for oy in range(OD2):
                        for ox in range(OD2):
                            iz = 2 * oz + dz - 1
                            iy = 2 * oy + dy - 1
                            ix = 2 * ox + dx - 1
                            if (0 <= iz < OD1 and 0 <= iy < OD1
                                    and 0 <= ix < OD1):
                                s2[k * N2 + j,
                                   iz * OD1 * OD1 + iy * OD1 + ix] = 1.0
                            j += 1
                k += 1
    return s2


def _build_coords_np():
    gz, gy, gx = np.meshgrid(np.arange(PH), np.arange(PH), np.arange(PH),
                             indexing="ij")
    return np.stack([gz.ravel(), gy.ravel(), gx.ravel()],
                    axis=0).astype(np.float32)          # (3, NHEAT)


_S2_NP = _build_s2_np()
_COORDS_NP = _build_coords_np()


# ----------------------------------------------------------------------------
# Pallas kernels
# ----------------------------------------------------------------------------
def _sce_conv1_kernel(w_ref, b_ref, a_ref, o_ref):
    """Lane-dense conv1: (Cout, K) @ (K, tm) + bias, leaky-relu."""
    acc = jnp.dot(w_ref[...], a_ref[...], preferred_element_type=jnp.float32)
    o_ref[...] = _leaky(acc + b_ref[...])


def _sce_conv23_kernel(w2_ref, b2_ref, w3_ref, b3_ref, a_ref, o_ref):
    """Fused conv2 + conv3(1x1x1) + per-voxel L2 norm, lane-dense output."""
    h2 = _leaky(jnp.dot(w2_ref[...], a_ref[...],
                        preferred_element_type=jnp.float32) + b2_ref[...])
    h3 = jnp.dot(w3_ref[...], h2,
                 preferred_element_type=jnp.float32) + b3_ref[...]
    nrm = jnp.sqrt(jnp.sum(h3 * h3, axis=0, keepdims=True)) + 1e-6
    o_ref[...] = h3 / nrm


def _obj_step_kernel(a1_ref, w1_ref, b1_ref, s2_ref, w2_ref, b2_ref,
                     w3_ref, b3_ref, sp_ref, co_ref, feat_ref, cexp_ref):
    """One cycle step, fully fused per batch element:
    object FeatNet3D (conv1->conv2->conv3->L2 norm) + LocNet cross-correlation
    + softmax + soft-argmax.  All intermediates stay in VMEM/vregs."""
    # conv1 (k=3, s=2, p=1) on the 8^3 crop via pre-extracted patches.
    h1 = _leaky(jnp.dot(a1_ref[0], w1_ref[...],
                        preferred_element_type=jnp.float32) + b1_ref[...])   # (N1, MID)

    # conv2 (k=3, s=2, p=1): patch gather via constant selection matmul, then
    # accumulate the 27 per-offset (N2, MID) @ (MID, MID) products.
    p2 = jnp.dot(s2_ref[...], h1, preferred_element_type=jnp.float32)        # (K3*N2, MID)
    acc = jnp.zeros((N2, MID), jnp.float32)
    for k in range(K3):
        acc = acc + jnp.dot(p2[N2 * k:N2 * (k + 1), :], w2_ref[k],
                            preferred_element_type=jnp.float32)
    h2 = _leaky(acc + b2_ref[...])                                           # (N2, MID)

    # conv3 (1x1x1) + per-voxel L2 norm over channels.
    h3 = jnp.dot(h2, w3_ref[...],
                 preferred_element_type=jnp.float32) + b3_ref[...]           # (N2, FEAT_DIM)
    nrm = jnp.sqrt(jnp.sum(h3 * h3, axis=1, keepdims=True)) + 1e-6
    feat = h3 / nrm
    feat_ref[0] = feat

    # LocNet: correlate the template against the scene feature windows.
    heat = jnp.zeros((1, NHEAT), jnp.float32)
    for t in range(N2):
        heat = heat + jnp.dot(feat[t:t + 1, :], sp_ref[0, t],
                              preferred_element_type=jnp.float32)
    m = jnp.max(heat, axis=1, keepdims=True)
    e = jnp.exp(5.0 * (heat - m))
    prob = e / jnp.sum(e, axis=1, keepdims=True)
    cexp_ref[0] = jnp.sum(co_ref[...] * prob, axis=1, keepdims=True)         # (3, 1)


# ----------------------------------------------------------------------------
# Pallas wrappers
# ----------------------------------------------------------------------------
def sce_conv1(a_t, w_m, b_col, tm=512):
    """a_t: (K, M) bf16 patches (transposed im2col), w_m: (Cout, K) bf16."""
    K, M = a_t.shape
    N = w_m.shape[0]
    assert M % tm == 0
    return pl.pallas_call(
        _sce_conv1_kernel,
        out_shape=jax.ShapeDtypeStruct((N, M), jnp.float32),
        grid=(M // tm,),
        in_specs=[
            pl.BlockSpec((N, K), lambda i: (0, 0)),
            pl.BlockSpec((N, 1), lambda i: (0, 0)),
            pl.BlockSpec((K, tm), lambda i: (0, i)),
        ],
        out_specs=pl.BlockSpec((N, tm), lambda i: (0, i)),
        compiler_params=pltpu.CompilerParams(dimension_semantics=("parallel",)),
    )(w_m, b_col, a_t)


def sce_conv23_norm(a_t, w2m, b2c, w3m, b3c, tm=128):
    """Fused conv2 + conv3 + L2-norm.  a_t: (K2, M) bf16, output (Cout, M)."""
    K, M = a_t.shape
    Nmid = w2m.shape[0]
    Nout = w3m.shape[0]
    assert M % tm == 0
    return pl.pallas_call(
        _sce_conv23_kernel,
        out_shape=jax.ShapeDtypeStruct((Nout, M), jnp.float32),
        grid=(M // tm,),
        in_specs=[
            pl.BlockSpec((Nmid, K), lambda i: (0, 0)),
            pl.BlockSpec((Nmid, 1), lambda i: (0, 0)),
            pl.BlockSpec((Nout, Nmid), lambda i: (0, 0)),
            pl.BlockSpec((Nout, 1), lambda i: (0, 0)),
            pl.BlockSpec((K, tm), lambda i: (0, i)),
        ],
        out_specs=pl.BlockSpec((Nout, tm), lambda i: (0, i)),
        compiler_params=pltpu.CompilerParams(dimension_semantics=("parallel",)),
    )(w2m, b2c, w3m, b3c, a_t)


def obj_step(a1, sp, w1m, b1r, w2t, b2r, w3m, b3r, s2, coords):
    """Fused object featnet + locnet soft-argmax.  Grid over batch (parallel)."""
    Bn = a1.shape[0]
    feat, cexp = pl.pallas_call(
        _obj_step_kernel,
        out_shape=(jax.ShapeDtypeStruct((Bn, N2, FEAT_DIM), jnp.float32),
                   jax.ShapeDtypeStruct((Bn, 3, 1), jnp.float32)),
        grid=(Bn,),
        in_specs=[
            pl.BlockSpec((1, N1, 4 * K3), lambda b: (b, 0, 0)),         # a1
            pl.BlockSpec((4 * K3, MID), lambda b: (0, 0)),              # w1
            pl.BlockSpec((1, MID), lambda b: (0, 0)),                   # b1
            pl.BlockSpec((K3 * N2, N1), lambda b: (0, 0)),              # S2
            pl.BlockSpec((K3, MID, MID), lambda b: (0, 0, 0)),          # w2 per-offset
            pl.BlockSpec((1, MID), lambda b: (0, 0)),                   # b2
            pl.BlockSpec((MID, FEAT_DIM), lambda b: (0, 0)),            # w3
            pl.BlockSpec((1, FEAT_DIM), lambda b: (0, 0)),              # b3
            pl.BlockSpec((1, N2, FEAT_DIM, NHEAT), lambda b: (b, 0, 0, 0)),  # scene patches
            pl.BlockSpec((3, NHEAT), lambda b: (0, 0)),                 # coords
        ],
        out_specs=(pl.BlockSpec((1, N2, FEAT_DIM), lambda b: (b, 0, 0)),
                   pl.BlockSpec((1, 3, 1), lambda b: (b, 0, 0))),
        compiler_params=pltpu.CompilerParams(dimension_semantics=("parallel",)),
    )(a1, w1m, b1r, s2, w2t, b2r, w3m, b3r, sp, coords)
    return feat, cexp


# ----------------------------------------------------------------------------
# im2col / patch prep (plain JAX; layouts chosen to avoid transpose churn)
# ----------------------------------------------------------------------------
def im2col_T_cn(x_cn, k, stride, pad):
    """x_cn: (C, N, D, H, W) -> transposed patches (C*k^3, N*Do*Ho*Wo).
    Row layout is channel-major then (dz,dy,dx), matching PyTorch weight
    flattening (Cout, Cin*k^3)."""
    C, N, D, H, W = x_cn.shape
    Do = (D + 2 * pad - k) // stride + 1
    Ho = (H + 2 * pad - k) // stride + 1
    Wo = (W + 2 * pad - k) // stride + 1
    xp = jnp.pad(x_cn, ((0, 0), (0, 0), (pad, pad), (pad, pad), (pad, pad)))
    cols = []
    for dz in range(k):
        for dy in range(k):
            for dx in range(k):
                cols.append(xp[:, :,
                               dz:dz + stride * Do:stride,
                               dy:dy + stride * Ho:stride,
                               dx:dx + stride * Wo:stride])
    pat = jnp.stack(cols, axis=1)                       # (C, k^3, N, Do, Ho, Wo)
    return pat.reshape(C * k ** 3, N * Do * Ho * Wo), (Do, Ho, Wo)


def obj_conv1_patches(x):
    """x: (B, 4, ZZ, ZY, ZX) -> conv1 patches (B, N1, 4*K3), spatial-major rows."""
    Bn, C = x.shape[0], x.shape[1]
    xp = jnp.pad(x, ((0, 0), (0, 0), (1, 1), (1, 1), (1, 1)))
    cols = []
    for dz in range(3):
        for dy in range(3):
            for dx in range(3):
                cols.append(xp[:, :,
                               dz:dz + 2 * OD1:2,
                               dy:dy + 2 * OD1:2,
                               dx:dx + 2 * OD1:2])
    pat = jnp.stack(cols, axis=2)                       # (B, C, 27, OD1,OD1,OD1)
    pat = pat.transpose(0, 3, 4, 5, 1, 2)               # (B, OD1,OD1,OD1, C, 27)
    return pat.reshape(Bn, N1, C * K3)


def scene_corr_patches(sce_feat):
    """sce_feat: (Bn, FEAT_DIM, SD2, SD2, SD2) -> (Bn, N2, FEAT_DIM, NHEAT):
    for each template offset (N2) the FEAT_DIM x NHEAT window values."""
    Bn = sce_feat.shape[0]
    cols = []
    for dz in range(OD2):
        for dy in range(OD2):
            for dx in range(OD2):
                cols.append(
                    sce_feat[:, :, dz:dz + PH, dy:dy + PH, dx:dx + PH]
                    .reshape(Bn, FEAT_DIM, NHEAT))
    return jnp.stack(cols, axis=1)


# ----------------------------------------------------------------------------
# Geometry glue (cam <-> mem coords, lrt handling, crop_zoom_from_mem)
# ----------------------------------------------------------------------------
def build_lrt(center_cam, obj_len):
    """center_cam: (B, 3) (x,y,z);  obj_len: (B, 3) -> lrt (B, 19)."""
    Bn = center_cam.shape[0]
    eye = jnp.broadcast_to(jnp.eye(4, dtype=jnp.float32), (Bn, 4, 4))
    rt = eye.at[:, 0, 3].set(center_cam[:, 0])
    rt = rt.at[:, 1, 3].set(center_cam[:, 1])
    rt = rt.at[:, 2, 3].set(center_cam[:, 2])
    return jnp.concatenate([obj_len, rt.reshape(Bn, 16)], axis=1)


def lrt_center(lrt):
    return jnp.stack([lrt[:, 6], lrt[:, 10], lrt[:, 14]], axis=1)  # (B,3) x,y,z


def trilinear_sample(vol, zc, yc, xc):
    """vol: (B, C, Z, Y, X); zc/yc/xc: (B, d, h, w) float mem coords."""
    _, _, Zd, Yd, Xd = vol.shape
    z0 = jnp.floor(zc)
    y0 = jnp.floor(yc)
    x0 = jnp.floor(xc)
    wz, wy, wx = zc - z0, yc - y0, xc - x0
    out = 0.0
    for dz in (0, 1):
        for dy in (0, 1):
            for dx in (0, 1):
                zi = z0 + dz
                yi = y0 + dy
                xi = x0 + dx
                valid = ((zi >= 0) & (zi < Zd) & (yi >= 0) & (yi < Yd)
                         & (xi >= 0) & (xi < Xd)).astype(jnp.float32)
                zic = jnp.clip(zi, 0, Zd - 1).astype(jnp.int32)
                yic = jnp.clip(yi, 0, Yd - 1).astype(jnp.int32)
                xic = jnp.clip(xi, 0, Xd - 1).astype(jnp.int32)
                w = ((wz if dz else 1.0 - wz) * (wy if dy else 1.0 - wy)
                     * (wx if dx else 1.0 - wx)) * valid
                vals = jax.vmap(lambda v, z, y, x: v[:, z, y, x])(vol, zic, yic, xic)
                out = out + w[:, None] * vals
    return out


def crop_zoom_from_mem(mem, lrt, zd, yd, xd):
    """utils_vox.crop_zoom_from_mem: trilinearly resample an axis-aligned box
    (center/extents from lrt) into a (zd, yd, xd) grid."""
    # TODO(synk): original supports rotated boxes via RT; here rotation=identity.
    l = lrt[:, :3]                               # (lx, ly, lz)
    t = lrt_center(lrt)                          # (tx, ty, tz)
    gz, gy, gx = jnp.meshgrid(jnp.arange(zd), jnp.arange(yd), jnp.arange(xd),
                              indexing="ij")
    fz = (gz.astype(jnp.float32) + 0.5) / zd - 0.5
    fy = (gy.astype(jnp.float32) + 0.5) / yd - 0.5
    fx = (gx.astype(jnp.float32) + 0.5) / xd - 0.5
    x_cam = t[:, 0, None, None, None] + fx[None] * l[:, 0, None, None, None]
    y_cam = t[:, 1, None, None, None] + fy[None] * l[:, 1, None, None, None]
    z_cam = t[:, 2, None, None, None] + fz[None] * l[:, 2, None, None, None]
    x_mem = (x_cam - XMIN) / VOX_X - 0.5
    y_mem = (y_cam - YMIN) / VOX_Y - 0.5
    z_mem = (z_cam - ZMIN) / VOX_Z - 0.5
    return trilinear_sample(mem, z_mem, y_mem, x_mem)


def lrt_from_soft_argmax(c, obj_len):
    """c: (B, 3) soft-argmax coords (pz, py, px) over the NHEAT grid -> lrt."""
    pz, py, px = c[:, 0], c[:, 1], c[:, 2]
    cz_f = pz + (OD2 - 1) / 2.0
    cy_f = py + (OD2 - 1) / 2.0
    cx_f = px + (OD2 - 1) / 2.0
    cz_m = DOWN * cz_f + (DOWN - 1) / 2.0
    cy_m = DOWN * cy_f + (DOWN - 1) / 2.0
    cx_m = DOWN * cx_f + (DOWN - 1) / 2.0
    x_cam = XMIN + (cx_m + 0.5) * VOX_X
    y_cam = YMIN + (cy_m + 0.5) * VOX_Y
    z_cam = ZMIN + (cz_m + 0.5) * VOX_Z
    center = jnp.stack([x_cam, y_cam, z_cam], axis=1)
    return build_lrt(center, obj_len)


def compute_feat_loss(obj_feat_sc, sce_feat, obj_lrt_e):
    """MSE between the object feature and the scene feature crop at the
    estimated location (plain JAX: ~128 floats, not worth a kernel launch)."""
    # TODO(synk): nearest-voxel crop; the original LocNet trilinearly resamples
    # the feature volume at obj_lrt_e.
    Bn = obj_feat_sc.shape[0]
    t = lrt_center(obj_lrt_e)
    x_m = (t[:, 0] - XMIN) / VOX_X - 0.5
    y_m = (t[:, 1] - YMIN) / VOX_Y - 0.5
    z_m = (t[:, 2] - ZMIN) / VOX_Z - 0.5
    x_f = (x_m - (DOWN - 1) / 2.0) / DOWN
    y_f = (y_m - (DOWN - 1) / 2.0) / DOWN
    z_f = (z_m - (DOWN - 1) / 2.0) / DOWN
    z0 = jnp.clip(jnp.round(z_f - (OD2 - 1) / 2.0), 0, SD2 - OD2).astype(jnp.int32)
    y0 = jnp.clip(jnp.round(y_f - (OD2 - 1) / 2.0), 0, SD2 - OD2).astype(jnp.int32)
    x0 = jnp.clip(jnp.round(x_f - (OD2 - 1) / 2.0), 0, SD2 - OD2).astype(jnp.int32)
    crop = jax.vmap(
        lambda sf, z, y, x: jax.lax.dynamic_slice(
            sf, (0, z, y, x), (FEAT_DIM, OD2, OD2, OD2))
    )(sce_feat, z0, y0, x0)
    obj = obj_feat_sc.transpose(0, 2, 1).reshape(Bn, FEAT_DIM, OD2, OD2, OD2)
    return jnp.mean((obj - crop) ** 2)


# ----------------------------------------------------------------------------
# CarlaTimeModel.run_train (forward) — cycle tracking loop
# ----------------------------------------------------------------------------
def run_train(occ_memX0s, unp_memX0s, box_traj_camR, params):
    # TODO(synk): prepare_common_tensors (voxelization, unprojection, camera
    # transforms, tensorboard summaries) is upstream preprocessing; inputs
    # here are already voxelized occ/unp grids in camX0 coordinates.
    input_memX0s = jnp.concatenate([occ_memX0s, occ_memX0s * unp_memX0s], axis=2)

    # -------- scene FeatNet3D: 2 fused, lane-dense pallas calls --------------
    sce_inputs_ = input_memX0s.reshape(B * S, 4, Z, Y, X)
    x_cn = jnp.transpose(sce_inputs_, (1, 0, 2, 3, 4))            # (4, B*S, Z,Y,X)

    w1s = params["w1"].reshape(MID, -1).astype(jnp.bfloat16)      # (16, 108)
    w2s = params["w2"].reshape(MID, -1).astype(jnp.bfloat16)      # (16, 432)
    w3s = params["w3"].reshape(FEAT_DIM, MID)                     # (8, 16)
    b1c = params["b1"].reshape(MID, 1)
    b2c = params["b2"].reshape(MID, 1)
    b3c = params["b3"].reshape(FEAT_DIM, 1)

    a1t, (d1, h1d, w1d) = im2col_T_cn(x_cn, 3, 2, 1)              # (108, 3072)
    f1t = sce_conv1(a1t.astype(jnp.bfloat16), w1s, b1c, tm=512)   # (16, 3072)
    h1c = f1t.reshape(MID, B * S, d1, h1d, w1d)
    a2t, (d2, h2d, w2d) = im2col_T_cn(h1c, 3, 2, 1)               # (432, 384)
    sce_t = sce_conv23_norm(a2t.astype(jnp.bfloat16), w2s, b2c, w3s, b3c, tm=128)
    sce_feats = sce_t.reshape(FEAT_DIM, B, S, d2, h2d, w2d).transpose(
        1, 2, 0, 3, 4, 5)                                         # (B, S, 8, 4,4,4)

    # correlation windows of every scene feature (built once, reused per step)
    corr_pat = scene_corr_patches(
        sce_feats.reshape(B * S, FEAT_DIM, d2, h2d, w2d)
    ).reshape(B, S, N2, FEAT_DIM, NHEAT)

    # -------- object-path weights / constants --------------------------------
    w1o = params["w1"].reshape(MID, -1).T                         # (108, 16)
    w2o = jnp.transpose(params["w2"].reshape(MID, MID, K3), (2, 1, 0))  # (27,16,16)
    w3o = params["w3"].reshape(FEAT_DIM, MID).T                   # (16, 8)
    b1r = params["b1"].reshape(1, MID)
    b2r = params["b2"].reshape(1, MID)
    b3r = params["b3"].reshape(1, FEAT_DIM)
    s2 = jnp.asarray(_S2_NP)
    coords = jnp.asarray(_COORDS_NP)

    obj_len = jnp.broadcast_to(
        jnp.array([OBJ_LX, OBJ_LY, OBJ_LZ], jnp.float32), (B, 3))
    starting_obj_lrt = build_lrt(box_traj_camR[:, 0, :3], obj_len)

    cycle_seq = list(range(0, S)) + list(range(S - 2, -1, -1))
    obj_input = crop_zoom_from_mem(input_memX0s[:, 0], starting_obj_lrt,
                                   ZZ, ZY, ZX)

    feat_losses = []
    obj_lrt_e = starting_obj_lrt
    for s in cycle_seq:
        a1 = obj_conv1_patches(obj_input)                         # (B, 64, 108)
        obj_feat, cexp = obj_step(a1, corr_pat[:, s],
                                  w1o, b1r, w2o, b2r, w3o, b3r, s2, coords)
        obj_lrt_e = lrt_from_soft_argmax(cexp[:, :, 0], obj_len)
        feat_losses.append(compute_feat_loss(obj_feat, sce_feats[:, s], obj_lrt_e))
        obj_input = crop_zoom_from_mem(input_memX0s[:, s], obj_lrt_e, ZZ, ZY, ZX)

    loc_feat_loss = jnp.mean(jnp.stack(feat_losses))
    samp_loss = jnp.mean(
        (lrt_center(obj_lrt_e) - lrt_center(starting_obj_lrt)) ** 2)
    total_loss = loc_feat_loss + samp_loss
    return total_loss, obj_lrt_e


# ----------------------------------------------------------------------------
# Deterministic parameter init (FeatNet3D, in_dim=4)
# ----------------------------------------------------------------------------
def init_params(key):
    ks = jax.random.split(key, 3)
    return {
        "w1": 0.1 * jax.random.normal(ks[0], (MID, 4, 3, 3, 3), jnp.float32),
        "b1": jnp.zeros((MID,), jnp.float32),
        "w2": 0.1 * jax.random.normal(ks[1], (MID, MID, 3, 3, 3), jnp.float32),
        "b2": jnp.zeros((MID,), jnp.float32),
        "w3": 0.1 * jax.random.normal(ks[2], (FEAT_DIM, MID, 1, 1, 1), jnp.float32),
        "b3": jnp.zeros((FEAT_DIM,), jnp.float32),
    }


if __name__ == "__main__":
    key = jax.random.PRNGKey(0)
    k_occ, k_unp, k_box, k_par = jax.random.split(key, 4)

    occ = (jax.random.uniform(k_occ, (B, S, 1, Z, Y, X)) < 0.2).astype(jnp.float32)
    unp = jax.random.uniform(k_unp, (B, S, 3, Z, Y, X), dtype=jnp.float32)
    # box trajectory (cx, cy, cz, lx, ly, lz, rx, ry, rz); only centers used,
    # lengths overwritten with (OBJ_LX, OBJ_LY, OBJ_LZ) as in the module.
    centers = jax.random.uniform(k_box, (B, S, 3), minval=-2.0, maxval=2.0)
    box_traj = jnp.concatenate(
        [centers, jnp.zeros((B, S, 6), jnp.float32)], axis=2)

    params = init_params(k_par)

    fwd = jax.jit(run_train)
    total_loss, final_lrt = fwd(occ, unp, box_traj, params)
    jax.block_until_ready((total_loss, final_lrt))
    print("KERNEL_OK")
</pallas_src>

<mosaic_0001>
module attributes {stable_mosaic.version = 11 : i64} {
  func.func @_sce_conv1_kernel(%arg0: i32, %arg1: memref<16x108xbf16, #tpu.memory_space<vmem>>, %arg2: memref<16x1xf32, #tpu.memory_space<vmem>>, %arg3: memref<108x512xbf16, #tpu.memory_space<vmem>>, %arg4: memref<16x512xf32, #tpu.memory_space<vmem>>) attributes {dimension_semantics = [#tpu.dimension_semantics<parallel>], iteration_bounds = array<i64: 6>, scalar_prefetch = 0 : i64, scratch_operands = 0 : i64, tpu.core_type = #tpu.core_type<tc>, window_params = [{pipeline_mode = #tpu.pipeline_mode<synchronous>, transform_indices = @transform_0, window_bounds = array<i64: 16, 108>}, {pipeline_mode = #tpu.pipeline_mode<synchronous>, transform_indices = @transform_1, window_bounds = array<i64: 16, 1>}, {transform_indices = @transform_2, window_bounds = array<i64: 108, 512>}, {transform_indices = @transform_3, window_bounds = array<i64: 16, 512>}]} {
    %c0 = arith.constant 0 : index
    %c0_0 = arith.constant 0 : index
    %0 = vector.load %arg1[%c0, %c0_0] : memref<16x108xbf16, #tpu.memory_space<vmem>>, vector<16x108xbf16>
    %c0_1 = arith.constant 0 : index
    %c0_2 = arith.constant 0 : index
    %1 = vector.load %arg3[%c0_1, %c0_2] : memref<108x512xbf16, #tpu.memory_space<vmem>>, vector<108x512xbf16>
    %cst = arith.constant dense<0.000000e+00> : vector<16x512xf32>
    %2 = tpu.matmul %0, %1, %cst {dimension_numbers = #tpu.dot_dimension_numbers<[1], [0], [0], [1], [0, 0, 1, 1], [], []>} : vector<16x108xbf16>, vector<108x512xbf16>, vector<16x512xf32> -> vector<16x512xf32>
    %c0_3 = arith.constant 0 : index
    %c0_4 = arith.constant 0 : index
    %3 = vector.load %arg2[%c0_3, %c0_4] : memref<16x1xf32, #tpu.memory_space<vmem>>, vector<16x1xf32>
    %4 = vector.broadcast %3 : vector<16x1xf32> to vector<16x512xf32>
    %5 = arith.addf %2, %4 : vector<16x512xf32>
    %cst_5 = arith.constant 0.000000e+00 : f32
    %6 = vector.broadcast %cst_5 : f32 to vector<16x512xf32>
    %7 = arith.cmpf ogt, %5, %6 : vector<16x512xf32>
    %cst_6 = arith.constant 0.00999999977 : f32
    %8 = vector.broadcast %cst_6 : f32 to vector<16x512xf32>
    %9 = arith.mulf %8, %5 : vector<16x512xf32>
    %10 = arith.select %7, %5, %9 : vector<16x512xi1>, vector<16x512xf32>
    %c0_7 = arith.constant 0 : index
    %c0_8 = arith.constant 0 : index
    %11 = vector.load %arg4[%c0_7, %c0_8] : memref<16x512xf32, #tpu.memory_space<vmem>>, vector<16x512xf32>
    tpu.vector_store %arg4[%c0_7, %c0_8], %10 {strides = array<i32>} : memref<16x512xf32, #tpu.memory_space<vmem>>, vector<16x512xf32>,
    return
  }
  func.func @transform_0(%arg0: i32) -> (i32, i32) {
    %c0_i32 = arith.constant 0 : i32
    %c0_i32_0 = arith.constant 0 : i32
    %c0_i32_1 = arith.constant 0 : i32
    return %c0_i32, %c0_i32_0 : i32, i32
  }
  func.func @transform_1(%arg0: i32) -> (i32, i32) {
    %c0_i32 = arith.constant 0 : i32
    %c0_i32_0 = arith.constant 0 : i32
    %c0_i32_1 = arith.constant 0 : i32
    return %c0_i32, %c0_i32_0 : i32, i32
  }
  func.func @transform_2(%arg0: i32) -> (i32, i32) {
    %c0_i32 = arith.constant 0 : i32
    %c0_i32_0 = arith.constant 0 : i32
    return %c0_i32, %arg0 : i32, i32
  }
  func.func @transform_3(%arg0: i32) -> (i32, i32) {
    %c0_i32 = arith.constant 0 : i32
    %c0_i32_0 = arith.constant 0 : i32
    return %c0_i32, %arg0 : i32, i32
  }
}

module attributes {stable_mosaic.version = 11 : i64} {
  func.func @_sce_conv23_kernel(%arg0: i32, %arg1: memref<16x432xbf16, #tpu.memory_space<vmem>>, %arg2: memref<16x1xf32, #tpu.memory_space<vmem>>, %arg3: memref<8x16xf32, #tpu.memory_space<vmem>>, %arg4: memref<8x1xf32, #tpu.memory_space<vmem>>, %arg5: memref<432x128xbf16, #tpu.memory_space<vmem>>, %arg6: memref<8x128xf32, #tpu.memory_space<vmem>>) attributes {dimension_semantics = [#tpu.dimension_semantics<parallel>], iteration_bounds = array<i64: 3>, scalar_prefetch = 0 : i64, scratch_operands = 0 : i64, tpu.core_type = #tpu.core_type<tc>, window_params = [{pipeline_mode = #tpu.pipeline_mode<synchronous>, transform_indices = @transform_0, window_bounds = array<i64: 16, 432>}, {pipeline_mode = #tpu.pipeline_mode<synchronous>, transform_indices = @transform_1, window_bounds = array<i64: 16, 1>}, {pipeline_mode = #tpu.pipeline_mode<synchronous>, transform_indices = @transform_2, window_bounds = array<i64: 8, 16>}, {pipeline_mode = #tpu.pipeline_mode<synchronous>, transform_indices = @transform_3, window_bounds = array<i64: 8, 1>}, {transform_indices = @transform_4, window_bounds = array<i64: 432, 128>}, {transform_indices = @transform_5, window_bounds = array<i64: 8, 128>}]} {
    %c0 = arith.constant 0 : index
    %c0_0 = arith.constant 0 : index
    %0 = vector.load %arg1[%c0, %c0_0] : memref<16x432xbf16, #tpu.memory_space<vmem>>, vector<16x432xbf16>
    %c0_1 = arith.constant 0 : index
    %c0_2 = arith.constant 0 : index
    %1 = vector.load %arg5[%c0_1, %c0_2] : memref<432x128xbf16, #tpu.memory_space<vmem>>, vector<432x128xbf16>
    %cst = arith.constant dense<0.000000e+00> : vector<16x128xf32>
    %2 = tpu.matmul %0, %1, %cst {dimension_numbers = #tpu.dot_dimension_numbers<[1], [0], [0], [1], [0, 0, 1, 1], [], []>} : vector<16x432xbf16>, vector<432x128xbf16>, vector<16x128xf32> -> vector<16x128xf32>
    %c0_3 = arith.constant 0 : index
    %c0_4 = arith.constant 0 : index
    %3 = vector.load %arg2[%c0_3, %c0_4] : memref<16x1xf32, #tpu.memory_space<vmem>>, vector<16x1xf32>
    %4 = vector.broadcast %3 : vector<16x1xf32> to vector<16x128xf32>
    %5 = arith.addf %2, %4 : vector<16x128xf32>
    %cst_5 = arith.constant 0.000000e+00 : f32
    %6 = vector.broadcast %cst_5 : f32 to vector<16x128xf32>
    %7 = arith.cmpf ogt, %5, %6 : vector<16x128xf32>
    %cst_6 = arith.constant 0.00999999977 : f32
    %8 = vector.broadcast %cst_6 : f32 to vector<16x128xf32>
    %9 = arith.mulf %8, %5 : vector<16x128xf32>
    %10 = arith.select %7, %5, %9 : vector<16x128xi1>, vector<16x128xf32>
    %c0_7 = arith.constant 0 : index
    %c0_8 = arith.constant 0 : index
    %11 = vector.load %arg3[%c0_7, %c0_8] : memref<8x16xf32, #tpu.memory_space<vmem>>, vector<8x16xf32>
    %cst_9 = arith.constant dense<0.000000e+00> : vector<8x128xf32>
    %12 = tpu.matmul %11, %10, %cst_9 {dimension_numbers = #tpu.dot_dimension_numbers<[1], [0], [0], [1], [0, 0, 1, 1], [], []>} : vector<8x16xf32>, vector<16x128xf32>, vector<8x128xf32> -> vector<8x128xf32>
    %c0_10 = arith.constant 0 : index
    %c0_11 = arith.constant 0 : index
    %13 = vector.load %arg4[%c0_10, %c0_11] : memref<8x1xf32, #tpu.memory_space<vmem>>, vector<8x1xf32>
    %14 = vector.broadcast %13 : vector<8x1xf32> to vector<8x128xf32>
    %15 = arith.addf %12, %14 : vector<8x128xf32>
    %16 = arith.mulf %15, %15 : vector<8x128xf32>
    %cst_12 = arith.constant dense<0.000000e+00> : vector<128xf32>
    %17 = vector.multi_reduction <add>, %16, %cst_12 [0] : vector<8x128xf32> to vector<128xf32>
    %18 = vector.shape_cast %17 : vector<128xf32> to vector<1x128xf32>
    %19 = math.sqrt %18 : vector<1x128xf32>
    %cst_13 = arith.constant 9.99999997E-7 : f32
    %20 = vector.broadcast %cst_13 : f32 to vector<1x128xf32>
    %21 = arith.addf %19, %20 : vector<1x128xf32>
    %22 = vector.broadcast %21 : vector<1x128xf32> to vector<8x128xf32>
    %23 = arith.divf %15, %22 : vector<8x128xf32>
    %c0_14 = arith.constant 0 : index
    %c0_15 = arith.constant 0 : index
    %24 = vector.load %arg6[%c0_14, %c0_15] : memref<8x128xf32, #tpu.memory_space<vmem>>, vector<8x128xf32>
    tpu.vector_store %arg6[%c0_14, %c0_15], %23 {strides = array<i32>} : memref<8x128xf32, #tpu.memory_space<vmem>>, vector<8x128xf32>,
    return
  }
  func.func @transform_0(%arg0: i32) -> (i32, i32) {
    %c0_i32 = arith.constant 0 : i32
    %c0_i32_0 = arith.constant 0 : i32
    %c0_i32_1 = arith.constant 0 : i32
    return %c0_i32, %c0_i32_0 : i32, i32
  }
  func.func @transform_1(%arg0: i32) -> (i32, i32) {
    %c0_i32 = arith.constant 0 : i32
    %c0_i32_0 = arith.constant 0 : i32
    %c0_i32_1 = arith.constant 0 : i32
    return %c0_i32, %c0_i32_0 : i32, i32
  }
  func.func @transform_2(%arg0: i32) -> (i32, i32) {
    %c0_i32 = arith.constant 0 : i32
    %c0_i32_0 = arith.constant 0 : i32
    %c0_i32_1 = arith.constant 0 : i32
    return %c0_i32, %c0_i32_0 : i32, i32
  }
  func.func @transform_3(%arg0: i32) -> (i32, i32) {
    %c0_i32 = arith.constant 0 : i32
    %c0_i32_0 = arith.constant 0 : i32
    %c0_i32_1 = arith.constant 0 : i32
    return %c0_i32, %c0_i32_0 : i32, i32
  }
  func.func @transform_4(%arg0: i32) -> (i32, i32) {
    %c0_i32 = arith.constant 0 : i32
    %c0_i32_0 = arith.constant 0 : i32
    return %c0_i32, %arg0 : i32, i32
  }
  func.func @transform_5(%arg0: i32) -> (i32, i32) {
    %c0_i32 = arith.constant 0 : i32
    %c0_i32_0 = arith.constant 0 : i32
    return %c0_i32, %arg0 : i32, i32
  }
}

module attributes {stable_mosaic.version = 11 : i64} {
  func.func @_obj_step_kernel(%arg0: i32, %arg1: memref<1x64x108xf32, #tpu.memory_space<vmem>>, %arg2: memref<108x16xf32, #tpu.memory_space<vmem>>, %arg3: memref<1x16xf32, #tpu.memory_space<vmem>>, %arg4: memref<216x64xf32, #tpu.memory_space<vmem>>, %arg5: memref<27x16x16xf32, #tpu.memory_space<vmem>>, %arg6: memref<1x16xf32, #tpu.memory_space<vmem>>, %arg7: memref<16x8xf32, #tpu.memory_space<vmem>>, %arg8: memref<1x8xf32, #tpu.memory_space<vmem>>, %arg9: memref<1x8x8x27xf32, #tpu.memory_space<vmem>>, %arg10: memref<3x27xf32, #tpu.memory_space<vmem>>, %arg11: memref<1x8x8xf32, #tpu.memory_space<vmem>>, %arg12: memref<1x3x1xf32, #tpu.memory_space<vmem>>) attributes {dimension_semantics = [#tpu.dimension_semantics<parallel>], iteration_bounds = array<i64: 2>, scalar_prefetch = 0 : i64, scratch_operands = 0 : i64, tpu.core_type = #tpu.core_type<tc>, window_params = [{transform_indices = @transform_0, window_bounds = array<i64: 1, 64, 108>}, {pipeline_mode = #tpu.pipeline_mode<synchronous>, transform_indices = @transform_1, window_bounds = array<i64: 108, 16>}, {pipeline_mode = #tpu.pipeline_mode<synchronous>, transform_indices = @transform_2, window_bounds = array<i64: 1, 16>}, {pipeline_mode = #tpu.pipeline_mode<synchronous>, transform_indices = @transform_3, window_bounds = array<i64: 216, 64>}, {pipeline_mode = #tpu.pipeline_mode<synchronous>, transform_indices = @transform_4, window_bounds = array<i64: 27, 16, 16>}, {pipeline_mode = #tpu.pipeline_mode<synchronous>, transform_indices = @transform_5, window_bounds = array<i64: 1, 16>}, {pipeline_mode = #tpu.pipeline_mode<synchronous>, transform_indices = @transform_6, window_bounds = array<i64: 16, 8>}, {pipeline_mode = #tpu.pipeline_mode<synchronous>, transform_indices = @transform_7, window_bounds = array<i64: 1, 8>}, {transform_indices = @transform_8, window_bounds = array<i64: 1, 8, 8, 27>}, {pipeline_mode = #tpu.pipeline_mode<synchronous>, transform_indices = @transform_9, window_bounds = array<i64: 3, 27>}, {transform_indices = @transform_10, window_bounds = array<i64: 1, 8, 8>}, {transform_indices = @transform_11, window_bounds = array<i64: 1, 3, 1>}]} {
    %c0 = arith.constant 0 : index
    %c0_0 = arith.constant 0 : index
    %c0_1 = arith.constant 0 : index
    %0 = vector.load %arg1[%c0, %c0_0, %c0_1] : memref<1x64x108xf32, #tpu.memory_space<vmem>>, vector<1x64x108xf32>
    %1 = vector.shape_cast %0 : vector<1x64x108xf32> to vector<64x108xf32>
    %c0_2 = arith.constant 0 : index
    %c0_3 = arith.constant 0 : index
    %2 = vector.load %arg2[%c0_2, %c0_3] : memref<108x16xf32, #tpu.memory_space<vmem>>, vector<108x16xf32>
    %cst = arith.constant dense<0.000000e+00> : vector<64x16xf32>
    %3 = tpu.matmul %1, %2, %cst {dimension_numbers = #tpu.dot_dimension_numbers<[1], [0], [0], [1], [0, 0, 1, 1], [], []>} : vector<64x108xf32>, vector<108x16xf32>, vector<64x16xf32> -> vector<64x16xf32>
    %c0_4 = arith.constant 0 : index
    %c0_5 = arith.constant 0 : index
    %4 = vector.load %arg3[%c0_4, %c0_5] : memref<1x16xf32, #tpu.memory_space<vmem>>, vector<1x16xf32>
    %5 = vector.broadcast %4 : vector<1x16xf32> to vector<64x16xf32>
    %6 = arith.addf %3, %5 : vector<64x16xf32>
    %cst_6 = arith.constant 0.000000e+00 : f32
    %7 = vector.broadcast %cst_6 : f32 to vector<64x16xf32>
    %8 = arith.cmpf ogt, %6, %7 : vector<64x16xf32>
    %cst_7 = arith.constant 0.00999999977 : f32
    %9 = vector.broadcast %cst_7 : f32 to vector<64x16xf32>
    %10 = arith.mulf %9, %6 : vector<64x16xf32>
    %11 = arith.select %8, %6, %10 : vector<64x16xi1>, vector<64x16xf32>
    %c0_8 = arith.constant 0 : index
    %c0_9 = arith.constant 0 : index
    %12 = vector.load %arg4[%c0_8, %c0_9] : memref<216x64xf32, #tpu.memory_space<vmem>>, vector<216x64xf32>
    %cst_10 = arith.constant dense<0.000000e+00> : vector<216x16xf32>
    %13 = tpu.matmul %12, %11, %cst_10 {dimension_numbers = #tpu.dot_dimension_numbers<[1], [0], [0], [1], [0, 0, 1, 1], [], []>} : vector<216x64xf32>, vector<64x16xf32>, vector<216x16xf32> -> vector<216x16xf32>
    %cst_11 = arith.constant 0.000000e+00 : f32
    %14 = vector.broadcast %cst_11 : f32 to vector<8x16xf32>
    %15 = vector.extract_strided_slice %13 {offsets = [0, 0], sizes = [8, 16], strides = [1, 1]} : vector<216x16xf32> to vector<8x16xf32>
    %c0_12 = arith.constant 0 : index
    %c0_13 = arith.constant 0 : index
    %c0_14 = arith.constant 0 : index
    %16 = vector.load %arg5[%c0_12, %c0_13, %c0_14] : memref<27x16x16xf32, #tpu.memory_space<vmem>>, vector<1x16x16xf32>
    %17 = vector.shape_cast %16 : vector<1x16x16xf32> to vector<16x16xf32>
    %cst_15 = arith.constant dense<0.000000e+00> : vector<8x16xf32>
    %18 = tpu.matmul %15, %17, %cst_15 {dimension_numbers = #tpu.dot_dimension_numbers<[1], [0], [0], [1], [0, 0, 1, 1], [], []>} : vector<8x16xf32>, vector<16x16xf32>, vector<8x16xf32> -> vector<8x16xf32>
    %19 = arith.addf %14, %18 : vector<8x16xf32>
    %20 = vector.extract_strided_slice %13 {offsets = [8, 0], sizes = [8, 16], strides = [1, 1]} : vector<216x16xf32> to vector<8x16xf32>
    %c1 = arith.constant 1 : index
    %c0_16 = arith.constant 0 : index
    %c0_17 = arith.constant 0 : index
    %21 = vector.load %arg5[%c1, %c0_16, %c0_17] : memref<27x16x16xf32, #tpu.memory_space<vmem>>, vector<1x16x16xf32>
    %22 = vector.shape_cast %21 : vector<1x16x16xf32> to vector<16x16xf32>
    %cst_18 = arith.constant dense<0.000000e+00> : vector<8x16xf32>
    %23 = tpu.matmul %20, %22, %cst_18 {dimension_numbers = #tpu.dot_dimension_numbers<[1], [0], [0], [1], [0, 0, 1, 1], [], []>} : vector<8x16xf32>, vector<16x16xf32>, vector<8x16xf32> -> vector<8x16xf32>
    %24 = arith.addf %19, %23 : vector<8x16xf32>
    %25 = vector.extract_strided_slice %13 {offsets = [16, 0], sizes = [8, 16], strides = [1, 1]} : vector<216x16xf32> to vector<8x16xf32>
    %c2 = arith.constant 2 : index
    %c0_19 = arith.constant 0 : index
    %c0_20 = arith.constant 0 : index
    %26 = vector.load %arg5[%c2, %c0_19, %c0_20] : memref<27x16x16xf32, #tpu.memory_space<vmem>>, vector<1x16x16xf32>
    %27 = vector.shape_cast %26 : vector<1x16x16xf32> to vector<16x16xf32>
    %cst_21 = arith.constant dense<0.000000e+00> : vector<8x16xf32>
    %28 = tpu.matmul %25, %27, %cst_21 {dimension_numbers = #tpu.dot_dimension_numbers<[1], [0], [0], [1], [0, 0, 1, 1], [], []>} : vector<8x16xf32>, vector<16x16xf32>, vector<8x16xf32> -> vector<8x16xf32>
    %29 = arith.addf %24, %28 : vector<8x16xf32>
    %30 = vector.extract_strided_slice %13 {offsets = [24, 0], sizes = [8, 16], strides = [1, 1]} : vector<216x16xf32> to vector<8x16xf32>
    %c3 = arith.constant 3 : index
    %c0_22 = arith.constant 0 : index
    %c0_23 = arith.constant 0 : index
    %31 = vector.load %arg5[%c3, %c0_22, %c0_23] : memref<27x16x16xf32, #tpu.memory_space<vmem>>, vector<1x16x16xf32>
    %32 = vector.shape_cast %31 : vector<1x16x16xf32> to vector<16x16xf32>
    %cst_24 = arith.constant dense<0.000000e+00> : vector<8x16xf32>
    %33 = tpu.matmul %30, %32, %cst_24 {dimension_numbers = #tpu.dot_dimension_numbers<[1], [0], [0], [1], [0, 0, 1, 1], [], []>} : vector<8x16xf32>, vector<16x16xf32>, vector<8x16xf32> -> vector<8x16xf32>
    %34 = arith.addf %29, %33 : vector<8x16xf32>
    %35 = vector.extract_strided_slice %13 {offsets = [32, 0], sizes = [8, 16], strides = [1, 1]} : vector<216x16xf32> to vector<8x16xf32>
    %c4 = arith.constant 4 : index
    %c0_25 = arith.constant 0 : index
    %c0_26 = arith.constant 0 : index
    %36 = vector.load %arg5[%c4, %c0_25, %c0_26] : memref<27x16x16xf32, #tpu.memory_space<vmem>>, vector<1x16x16xf32>
    %37 = vector.shape_cast %36 : vector<1x16x16xf32> to vector<16x16xf32>
    %cst_27 = arith.constant dense<0.000000e+00> : vector<8x16xf32>
    %38 = tpu.matmul %35, %37, %cst_27 {dimension_numbers = #tpu.dot_dimension_numbers<[1], [0], [0], [1], [0, 0, 1, 1], [], []>} : vector<8x16xf32>, vector<16x16xf32>, vector<8x16xf32> -> vector<8x16xf32>
    %39 = arith.addf %34, %38 : vector<8x16xf32>
    %40 = vector.extract_strided_slice %13 {offsets = [40, 0], sizes = [8, 16], strides = [1, 1]} : vector<216x16xf32> to vector<8x16xf32>
    %c5 = arith.constant 5 : index
    %c0_28 = arith.constant 0 : index
    %c0_29 = arith.constant 0 : index
    %41 = vector.load %arg5[%c5, %c0_28, %c0_29] : memref<27x16x16xf32, #tpu.memory_space<vmem>>, vector<1x16x16xf32>
    %42 = vector.shape_cast %41 : vector<1x16x16xf32> to vector<16x16xf32>
    %cst_30 = arith.constant dense<0.000000e+00> : vector<8x16xf32>
    %43 = tpu.matmul %40, %42, %cst_30 {dimension_numbers = #tpu.dot_dimension_numbers<[1], [0], [0], [1], [0, 0, 1, 1], [], []>} : vector<8x16xf32>, vector<16x16xf32>, vector<8x16xf32> -> vector<8x16xf32>
    %44 = arith.addf %39, %43 : vector<8x16xf32>
    %45 = vector.extract_strided_slice %13 {offsets = [48, 0], sizes = [8, 16], strides = [1, 1]} : vector<216x16xf32> to vector<8x16xf32>
    %c6 = arith.constant 6 : index
    %c0_31 = arith.constant 0 : index
    %c0_32 = arith.constant 0 : index
    %46 = vector.load %arg5[%c6, %c0_31, %c0_32] : memref<27x16x16xf32, #tpu.memory_space<vmem>>, vector<1x16x16xf32>
    %47 = vector.shape_cast %46 : vector<1x16x16xf32> to vector<16x16xf32>
    %cst_33 = arith.constant dense<0.000000e+00> : vector<8x16xf32>
    %48 = tpu.matmul %45, %47, %cst_33 {dimension_numbers = #tpu.dot_dimension_numbers<[1], [0], [0], [1], [0, 0, 1, 1], [], []>} : vector<8x16xf32>, vector<16x16xf32>, vector<8x16xf32> -> vector<8x16xf32>
    %49 = arith.addf %44, %48 : vector<8x16xf32>
    %50 = vector.extract_strided_slice %13 {offsets = [56, 0], sizes = [8, 16], strides = [1, 1]} : vector<216x16xf32> to vector<8x16xf32>
    %c7 = arith.constant 7 : index
    %c0_34 = arith.constant 0 : index
    %c0_35 = arith.constant 0 : index
    %51 = vector.load %arg5[%c7, %c0_34, %c0_35] : memref<27x16x16xf32, #tpu.memory_space<vmem>>, vector<1x16x16xf32>
    %52 = vector.shape_cast %51 : vector<1x16x16xf32> to vector<16x16xf32>
    %cst_36 = arith.constant dense<0.000000e+00> : vector<8x16xf32>
    %53 = tpu.matmul %50, %52, %cst_36 {dimension_numbers = #tpu.dot_dimension_numbers<[1], [0], [0], [1], [0, 0, 1, 1], [], []>} : vector<8x16xf32>, vector<16x16xf32>, vector<8x16xf32> -> vector<8x16xf32>
    %54 = arith.addf %49, %53 : vector<8x16xf32>
    %55 = vector.extract_strided_slice %13 {offsets = [64, 0], sizes = [8, 16], strides = [1, 1]} : vector<216x16xf32> to vector<8x16xf32>
    %c8 = arith.constant 8 : index
    %c0_37 = arith.constant 0 : index
    %c0_38 = arith.constant 0 : index
    %56 = vector.load %arg5[%c8, %c0_37, %c0_38] : memref<27x16x16xf32, #tpu.memory_space<vmem>>, vector<1x16x16xf32>
    %57 = vector.shape_cast %56 : vector<1x16x16xf32> to vector<16x16xf32>
    %cst_39 = arith.constant dense<0.000000e+00> : vector<8x16xf32>
    %58 = tpu.matmul %55, %57, %cst_39 {dimension_numbers = #tpu.dot_dimension_numbers<[1], [0], [0], [1], [0, 0, 1, 1], [], []>} : vector<8x16xf32>, vector<16x16xf32>, vector<8x16xf32> -> vector<8x16xf32>
    %59 = arith.addf %54, %58 : vector<8x16xf32>
    %60 = vector.extract_strided_slice %13 {offsets = [72, 0], sizes = [8, 16], strides = [1, 1]} : vector<216x16xf32> to vector<8x16xf32>
    %c9 = arith.constant 9 : index
    %c0_40 = arith.constant 0 : index
    %c0_41 = arith.constant 0 : index
    %61 = vector.load %arg5[%c9, %c0_40, %c0_41] : memref<27x16x16xf32, #tpu.memory_space<vmem>>, vector<1x16x16xf32>
    %62 = vector.shape_cast %61 : vector<1x16x16xf32> to vector<16x16xf32>
    %cst_42 = arith.constant dense<0.000000e+00> : vector<8x16xf32>
    %63 = tpu.matmul %60, %62, %cst_42 {dimension_numbers = #tpu.dot_dimension_numbers<[1], [0], [0], [1], [0, 0, 1, 1], [], []>} : vector<8x16xf32>, vector<16x16xf32>, vector<8x16xf32> -> vector<8x16xf32>
    %64 = arith.addf %59, %63 : vector<8x16xf32>
    %65 = vector.extract_strided_slice %13 {offsets = [80, 0], sizes = [8, 16], strides = [1, 1]} : vector<216x16xf32> to vector<8x16xf32>
    %c10 = arith.constant 10 : index
    %c0_43 = arith.constant 0 : index
    %c0_44 = arith.constant 0 : index
    %66 = vector.load %arg5[%c10, %c0_43, %c0_44] : memref<27x16x16xf32, #tpu.memory_space<vmem>>, vector<1x16x16xf32>
    %67 = vector.shape_cast %66 : vector<1x16x16xf32> to vector<16x16xf32>
    %cst_45 = arith.constant dense<0.000000e+00> : vector<8x16xf32>
    %68 = tpu.matmul %65, %67, %cst_45 {dimension_numbers = #tpu.dot_dimension_numbers<[1], [0], [0], [1], [0, 0, 1, 1], [], []>} : vector<8x16xf32>, vector<16x16xf32>, vector<8x16xf32> -> vector<8x16xf32>
    %69 = arith.addf %64, %68 : vector<8x16xf32>
    %70 = vector.extract_strided_slice %13 {offsets = [88, 0], sizes = [8, 16], strides = [1, 1]} : vector<216x16xf32> to vector<8x16xf32>
    %c11 = arith.constant 11 : index
    %c0_46 = arith.constant 0 : index
    %c0_47 = arith.constant 0 : index
    %71 = vector.load %arg5[%c11, %c0_46, %c0_47] : memref<27x16x16xf32, #tpu.memory_space<vmem>>, vector<1x16x16xf32>
    %72 = vector.shape_cast %71 : vector<1x16x16xf32> to vector<16x16xf32>
    %cst_48 = arith.constant dense<0.000000e+00> : vector<8x16xf32>
    %73 = tpu.matmul %70, %72, %cst_48 {dimension_numbers = #tpu.dot_dimension_numbers<[1], [0], [0], [1], [0, 0, 1, 1], [], []>} : vector<8x16xf32>, vector<16x16xf32>, vector<8x16xf32> -> vector<8x16xf32>
    %74 = arith.addf %69, %73 : vector<8x16xf32>
    %75 = vector.extract_strided_slice %13 {offsets = [96, 0], sizes = [8, 16], strides = [1, 1]} : vector<216x16xf32> to vector<8x16xf32>
    %c12 = arith.constant 12 : index
    %c0_49 = arith.constant 0 : index
    %c0_50 = arith.constant 0 : index
    %76 = vector.load %arg5[%c12, %c0_49, %c0_50] : memref<27x16x16xf32, #tpu.memory_space<vmem>>, vector<1x16x16xf32>
    %77 = vector.shape_cast %76 : vector<1x16x16xf32> to vector<16x16xf32>
    %cst_51 = arith.constant dense<0.000000e+00> : vector<8x16xf32>
    %78 = tpu.matmul %75, %77, %cst_51 {dimension_numbers = #tpu.dot_dimension_numbers<[1], [0], [0], [1], [0, 0, 1, 1], [], []>} : vector<8x16xf32>, vector<16x16xf32>, vector<8x16xf32> -> vector<8x16xf32>
    %79 = arith.addf %74, %78 : vector<8x16xf32>
    %80 = vector.extract_strided_slice %13 {offsets = [104, 0], sizes = [8, 16], strides = [1, 1]} : vector<216x16xf32> to vector<8x16xf32>
    %c13 = arith.constant 13 : index
    %c0_52 = arith.constant 0 : index
    %c0_53 = arith.constant 0 : index
    %81 = vector.load %arg5[%c13, %c0_52, %c0_53] : memref<27x16x16xf32, #tpu.memory_space<vmem>>, vector<1x16x16xf32>
    %82 = vector.shape_cast %81 : vector<1x16x16xf32> to vector<16x16xf32>
    %cst_54 = arith.constant dense<0.000000e+00> : vector<8x16xf32>
    %83 = tpu.matmul %80, %82, %cst_54 {dimension_numbers = #tpu.dot_dimension_numbers<[1], [0], [0], [1], [0, 0, 1, 1], [], []>} : vector<8x16xf32>, vector<16x16xf32>, vector<8x16xf32> -> vector<8x16xf32>
    %84 = arith.addf %79, %83 : vector<8x16xf32>
    %85 = vector.extract_strided_slice %13 {offsets = [112, 0], sizes = [8, 16], strides = [1, 1]} : vector<216x16xf32> to vector<8x16xf32>
    %c14 = arith.constant 14 : index
    %c0_55 = arith.constant 0 : index
    %c0_56 = arith.constant 0 : index
    %86 = vector.load %arg5[%c14, %c0_55, %c0_56] : memref<27x16x16xf32, #tpu.memory_space<vmem>>, vector<1x16x16xf32>
    %87 = vector.shape_cast %86 : vector<1x16x16xf32> to vector<16x16xf32>
    %cst_57 = arith.constant dense<0.000000e+00> : vector<8x16xf32>
    %88 = tpu.matmul %85, %87, %cst_57 {dimension_numbers = #tpu.dot_dimension_numbers<[1], [0], [0], [1], [0, 0, 1, 1], [], []>} : vector<8x16xf32>, vector<16x16xf32>, vector<8x16xf32> -> vector<8x16xf32>
    %89 = arith.addf %84, %88 : vector<8x16xf32>
    %90 = vector.extract_strided_slice %13 {offsets = [120, 0], sizes = [8, 16], strides = [1, 1]} : vector<216x16xf32> to vector<8x16xf32>
    %c15 = arith.constant 15 : index
    %c0_58 = arith.constant 0 : index
    %c0_59 = arith.constant 0 : index
    %91 = vector.load %arg5[%c15, %c0_58, %c0_59] : memref<27x16x16xf32, #tpu.memory_space<vmem>>, vector<1x16x16xf32>
    %92 = vector.shape_cast %91 : vector<1x16x16xf32> to vector<16x16xf32>
    %cst_60 = arith.constant dense<0.000000e+00> : vector<8x16xf32>
    %93 = tpu.matmul %90, %92, %cst_60 {dimension_numbers = #tpu.dot_dimension_numbers<[1], [0], [0], [1], [0, 0, 1, 1], [], []>} : vector<8x16xf32>, vector<16x16xf32>, vector<8x16xf32> -> vector<8x16xf32>
    %94 = arith.addf %89, %93 : vector<8x16xf32>
    %95 = vector.extract_strided_slice %13 {offsets = [128, 0], sizes = [8, 16], strides = [1, 1]} : vector<216x16xf32> to vector<8x16xf32>
    %c16 = arith.constant 16 : index
    %c0_61 = arith.constant 0 : index
    %c0_62 = arith.constant 0 : index
    %96 = vector.load %arg5[%c16, %c0_61, %c0_62] : memref<27x16x16xf32, #tpu.memory_space<vmem>>, vector<1x16x16xf32>
    %97 = vector.shape_cast %96 : vector<1x16x16xf32> to vector<16x16xf32>
    %cst_63 = arith.constant dense<0.000000e+00> : vector<8x16xf32>
    %98 = tpu.matmul %95, %97, %cst_63 {dimension_numbers = #tpu.dot_dimension_numbers<[1], [0], [0], [1], [0, 0, 1, 1], [], []>} : vector<8x16xf32>, vector<16x16xf32>, vector<8x16xf32> -> vector<8x16xf32>
    %99 = arith.addf %94, %98 : vector<8x16xf32>
    %100 = vector.extract_strided_slice %13 {offsets = [136, 0], sizes = [8, 16], strides = [1, 1]} : vector<216x16xf32> to vector<8x16xf32>
    %c17 = arith.constant 17 : index
    %c0_64 = arith.constant 0 : index
    %c0_65 = arith.constant 0 : index
    %101 = vector.load %arg5[%c17, %c0_64, %c0_65] : memref<27x16x16xf32, #tpu.memory_space<vmem>>, vector<1x16x16xf32>
    %102 = vector.shape_cast %101 : vector<1x16x16xf32> to vector<16x16xf32>
    %cst_66 = arith.constant dense<0.000000e+00> : vector<8x16xf32>
    %103 = tpu.matmul %100, %102, %cst_66 {dimension_numbers = #tpu.dot_dimension_numbers<[1], [0], [0], [1], [0, 0, 1, 1], [], []>} : vector<8x16xf32>, vector<16x16xf32>, vector<8x16xf32> -> vector<8x16xf32>
    %104 = arith.addf %99, %103 : vector<8x16xf32>
    %105 = vector.extract_strided_slice %13 {offsets = [144, 0], sizes = [8, 16], strides = [1, 1]} : vector<216x16xf32> to vector<8x16xf32>
    %c18 = arith.constant 18 : index
    %c0_67 = arith.constant 0 : index
    %c0_68 = arith.constant 0 : index
    %106 = vector.load %arg5[%c18, %c0_67, %c0_68] : memref<27x16x16xf32, #tpu.memory_space<vmem>>, vector<1x16x16xf32>
    %107 = vector.shape_cast %106 : vector<1x16x16xf32> to vector<16x16xf32>
    %cst_69 = arith.constant dense<0.000000e+00> : vector<8x16xf32>
    %108 = tpu.matmul %105, %107, %cst_69 {dimension_numbers = #tpu.dot_dimension_numbers<[1], [0], [0], [1], [0, 0, 1, 1], [], []>} : vector<8x16xf32>, vector<16x16xf32>, vector<8x16xf32> -> vector<8x16xf32>
    %109 = arith.addf %104, %108 : vector<8x16xf32>
    %110 = vector.extract_strided_slice %13 {offsets = [152, 0], sizes = [8, 16], strides = [1, 1]} : vector<216x16xf32> to vector<8x16xf32>
    %c19 = arith.constant 19 : index
    %c0_70 = arith.constant 0 : index
    %c0_71 = arith.constant 0 : index
    %111 = vector.load %arg5[%c19, %c0_70, %c0_71] : memref<27x16x16xf32, #tpu.memory_space<vmem>>, vector<1x16x16xf32>
    %112 = vector.shape_cast %111 : vector<1x16x16xf32> to vector<16x16xf32>
    %cst_72 = arith.constant dense<0.000000e+00> : vector<8x16xf32>
    %113 = tpu.matmul %110, %112, %cst_72 {dimension_numbers = #tpu.dot_dimension_numbers<[1], [0], [0], [1], [0, 0, 1, 1], [], []>} : vector<8x16xf32>, vector<16x16xf32>, vector<8x16xf32> -> vector<8x16xf32>
    %114 = arith.addf %109, %113 : vector<8x16xf32>
    %115 = vector.extract_strided_slice %13 {offsets = [160, 0], sizes = [8, 16], strides = [1, 1]} : vector<216x16xf32> to vector<8x16xf32>
    %c20 = arith.constant 20 : index
    %c0_73 = arith.constant 0 : index
    %c0_74 = arith.constant 0 : index
    %116 = vector.load %arg5[%c20, %c0_73, %c0_74] : memref<27x16x16xf32, #tpu.memory_space<vmem>>, vector<1x16x16xf32>
    %117 = vector.shape_cast %116 : vector<1x16x16xf32> to vector<16x16xf32>
    %cst_75 = arith.constant dense<0.000000e+00> : vector<8x16xf32>
    %118 = tpu.matmul %115, %117, %cst_75 {dimension_numbers = #tpu.dot_dimension_numbers<[1], [0], [0], [1], [0, 0, 1, 1], [], []>} : vector<8x16xf32>, vector<16x16xf32>, vector<8x16xf32> -> vector<8x16xf32>
    %119 = arith.addf %114, %118 : vector<8x16xf32>
    %120 = vector.extract_strided_slice %13 {offsets = [168, 0], sizes = [8, 16], strides = [1, 1]} : vector<216x16xf32> to vector<8x16xf32>
    %c21 = arith.constant 21 : index
    %c0_76 = arith.constant 0 : index
    %c0_77 = arith.constant 0 : index
    %121 = vector.load %arg5[%c21, %c0_76, %c0_77] : memref<27x16x16xf32, #tpu.memory_space<vmem>>, vector<1x16x16xf32>
    %122 = vector.shape_cast %121 : vector<1x16x16xf32> to vector<16x16xf32>
    %cst_78 = arith.constant dense<0.000000e+00> : vector<8x16xf32>
    %123 = tpu.matmul %120, %122, %cst_78 {dimension_numbers = #tpu.dot_dimension_numbers<[1], [0], [0], [1], [0, 0, 1, 1], [], []>} : vector<8x16xf32>, vector<16x16xf32>, vector<8x16xf32> -> vector<8x16xf32>
    %124 = arith.addf %119, %123 : vector<8x16xf32>
    %125 = vector.extract_strided_slice %13 {offsets = [176, 0], sizes = [8, 16], strides = [1, 1]} : vector<216x16xf32> to vector<8x16xf32>
    %c22 = arith.constant 22 : index
    %c0_79 = arith.constant 0 : index
    %c0_80 = arith.constant 0 : index
    %126 = vector.load %arg5[%c22, %c0_79, %c0_80] : memref<27x16x16xf32, #tpu.memory_space<vmem>>, vector<1x16x16xf32>
    %127 = vector.shape_cast %126 : vector<1x16x16xf32> to vector<16x16xf32>
    %cst_81 = arith.constant dense<0.000000e+00> : vector<8x16xf32>
    %128 = tpu.matmul %125, %127, %cst_81 {dimension_numbers = #tpu.dot_dimension_numbers<[1], [0], [0], [1], [0, 0, 1, 1], [], []>} : vector<8x16xf32>, vector<16x16xf32>, vector<8x16xf32> -> vector<8x16xf32>
    %129 = arith.addf %124, %128 : vector<8x16xf32>
    %130 = vector.extract_strided_slice %13 {offsets = [184, 0], sizes = [8, 16], strides = [1, 1]} : vector<216x16xf32> to vector<8x16xf32>
    %c23 = arith.constant 23 : index
    %c0_82 = arith.constant 0 : index
    %c0_83 = arith.constant 0 : index
    %131 = vector.load %arg5[%c23, %c0_82, %c0_83] : memref<27x16x16xf32, #tpu.memory_space<vmem>>, vector<1x16x16xf32>
    %132 = vector.shape_cast %131 : vector<1x16x16xf32> to vector<16x16xf32>
    %cst_84 = arith.constant dense<0.000000e+00> : vector<8x16xf32>
    %133 = tpu.matmul %130, %132, %cst_84 {dimension_numbers = #tpu.dot_dimension_numbers<[1], [0], [0], [1], [0, 0, 1, 1], [], []>} : vector<8x16xf32>, vector<16x16xf32>, vector<8x16xf32> -> vector<8x16xf32>
    %134 = arith.addf %129, %133 : vector<8x16xf32>
    %135 = vector.extract_strided_slice %13 {offsets = [192, 0], sizes = [8, 16], strides = [1, 1]} : vector<216x16xf32> to vector<8x16xf32>
    %c24 = arith.constant 24 : index
    %c0_85 = arith.constant 0 : index
    %c0_86 = arith.constant 0 : index
    %136 = vector.load %arg5[%c24, %c0_85, %c0_86] : memref<27x16x16xf32, #tpu.memory_space<vmem>>, vector<1x16x16xf32>
    %137 = vector.shape_cast %136 : vector<1x16x16xf32> to vector<16x16xf32>
    %cst_87 = arith.constant dense<0.000000e+00> : vector<8x16xf32>
    %138 = tpu.matmul %135, %137, %cst_87 {dimension_numbers = #tpu.dot_dimension_numbers<[1], [0], [0], [1], [0, 0, 1, 1], [], []>} : vector<8x16xf32>, vector<16x16xf32>, vector<8x16xf32> -> vector<8x16xf32>
    %139 = arith.addf %134, %138 : vector<8x16xf32>
    %140 = vector.extract_strided_slice %13 {offsets = [200, 0], sizes = [8, 16], strides = [1, 1]} : vector<216x16xf32> to vector<8x16xf32>
    %c25 = arith.constant 25 : index
    %c0_88 = arith.constant 0 : index
    %c0_89 = arith.constant 0 : index
    %141 = vector.load %arg5[%c25, %c0_88, %c0_89] : memref<27x16x16xf32, #tpu.memory_space<vmem>>, vector<1x16x16xf32>
    %142 = vector.shape_cast %141 : vector<1x16x16xf32> to vector<16x16xf32>
    %cst_90 = arith.constant dense<0.000000e+00> : vector<8x16xf32>
    %143 = tpu.matmul %140, %142, %cst_90 {dimension_numbers = #tpu.dot_dimension_numbers<[1], [0], [0], [1], [0, 0, 1, 1], [], []>} : vector<8x16xf32>, vector<16x16xf32>, vector<8x16xf32> -> vector<8x16xf32>
    %144 = arith.addf %139, %143 : vector<8x16xf32>
    %145 = vector.extract_strided_slice %13 {offsets = [208, 0], sizes = [8, 16], strides = [1, 1]} : vector<216x16xf32> to vector<8x16xf32>
    %c26 = arith.constant 26 : index
    %c0_91 = arith.constant 0 : index
    %c0_92 = arith.constant 0 : index
    %146 = vector.load %arg5[%c26, %c0_91, %c0_92] : memref<27x16x16xf32, #tpu.memory_space<vmem>>, vector<1x16x16xf32>
    %147 = vector.shape_cast %146 : vector<1x16x16xf32> to vector<16x16xf32>
    %cst_93 = arith.constant dense<0.000000e+00> : vector<8x16xf32>
    %148 = tpu.matmul %145, %147, %cst_93 {dimension_numbers = #tpu.dot_dimension_numbers<[1], [0], [0], [1], [0, 0, 1, 1], [], []>} : vector<8x16xf32>, vector<16x16xf32>, vector<8x16xf32> -> vector<8x16xf32>
    %149 = arith.addf %144, %148 : vector<8x16xf32>
    %c0_94 = arith.constant 0 : index
    %c0_95 = arith.constant 0 : index
    %150 = vector.load %arg6[%c0_94, %c0_95] : memref<1x16xf32, #tpu.memory_space<vmem>>, vector<1x16xf32>
    %151 = vector.broadcast %150 : vector<1x16xf32> to vector<8x16xf32>
    %152 = arith.addf %149, %151 : vector<8x16xf32>
    %cst_96 = arith.constant 0.000000e+00 : f32
    %153 = vector.broadcast %cst_96 : f32 to vector<8x16xf32>
    %154 = arith.cmpf ogt, %152, %153 : vector<8x16xf32>
    %cst_97 = arith.constant 0.00999999977 : f32
    %155 = vector.broadcast %cst_97 : f32 to vector<8x16xf32>
    %156 = arith.mulf %155, %152 : vector<8x16xf32>
    %157 = arith.select %154, %152, %156 : vector<8x16xi1>, vector<8x16xf32>
    %c0_98 = arith.constant 0 : index
    %c0_99 = arith.constant 0 : index
    %158 = vector.load %arg7[%c0_98, %c0_99] : memref<16x8xf32, #tpu.memory_space<vmem>>, vector<16x8xf32>
    %cst_100 = arith.constant dense<0.000000e+00> : vector<8x8xf32>
    %159 = tpu.matmul %157, %158, %cst_100 {dimension_numbers = #tpu.dot_dimension_numbers<[1], [0], [0], [1], [0, 0, 1, 1], [], []>} : vector<8x16xf32>, vector<16x8xf32>, vector<8x8xf32> -> vector<8x8xf32>
    %c0_101 = arith.constant 0 : index
    %c0_102 = arith.constant 0 : index
    %160 = vector.load %arg8[%c0_101, %c0_102] : memref<1x8xf32, #tpu.memory_space<vmem>>, vector<1x8xf32>
    %161 = vector.broadcast %160 : vector<1x8xf32> to vector<8x8xf32>
    %162 = arith.addf %159, %161 : vector<8x8xf32>
    %163 = arith.mulf %162, %162 : vector<8x8xf32>
    %cst_103 = arith.constant dense<0.000000e+00> : vector<8xf32>
    %164 = vector.multi_reduction <add>, %163, %cst_103 [1] : vector<8x8xf32> to vector<8xf32>
    %165 = vector.shape_cast %164 : vector<8xf32> to vector<8x1xf32>
    %166 = math.sqrt %165 : vector<8x1xf32>
    %cst_104 = arith.constant 9.99999997E-7 : f32
    %167 = vector.broadcast %cst_104 : f32 to vector<8x1xf32>
    %168 = arith.addf %166, %167 : vector<8x1xf32>
    %169 = vector.broadcast %168 : vector<8x1xf32> to vector<8x8xf32>
    %170 = arith.divf %162, %169 : vector<8x8xf32>
    %c0_105 = arith.constant 0 : index
    %c0_106 = arith.constant 0 : index
    %c0_107 = arith.constant 0 : index
    %171 = vector.load %arg11[%c0_105, %c0_106, %c0_107] : memref<1x8x8xf32, #tpu.memory_space<vmem>>, vector<1x8x8xf32>
    %172 = vector.shape_cast %171 : vector<1x8x8xf32> to vector<8x8xf32>
    %173 = vector.shape_cast %170 : vector<8x8xf32> to vector<1x8x8xf32>
    tpu.vector_store %arg11[%c0_105, %c0_106, %c0_107], %173 {strides = array<i32>} : memref<1x8x8xf32, #tpu.memory_space<vmem>>, vector<1x8x8xf32>,
    %cst_108 = arith.constant 0.000000e+00 : f32
    %174 = vector.broadcast %cst_108 : f32 to vector<1x27xf32>
    %175 = vector.extract_strided_slice %170 {offsets = [0, 0], sizes = [1, 8], strides = [1, 1]} : vector<8x8xf32> to vector<1x8xf32>
    %c0_109 = arith.constant 0 : index
    %c0_110 = arith.constant 0 : index
    %c0_111 = arith.constant 0 : index
    %c0_112 = arith.constant 0 : index
    %176 = vector.load %arg9[%c0_109, %c0_110, %c0_111, %c0_112] : memref<1x8x8x27xf32, #tpu.memory_space<vmem>>, vector<1x1x8x27xf32>
    %177 = vector.shape_cast %176 : vector<1x1x8x27xf32> to vector<8x27xf32>
    %cst_113 = arith.constant dense<0.000000e+00> : vector<1x27xf32>
    %178 = tpu.matmul %175, %177, %cst_113 {dimension_numbers = #tpu.dot_dimension_numbers<[1], [0], [0], [1], [0, 0, 1, 1], [], []>} : vector<1x8xf32>, vector<8x27xf32>, vector<1x27xf32> -> vector<1x27xf32>
    %179 = arith.addf %174, %178 : vector<1x27xf32>
    %180 = vector.extract_strided_slice %170 {offsets = [1, 0], sizes = [1, 8], strides = [1, 1]} : vector<8x8xf32> to vector<1x8xf32>
    %c0_114 = arith.constant 0 : index
    %c1_115 = arith.constant 1 : index
    %c0_116 = arith.constant 0 : index
    %c0_117 = arith.constant 0 : index
    %181 = vector.load %arg9[%c0_114, %c1_115, %c0_116, %c0_117] : memref<1x8x8x27xf32, #tpu.memory_space<vmem>>, vector<1x1x8x27xf32>
    %182 = vector.shape_cast %181 : vector<1x1x8x27xf32> to vector<8x27xf32>
    %cst_118 = arith.constant dense<0.000000e+00> : vector<1x27xf32>
    %183 = tpu.matmul %180, %182, %cst_118 {dimension_numbers = #tpu.dot_dimension_numbers<[1], [0], [0], [1], [0, 0, 1, 1], [], []>} : vector<1x8xf32>, vector<8x27xf32>, vector<1x27xf32> -> vector<1x27xf32>
    %184 = arith.addf %179, %183 : vector<1x27xf32>
    %185 = vector.extract_strided_slice %170 {offsets = [2, 0], sizes = [1, 8], strides = [1, 1]} : vector<8x8xf32> to vector<1x8xf32>
    %c0_119 = arith.constant 0 : index
    %c2_120 = arith.constant 2 : index
    %c0_121 = arith.constant 0 : index
    %c0_122 = arith.constant 0 : index
    %186 = vector.load %arg9[%c0_119, %c2_120, %c0_121, %c0_122] : memref<1x8x8x27xf32, #tpu.memory_space<vmem>>, vector<1x1x8x27xf32>
    %187 = vector.shape_cast %186 : vector<1x1x8x27xf32> to vector<8x27xf32>
    %cst_123 = arith.constant dense<0.000000e+00> : vector<1x27xf32>
    %188 = tpu.matmul %185, %187, %cst_123 {dimension_numbers = #tpu.dot_dimension_numbers<[1], [0], [0], [1], [0, 0, 1, 1], [], []>} : vector<1x8xf32>, vector<8x27xf32>, vector<1x27xf32> -> vector<1x27xf32>
    %189 = arith.addf %184, %188 : vector<1x27xf32>
    %190 = vector.extract_strided_slice %170 {offsets = [3, 0], sizes = [1, 8], strides = [1, 1]} : vector<8x8xf32> to vector<1x8xf32>
    %c0_124 = arith.constant 0 : index
    %c3_125 = arith.constant 3 : index
    %c0_126 = arith.constant 0 : index
    %c0_127 = arith.constant 0 : index
    %191 = vector.load %arg9[%c0_124, %c3_125, %c0_126, %c0_127] : memref<1x8x8x27xf32, #tpu.memory_space<vmem>>, vector<1x1x8x27xf32>
    %192 = vector.shape_cast %191 : vector<1x1x8x27xf32> to vector<8x27xf32>
    %cst_128 = arith.constant dense<0.000000e+00> : vector<1x27xf32>
    %193 = tpu.matmul %190, %192, %cst_128 {dimension_numbers = #tpu.dot_dimension_numbers<[1], [0], [0], [1], [0, 0, 1, 1], [], []>} : vector<1x8xf32>, vector<8x27xf32>, vector<1x27xf32> -> vector<1x27xf32>
    %194 = arith.addf %189, %193 : vector<1x27xf32>
    %195 = vector.extract_strided_slice %170 {offsets = [4, 0], sizes = [1, 8], strides = [1, 1]} : vector<8x8xf32> to vector<1x8xf32>
    %c0_129 = arith.constant 0 : index
    %c4_130 = arith.constant 4 : index
    %c0_131 = arith.constant 0 : index
    %c0_132 = arith.constant 0 : index
    %196 = vector.load %arg9[%c0_129, %c4_130, %c0_131, %c0_132] : memref<1x8x8x27xf32, #tpu.memory_space<vmem>>, vector<1x1x8x27xf32>
    %197 = vector.shape_cast %196 : vector<1x1x8x27xf32> to vector<8x27xf32>
    %cst_133 = arith.constant dense<0.000000e+00> : vector<1x27xf32>
    %198 = tpu.matmul %195, %197, %cst_133 {dimension_numbers = #tpu.dot_dimension_numbers<[1], [0], [0], [1], [0, 0, 1, 1], [], []>} : vector<1x8xf32>, vector<8x27xf32>, vector<1x27xf32> -> vector<1x27xf32>
    %199 = arith.addf %194, %198 : vector<1x27xf32>
    %200 = vector.extract_strided_slice %170 {offsets = [5, 0], sizes = [1, 8], strides = [1, 1]} : vector<8x8xf32> to vector<1x8xf32>
    %c0_134 = arith.constant 0 : index
    %c5_135 = arith.constant 5 : index
    %c0_136 = arith.constant 0 : index
    %c0_137 = arith.constant 0 : index
    %201 = vector.load %arg9[%c0_134, %c5_135, %c0_136, %c0_137] : memref<1x8x8x27xf32, #tpu.memory_space<vmem>>, vector<1x1x8x27xf32>
    %202 = vector.shape_cast %201 : vector<1x1x8x27xf32> to vector<8x27xf32>
    %cst_138 = arith.constant dense<0.000000e+00> : vector<1x27xf32>
    %203 = tpu.matmul %200, %202, %cst_138 {dimension_numbers = #tpu.dot_dimension_numbers<[1], [0], [0], [1], [0, 0, 1, 1], [], []>} : vector<1x8xf32>, vector<8x27xf32>, vector<1x27xf32> -> vector<1x27xf32>
    %204 = arith.addf %199, %203 : vector<1x27xf32>
    %205 = vector.extract_strided_slice %170 {offsets = [6, 0], sizes = [1, 8], strides = [1, 1]} : vector<8x8xf32> to vector<1x8xf32>
    %c0_139 = arith.constant 0 : index
    %c6_140 = arith.constant 6 : index
    %c0_141 = arith.constant 0 : index
    %c0_142 = arith.constant 0 : index
    %206 = vector.load %arg9[%c0_139, %c6_140, %c0_141, %c0_142] : memref<1x8x8x27xf32, #tpu.memory_space<vmem>>, vector<1x1x8x27xf32>
    %207 = vector.shape_cast %206 : vector<1x1x8x27xf32> to vector<8x27xf32>
    %cst_143 = arith.constant dense<0.000000e+00> : vector<1x27xf32>
    %208 = tpu.matmul %205, %207, %cst_143 {dimension_numbers = #tpu.dot_dimension_numbers<[1], [0], [0], [1], [0, 0, 1, 1], [], []>} : vector<1x8xf32>, vector<8x27xf32>, vector<1x27xf32> -> vector<1x27xf32>
    %209 = arith.addf %204, %208 : vector<1x27xf32>
    %210 = vector.extract_strided_slice %170 {offsets = [7, 0], sizes = [1, 8], strides = [1, 1]} : vector<8x8xf32> to vector<1x8xf32>
    %c0_144 = arith.constant 0 : index
    %c7_145 = arith.constant 7 : index
    %c0_146 = arith.constant 0 : index
    %c0_147 = arith.constant 0 : index
    %211 = vector.load %arg9[%c0_144, %c7_145, %c0_146, %c0_147] : memref<1x8x8x27xf32, #tpu.memory_space<vmem>>, vector<1x1x8x27xf32>
    %212 = vector.shape_cast %211 : vector<1x1x8x27xf32> to vector<8x27xf32>
    %cst_148 = arith.constant dense<0.000000e+00> : vector<1x27xf32>
    %213 = tpu.matmul %210, %212, %cst_148 {dimension_numbers = #tpu.dot_dimension_numbers<[1], [0], [0], [1], [0, 0, 1, 1], [], []>} : vector<1x8xf32>, vector<8x27xf32>, vector<1x27xf32> -> vector<1x27xf32>
    %214 = arith.addf %209, %213 : vector<1x27xf32>
    %cst_149 = arith.constant dense<0xFF800000> : vector<1xf32>
    %215 = vector.multi_reduction <maximumf>, %214, %cst_149 [1] : vector<1x27xf32> to vector<1xf32>
    %216 = vector.shape_cast %215 : vector<1xf32> to vector<1x1xf32>
    %217 = vector.broadcast %216 : vector<1x1xf32> to vector<1x27xf32>
    %218 = arith.subf %214, %217 : vector<1x27xf32>
    %cst_150 = arith.constant 5.000000e+00 : f32
    %219 = vector.broadcast %cst_150 : f32 to vector<1x27xf32>
    %220 = arith.mulf %219, %218 : vector<1x27xf32>
    %221 = math.exp %220 : vector<1x27xf32>
    %cst_151 = arith.constant dense<0.000000e+00> : vector<1xf32>
    %222 = vector.multi_reduction <add>, %221, %cst_151 [1] : vector<1x27xf32> to vector<1xf32>
    %223 = vector.shape_cast %222 : vector<1xf32> to vector<1x1xf32>
    %224 = vector.broadcast %223 : vector<1x1xf32> to vector<1x27xf32>
    %225 = arith.divf %221, %224 : vector<1x27xf32>
    %c0_152 = arith.constant 0 : index
    %c0_153 = arith.constant 0 : index
    %226 = vector.load %arg10[%c0_152, %c0_153] : memref<3x27xf32, #tpu.memory_space<vmem>>, vector<3x27xf32>
    %227 = vector.broadcast %225 : vector<1x27xf32> to vector<3x27xf32>
    %228 = arith.mulf %226, %227 : vector<3x27xf32>
    %cst_154 = arith.constant dense<0.000000e+00> : vector<3xf32>
    %229 = vector.multi_reduction <add>, %228, %cst_154 [1] : vector<3x27xf32> to vector<3xf32>
    %230 = vector.shape_cast %229 : vector<3xf32> to vector<3x1xf32>
    %c0_155 = arith.constant 0 : index
    %c0_156 = arith.constant 0 : index
    %c0_157 = arith.constant 0 : index
    %231 = vector.load %arg12[%c0_155, %c0_156, %c0_157] : memref<1x3x1xf32, #tpu.memory_space<vmem>>, vector<1x3x1xf32>
    %232 = vector.shape_cast %231 : vector<1x3x1xf32> to vector<3x1xf32>
    %233 = vector.shape_cast %230 : vector<3x1xf32> to vector<1x3x1xf32>
    tpu.vector_store %arg12[%c0_155, %c0_156, %c0_157], %233 {strides = array<i32>} : memref<1x3x1xf32, #tpu.memory_space<vmem>>, vector<1x3x1xf32>,
    return
  }
  func.func @transform_0(%arg0: i32) -> (i32, i32, i32) {
    %c0_i32 = arith.constant 0 : i32
    %c0_i32_0 = arith.constant 0 : i32
    %c0_i32_1 = arith.constant 0 : i32
    return %arg0, %c0_i32, %c0_i32_0 : i32, i32, i32
  }
  func.func @transform_1(%arg0: i32) -> (i32, i32) {
    %c0_i32 = arith.constant 0 : i32
    %c0_i32_0 = arith.constant 0 : i32
    %c0_i32_1 = arith.constant 0 : i32
    return %c0_i32, %c0_i32_0 : i32, i32
  }
  func.func @transform_2(%arg0: i32) -> (i32, i32) {
    %c0_i32 = arith.constant 0 : i32
    %c0_i32_0 = arith.constant 0 : i32
    %c0_i32_1 = arith.constant 0 : i32
    return %c0_i32, %c0_i32_0 : i32, i32
  }
  func.func @transform_3(%arg0: i32) -> (i32, i32) {
    %c0_i32 = arith.constant 0 : i32
    %c0_i32_0 = arith.constant 0 : i32
    %c0_i32_1 = arith.constant 0 : i32
    return %c0_i32, %c0_i32_0 : i32, i32
  }
  func.func @transform_4(%arg0: i32) -> (i32, i32, i32) {
    %c0_i32 = arith.constant 0 : i32
    %c0_i32_0 = arith.constant 0 : i32
    %c0_i32_1 = arith.constant 0 : i32
    %c0_i32_2 = arith.constant 0 : i32
    return %c0_i32, %c0_i32_0, %c0_i32_1 : i32, i32, i32
  }
  func.func @transform_5(%arg0: i32) -> (i32, i32) {
    %c0_i32 = arith.constant 0 : i32
    %c0_i32_0 = arith.constant 0 : i32
    %c0_i32_1 = arith.constant 0 : i32
    return %c0_i32, %c0_i32_0 : i32, i32
  }
  func.func @transform_6(%arg0: i32) -> (i32, i32) {
    %c0_i32 = arith.constant 0 : i32
    %c0_i32_0 = arith.constant 0 : i32
    %c0_i32_1 = arith.constant 0 : i32
    return %c0_i32, %c0_i32_0 : i32, i32
  }
  func.func @transform_7(%arg0: i32) -> (i32, i32) {
    %c0_i32 = arith.constant 0 : i32
    %c0_i32_0 = arith.constant 0 : i32
    %c0_i32_1 = arith.constant 0 : i32
    return %c0_i32, %c0_i32_0 : i32, i32
  }
  func.func @transform_8(%arg0: i32) -> (i32, i32, i32, i32) {
    %c0_i32 = arith.constant 0 : i32
    %c0_i32_0 = arith.constant 0 : i32
    %c0_i32_1 = arith.constant 0 : i32
    %c0_i32_2 = arith.constant 0 : i32
    return %arg0, %c0_i32, %c0_i32_0, %c0_i32_1 : i32, i32, i32, i32
  }
  func.func @transform_9(%arg0: i32) -> (i32, i32) {
    %c0_i32 = arith.constant 0 : i32
    %c0_i32_0 = arith.constant 0 : i32
    %c0_i32_1 = arith.constant 0 : i32
    return %c0_i32, %c0_i32_0 : i32, i32
  }
  func.func @transform_10(%arg0: i32) -> (i32, i32, i32) {
    %c0_i32 = arith.constant 0 : i32
    %c0_i32_0 = arith.constant 0 : i32
    %c0_i32_1 = arith.constant 0 : i32
    return %arg0, %c0_i32, %c0_i32_0 : i32, i32, i32
  }
  func.func @transform_11(%arg0: i32) -> (i32, i32, i32) {
    %c0_i32 = arith.constant 0 : i32
    %c0_i32_0 = arith.constant 0 : i32
    %c0_i32_1 = arith.constant 0 : i32
    return %arg0, %c0_i32, %c0_i32_0 : i32, i32, i32
  }
}

</mosaic_0001>

<llo_original>
// kernel: run_train.7
$region0: #{run_train.7}
  #allocation0 [shape = 'u32[]', space=smem, size = 0x4, offset = 0x4, fixed_abs, tag = 'smem constant byte address 0x4 - core index']
  #allocation1 [shape = 'u32[144,128]{1,0:T(1,128)}', space=vmem, size = 0x12000, scoped, tag = 'internal scratch']
  %s0 = inlined_call_operand.vmem [shape: bf16[16,108], index: 0, kind: input, shape index: {}]
  %s1 = inlined_call_operand.vmem [shape: f32[16,1], index: 1, kind: input, shape index: {}]
  %s2 = inlined_call_operand.vmem [shape: bf16[108,3072], index: 2, kind: input, shape index: {}]
  %s3 = inlined_call_operand.vmem [shape: f32[16,3072], index: 3, kind: output, shape index: {}]
  %s4 = sld [smem:[#allocation0]]
  $region87: #{run_train.7} parent=0
    _
  %s6 = ssub.s32 1, %s4
  %s7 = scalar_select 0, %s6, %s4
  $region1: #{run_train.7} parent=0
    #allocation2 [shape = 'u8[229376]{0}', space=vmem, size = 0x38000, scoped, tag = 'input window, operand 2']
    #allocation3 [shape = 'u8[65536]{0}', space=vmem, size = 0x10000, scoped, tag = 'output window, operand 0']
    loop: start=0, step=1, limit=8
    $region2: #{run_train.7} parent=1 // loop_pre_header
      _
    $region3: #{run_train.7} parent=1 // loop_header
      %s9 = sphi 0, %s13
      %p10 = scmp.ge.s32.totalorder %s9, 8
      %s17 = sphi 0, %s17
      %s19 = sphi 0, %s17
      %s20 = sphi 0, %s19
      %s34 = sphi 0, %s20
      %s38 = sphi 0, %s38
      %s40 = sphi 0, %s38
      %s41 = sphi 0, %s40
      %s55 = sphi 0, %s41
      %s61 = sphi 0, %s63
      %s64 = sphi 0, %s61
      %s65 = sphi 0, %s64
      %s81 = sphi 0, %s65
      %s87 = sphi 0, %s89
      %s90 = sphi 0, %s87
      %s91 = sphi 0, %s90
      %s107 = sphi 0, %s91
    $region4: #{run_train.7} parent=1 // loop_header_branch
      %12 = sbr.rel (%p10) target = $region8
    $region5: #{run_train.7} parent=1 // loop_body
      %s14 = ssub.s32 %s9, 1
      %s15 = ssub.s32 %s9, 2
      %s16 = sadd.s32 %s9, 1
      %s18 = sadd.s32 %s17, 1
      %p21 = scmp.eq.s32.totalorder %s9, 5
      %p22 = scmp.ne.s32.totalorder %s17, %s19
      %p23 = scmp.eq.s32.totalorder %s9, 0
      %p24 = por %p22, %p23
      %p25 = scmp.ne.s32.totalorder %s17, %s19
      %p26 = scmp.eq.s32.totalorder %s14, 5
      %p27 = por %p25, %p26
      %p28 = scmp.ne.s32.totalorder %s19, %s20
      %p29 = scmp.eq.s32.totalorder %s14, 0
      %p30 = por %p28, %p29
      %p31 = scmp.ne.s32.totalorder %s19, %s20
      %p32 = scmp.eq.s32.totalorder %s15, 5
      %p33 = por %p31, %p32
      %p35 = scmp.ne.s32.totalorder %s20, %s34
      %p36 = scmp.eq.s32.totalorder %s15, 0
      %p37 = por %p35, %p36
      %s39 = sadd.s32 %s38, 1
      %p42 = scmp.eq.s32.totalorder %s9, 5
      %p43 = scmp.ne.s32.totalorder %s38, %s40
      %p44 = scmp.eq.s32.totalorder %s9, 0
      %p45 = por %p43, %p44
      %p46 = scmp.ne.s32.totalorder %s38, %s40
      %p47 = scmp.eq.s32.totalorder %s14, 5
      %p48 = por %p46, %p47
      %p49 = scmp.ne.s32.totalorder %s40, %s41
      %p50 = scmp.eq.s32.totalorder %s14, 0
      %p51 = por %p49, %p50
      %p52 = scmp.ne.s32.totalorder %s40, %s41
      %p53 = scmp.eq.s32.totalorder %s15, 5
      %p54 = por %p52, %p53
      %p56 = scmp.ne.s32.totalorder %s41, %s55
      %p57 = scmp.eq.s32.totalorder %s15, 0
      %p58 = por %p56, %p57
      %s59 = ssub.s32 %s9, %s16
      %p60 = scmp.eq.s32.totalorder %s59, 0
      %s62 = sadd.s32 %s61, 1
      %s63 = scalar_select %p60, %s61, %s62
      %p66 = pneg %p60
      %p67 = scmp.eq.s32.totalorder %s9, 5
      %p68 = por %p66, %p67
      %p69 = scmp.ne.s32.totalorder %s61, %s64
      %p70 = scmp.eq.s32.totalorder %s9, 0
      %p71 = por %p69, %p70
      %p72 = scmp.ne.s32.totalorder %s61, %s64
      %p73 = scmp.eq.s32.totalorder %s14, 5
      %p74 = por %p72, %p73
      %p75 = scmp.ne.s32.totalorder %s64, %s65
      %p76 = scmp.eq.s32.totalorder %s14, 0
      %p77 = por %p75, %p76
      %p78 = scmp.ne.s32.totalorder %s64, %s65
      %p79 = scmp.eq.s32.totalorder %s15, 5
      %p80 = por %p78, %p79
      %p82 = scmp.ne.s32.totalorder %s65, %s81
      %p83 = scmp.eq.s32.totalorder %s15, 0
      %p84 = por %p82, %p83
      %s85 = ssub.s32 %s9, %s16
      %p86 = scmp.eq.s32.totalorder %s85, 0
      %s88 = sadd.s32 %s87, 1
      %s89 = scalar_select %p86, %s87, %s88
      %p92 = pneg %p86
      %p93 = scmp.eq.s32.totalorder %s9, 5
      %p94 = por %p92, %p93
      %p95 = scmp.ne.s32.totalorder %s87, %s90
      %p96 = scmp.eq.s32.totalorder %s9, 0
      %p97 = por %p95, %p96
      %p98 = scmp.ne.s32.totalorder %s87, %s90
      %p99 = scmp.eq.s32.totalorder %s14, 5
      %p100 = por %p98, %p99
      %p101 = scmp.ne.s32.totalorder %s90, %s91
      %p102 = scmp.eq.s32.totalorder %s14, 0
      %p103 = por %p101, %p102
      %p104 = scmp.ne.s32.totalorder %s90, %s91
      %p105 = scmp.eq.s32.totalorder %s15, 5
      %p106 = por %p104, %p105
      %p108 = scmp.ne.s32.totalorder %s91, %s107
      %p109 = scmp.eq.s32.totalorder %s15, 0
      %p110 = por %p108, %p109
      %p111 = scmp.le.s32.totalorder 1, %s9
      %p112 = scmp.lt.s32.totalorder %s9, 7
      %p113 = pnand %p111, %p112
      %p114 = pneg %p113
      // Predicated region
      $region9: #{run_train.7} parent=5 // pred_check
        _
      $region10: #{run_train.7} parent=5 // pred_check_branch
        %116 = sbr.rel (%p113) target = $region12
      $region11: #{run_train.7} parent=5 // pred_region
        %s117 = ssub.s32 %s9, 1
        // Predicated region
        $region13: #{run_train.7} parent=11 // pred_check
          %p118 = pneg %p30
        $region14: #{run_train.7} parent=11 // pred_check_branch
          %120 = sbr.rel (%p118) target = $region16
        $region15: #{run_train.7} parent=11 // pred_region
          _
        $region16: #{run_train.7} parent=11 // pred_fallthru
          _
        // Predicated region
        $region17: #{run_train.7} parent=11 // pred_check
          %p121 = pneg %p51
        $region18: #{run_train.7} parent=11 // pred_check_branch
          %123 = sbr.rel (%p121) target = $region20
        $region19: #{run_train.7} parent=11 // pred_region
          _
        $region20: #{run_train.7} parent=11 // pred_fallthru
          _
      $region12: #{run_train.7} parent=5 // pred_fallthru
        _
      %p124 = scmp.lt.s32.totalorder %s9, 6
      // Predicated region
      $region21: #{run_train.7} parent=5 // pred_check
        %p125 = pneg %p124
      $region22: #{run_train.7} parent=5 // pred_check_branch
        %127 = sbr.rel (%p125) target = $region24
      $region23: #{run_train.7} parent=5 // pred_region
        // Predicated region
        $region25: #{run_train.7} parent=23 // pred_check
          %p128 = pneg %p71
        $region26: #{run_train.7} parent=23 // pred_check_branch
          %130 = sbr.rel (%p128) target = $region28
        $region27: #{run_train.7} parent=23 // pred_region
          %s131 = sand.u32 %s61, 1
          %s132 = sand.u32 %s61, 1
          %s133 = smul.addr %s132, 224
          %s134 = scalar_lea.vmem [#allocation2], %s133
          %s135 = smul.u32 4, %s9
          %s136 = smul.addr %s135, 4
          %s137 = scalar_lea.vmem %s2, %s136
          // Predicated region
          $region29: #{run_train.7} parent=27 // pred_check
            _
          $region30: #{run_train.7} parent=27 // pred_check_branch
            %139 = sbr.rel (0) target = $region32
          $region31: #{run_train.7} parent=27 // pred_region
            // Predicated region
            $region33: #{run_train.7} parent=31 // pred_check
              _
            $region34: #{run_train.7} parent=31 // pred_check_branch
              %141 = sbr.rel (0) target = $region36
            $region35: #{run_train.7} parent=31 // pred_region
              loop: start=0, step=1, limit=1
              $region37: #{run_train.7} parent=35 // loop_pre_header
                _
              $region38: #{run_train.7} parent=35 // loop_header
                %s143 = sphi 0, %s147
                %p144 = scmp.ge.s32.totalorder %s143, 1
                %s148 = sphi %s137, %s137
                %s149 = sphi %s134, %s134
              $region39: #{run_train.7} parent=35 // loop_header_branch
                %146 = sbr.rel (%p144) target = $region43
              $region40: #{run_train.7} parent=35 // loop_body
                %v150 = vld [vmem:[%s148] sm:$0xff]
                %151 = vst [vmem:[%s149] sm:$0xff] %v150
                %v152 = vld [vmem:[%s148 + $0x8] sm:$0xff]
                %153 = vst [vmem:[%s149 + $0x8] sm:$0xff] %v152
                %v154 = vld [vmem:[%s148 + $0x60] sm:$0xff]
                %155 = vst [vmem:[%s149 + $0x10] sm:$0xff] %v154
                %v156 = vld [vmem:[%s148 + $0x68] sm:$0xff]
                %157 = vst [vmem:[%s149 + $0x18] sm:$0xff] %v156
                %v158 = vld [vmem:[%s148 + $0xc0] sm:$0xff]
                %159 = vst [vmem:[%s149 + $0x20] sm:$0xff] %v158
                %v160 = vld [vmem:[%s148 + $0xc8] sm:$0xff]
                %161 = vst [vmem:[%s149 + $0x28] sm:$0xff] %v160
                %v162 = vld [vmem:[%s148 + $0x120] sm:$0xff]
                %163 = vst [vmem:[%s149 + $0x30] sm:$0xff] %v162
                %v164 = vld [vmem:[%s148 + $0x128] sm:$0xff]
                %165 = vst [vmem:[%s149 + $0x38] sm:$0xff] %v164
                %v166 = vld [vmem:[%s148 + $0x180] sm:$0xff]
                %167 = vst [vmem:[%s149 + $0x40] sm:$0xff] %v166
                %v168 = vld [vmem:[%s148 + $0x188] sm:$0xff]
                %169 = vst [vmem:[%s149 + $0x48] sm:$0xff] %v168
                %v170 = vld [vmem:[%s148 + $0x1e0] sm:$0xff]
                %171 = vst [vmem:[%s149 + $0x50] sm:$0xff] %v170
                %v172 = vld [vmem:[%s148 + $0x1e8] sm:$0xff]
                %173 = vst [vmem:[%s149 + $0x58] sm:$0xff] %v172
                %v174 = vld [vmem:[%s148 + $0x240] sm:$0xff]
                %175 = vst [vmem:[%s149 + $0x60] sm:$0xff] %v174
                %v176 = vld [vmem:[%s148 + $0x248] sm:$0xff]
                %177 = vst [vmem:[%s149 + $0x68] sm:$0xff] %v176
                %v178 = vld [vmem:[%s148 + $0x2a0] sm:$0xff]
                %179 = vst [vmem:[%s149 + $0x70] sm:$0xff] %v178
                %v180 = vld [vmem:[%s148 + $0x2a8] sm:$0xff]
                %181 = vst [vmem:[%s149 + $0x78] sm:$0xff] %v180
                %v182 = vld [vmem:[%s148 + $0x300] sm:$0xff]
                %183 = vst [vmem:[%s149 + $0x80] sm:$0xff] %v182
                %v184 = vld [vmem:[%s148 + $0x308] sm:$0xff]
                %185 = vst [vmem:[%s149 + $0x88] sm:$0xff] %v184
                %v186 = vld [vmem:[%s148 + $0x360] sm:$0xff]
                %187 = vst [vmem:[%s149 + $0x90] sm:$0xff] %v186
                %v188 = vld [vmem:[%s148 + $0x368] sm:$0xff]
                %189 = vst [vmem:[%s149 + $0x98] sm:$0xff] %v188
                %v190 = vld [vmem:[%s148 + $0x3c0] sm:$0xff]
                %191 = vst [vmem:[%s149 + $0xa0] sm:$0xff] %v190
                %v192 = vld [vmem:[%s148 + $0x3c8] sm:$0xff]
                %193 = vst [vmem:[%s149 + $0xa8] sm:$0xff] %v192
                %v194 = vld [vmem:[%s148 + $0x420] sm:$0xff]
                %195 = vst [vmem:[%s149 + $0xb0] sm:$0xff] %v194
                %v196 = vld [vmem:[%s148 + $0x428] sm:$0xff]
                %197 = vst [vmem:[%s149 + $0xb8] sm:$0xff] %v196
                %v198 = vld [vmem:[%s148 + $0x480] sm:$0xff]
                %199 = vst [vmem:[%s149 + $0xc0] sm:$0xff] %v198
                %v200 = vld [vmem:[%s148 + $0x488] sm:$0xff]
                %201 = vst [vmem:[%s149 + $0xc8] sm:$0xff] %v200
                %v202 = vld [vmem:[%s148 + $0x4e0] sm:$0xff]
                %203 = vst [vmem:[%s149 + $0xd0] sm:$0xff] %v202
                %v204 = vld [vmem:[%s148 + $0x4e8] sm:$0xff]
                %205 = vst [vmem:[%s149 + $0xd8] sm:$0xff] %v204
              $region41: #{run_train.7} parent=35 // loop_footer
                %s147 = sadd.s32 1, %s143
              $region42: #{run_train.7} parent=35 // loop_footer_branch
                %142 = sbr.rel target = $region38
              $region43: #{run_train.7} parent=35 // loop_exit
                _
            $region36: #{run_train.7} parent=31 // pred_fallthru
              _
            // Predicated region
            $region44: #{run_train.7} parent=31 // pred_check
              _
            $region45: #{run_train.7} parent=31 // pred_check_branch
              %207 = sbr.rel target = $region47
            $region46: #{run_train.7} parent=31 // pred_region
              _
            $region47: #{run_train.7} parent=31 // pred_fallthru
              _
          $region32: #{run_train.7} parent=27 // pred_fallthru
            _
          %208 = vnop
        $region28: #{run_train.7} parent=23 // pred_fallthru
          _
      $region24: #{run_train.7} parent=5 // pred_fallthru
        _
      %p209 = scmp.le.s32.totalorder 1, %s9
      %p210 = scmp.lt.s32.totalorder %s9, 7
      %p211 = pnand %p209, %p210
      %p212 = pneg %p211
      // Predicated region
      $region48: #{run_train.7} parent=5 // pred_check
        _
      $region49: #{run_train.7} parent=5 // pred_check_branch
        %214 = sbr.rel (%p211) target = $region51
      $region50: #{run_train.7} parent=5 // pred_region
        %s215 = ssub.s32 %s9, 1
        %s216 = sand.u32 %s64, 1
        %s217 = sand.u32 %s64, 1
        %s218 = smul.addr %s217, 224
        %s219 = scalar_lea.vmem [#allocation2], %s218
        // Predicated region
        $region52: #{run_train.7} parent=50 // pred_check
          %p220 = pneg %p77
        $region53: #{run_train.7} parent=50 // pred_check_branch
          %222 = sbr.rel (%p220) target = $region55
        $region54: #{run_train.7} parent=50 // pred_region
          _
        $region55: #{run_train.7} parent=50 // pred_fallthru
          _
        %p223 = pneg %p30
        %p224 = pneg %p27
        %p225 = pneg %p51
        %p226 = pneg %p48
        %s227 = sand.u32 %s64, 1
        %s228 = sand.u32 %s64, 1
        %s229 = smul.addr %s228, 224
        %s230 = scalar_lea.vmem [#allocation2], %s229
        %p231 = pneg %p77
        %p232 = pneg %p74
        %p233 = pneg %p103
        %p234 = pneg %p100
        %s235 = sand.u32 %s90, 1
        %s236 = sand.u32 %s90, 1
        %s237 = smul.addr %s236, 64
        %s238 = scalar_lea.vmem [#allocation3], %s237
        %s239 = smul.u32 4, %s14
        %s240 = smul.u32 4, %s14
        %v242 = vld [vmem:[%s0] sm:$0xf]
        %v243 = vld [vmem:[%s0 + $0x4] sm:$0xf]
        %v244 = vld [vmem:[%s219] sm:$0xff]
        %v245 = vld [vmem:[%s219 + $0x8] sm:$0xff]
        %v246 = vld [vmem:[%s219 + $0x10] sm:$0xff]
        %v247 = vld [vmem:[%s219 + $0x18] sm:$0xff]
        %v248 = vld [vmem:[%s219 + $0x20] sm:$0xff]
        %v249 = vld [vmem:[%s219 + $0x28] sm:$0xff]
        %v250 = vld [vmem:[%s219 + $0x30] sm:$0xff]
        %v251 = vld [vmem:[%s219 + $0x38] sm:$0xff]
        %v252 = vld [vmem:[%s219 + $0x40] sm:$0xff]
        %v253 = vld [vmem:[%s219 + $0x48] sm:$0xff]
        %v254 = vld [vmem:[%s219 + $0x50] sm:$0xff]
        %v255 = vld [vmem:[%s219 + $0x58] sm:$0xff]
        %v256 = vld [vmem:[%s219 + $0x60] sm:$0xff]
        %v257 = vld [vmem:[%s219 + $0x68] sm:$0xff]
        %v258 = vld [vmem:[%s219 + $0x70] sm:$0xff]
        %v259 = vld [vmem:[%s219 + $0x78] sm:$0xff]
        %v260 = vld [vmem:[%s219 + $0x80] sm:$0xff]
        %v261 = vld [vmem:[%s219 + $0x88] sm:$0xff]
        %v262 = vld [vmem:[%s219 + $0x90] sm:$0xff]
        %v263 = vld [vmem:[%s219 + $0x98] sm:$0xff]
        %v264 = vld [vmem:[%s219 + $0xa0] sm:$0xff]
        %v265 = vld [vmem:[%s219 + $0xa8] sm:$0xff]
        %v266 = vld [vmem:[%s219 + $0xb0] sm:$0xff]
        %v267 = vld [vmem:[%s219 + $0xb8] sm:$0xff]
        %v268 = vld [vmem:[%s219 + $0xc0] sm:$0xff]
        %v269 = vld [vmem:[%s219 + $0xc8] sm:$0xff]
        %v270 = vld [vmem:[%s219 + $0xd0] sm:$0x33]
        %v271 = vld [vmem:[%s219 + $0xd8] sm:$0x33]
        %v272 = vld [vmem:[%s1] sm:$0xff]
        %v273 = vld [vmem:[%s1 + $0x8] sm:$0xff]
        %275 = vset.pattern.permute.xlu0 0
        %276 = vperm.xlu0 %275, %v272
        %v277 = vpop.permute.xlu0 %276
        %280 = vset.pattern.permute.xlu0 0
        %281 = vperm.xlu0 %280, %v273
        %v282 = vpop.permute.xlu0 %281
        %v286 = vunpack.c.l.b16 %v242
        %v287 = vunpack.c.l.b16 %v243
        %v288 = vpack.c.b16 %v287, %v286
        %v317 = vunpack.c.l.b16 %v244
        %v318 = vunpack.c.h.b16 %v244
        %v319 = vunpack.c.l.b16 %v245
        %v320 = vunpack.c.h.b16 %v245
        %v321 = vunpack.c.l.b16 %v246
        %v322 = vunpack.c.h.b16 %v246
        %v323 = vunpack.c.l.b16 %v247
        %v324 = vunpack.c.h.b16 %v247
        %v325 = vunpack.c.l.b16 %v248
        %v326 = vunpack.c.h.b16 %v248
        %v327 = vunpack.c.l.b16 %v249
        %v328 = vunpack.c.h.b16 %v249
        %v329 = vunpack.c.l.b16 %v250
        %v330 = vunpack.c.h.b16 %v250
        %v331 = vunpack.c.l.b16 %v251
        %v332 = vunpack.c.h.b16 %v251
        %v333 = vunpack.c.l.b16 %v252
        %v334 = vunpack.c.h.b16 %v252
        %v335 = vunpack.c.l.b16 %v253
        %v336 = vunpack.c.h.b16 %v253
        %v337 = vunpack.c.l.b16 %v254
        %v338 = vunpack.c.h.b16 %v254
        %v339 = vunpack.c.l.b16 %v255
        %v340 = vunpack.c.h.b16 %v255
        %v341 = vunpack.c.l.b16 %v256
        %v342 = vunpack.c.h.b16 %v256
        %v343 = vunpack.c.l.b16 %v257
        %v344 = vunpack.c.h.b16 %v257
        %v345 = vunpack.c.l.b16 %v258
        %v346 = vunpack.c.h.b16 %v258
        %v347 = vunpack.c.l.b16 %v259
        %v348 = vunpack.c.h.b16 %v259
        %v349 = vunpack.c.l.b16 %v260
        %v350 = vunpack.c.h.b16 %v260
        %v351 = vunpack.c.l.b16 %v261
        %v352 = vunpack.c.h.b16 %v261
        %v353 = vunpack.c.l.b16 %v262
        %v354 = vunpack.c.h.b16 %v262
        %v355 = vunpack.c.l.b16 %v263
        %v356 = vunpack.c.h.b16 %v263
        %v357 = vunpack.c.l.b16 %v264
        %v358 = vunpack.c.h.b16 %v264
        %v359 = vunpack.c.l.b16 %v265
        %v360 = vunpack.c.h.b16 %v265
        %v361 = vunpack.c.l.b16 %v266
        %v362 = vunpack.c.h.b16 %v266
        %v363 = vunpack.c.l.b16 %v267
        %v364 = vunpack.c.h.b16 %v267
        %v365 = vunpack.c.l.b16 %v268
        %v366 = vunpack.c.h.b16 %v268
        %v367 = vunpack.c.l.b16 %v269
        %v368 = vunpack.c.h.b16 %v269
        %v369 = vunpack.c.l.b16 %v270
        %v370 = vunpack.c.h.b16 %v270
        %v371 = vunpack.c.l.b16 %v271
        %v372 = vunpack.c.h.b16 %v271
        %v373 = vpack.c.b16 %v321, %v317
        %v374 = vpack.c.b16 %v322, %v318
        %v375 = vpack.c.b16 %v323, %v319
        %v376 = vpack.c.b16 %v324, %v320
        %v377 = vpack.c.b16 %v329, %v325
        %v378 = vpack.c.b16 %v330, %v326
        %v379 = vpack.c.b16 %v331, %v327
        %v380 = vpack.c.b16 %v332, %v328
        %v381 = vpack.c.b16 %v337, %v333
        %v382 = vpack.c.b16 %v338, %v334
        %v383 = vpack.c.b16 %v339, %v335
        %v384 = vpack.c.b16 %v340, %v336
        %v385 = vpack.c.b16 %v345, %v341
        %v386 = vpack.c.b16 %v346, %v342
        %v387 = vpack.c.b16 %v347, %v343
        %v388 = vpack.c.b16 %v348, %v344
        %v389 = vpack.c.b16 %v353, %v349
        %v390 = vpack.c.b16 %v354, %v350
        %v391 = vpack.c.b16 %v355, %v351
        %v392 = vpack.c.b16 %v356, %v352
        %v393 = vpack.c.b16 %v361, %v357
        %v394 = vpack.c.b16 %v362, %v358
        %v395 = vpack.c.b16 %v363, %v359
        %v396 = vpack.c.b16 %v364, %v360
        %v397 = vpack.c.b16 %v369, %v365
        %v398 = vpack.c.b16 %v370, %v366
        %v399 = vpack.c.b16 %v371, %v367
        %v400 = vpack.c.b16 %v372, %v368
        %vm425 = vcmask 883712
        %v427 = vsel %vm425, %v288, 0
        %vm429 = vcmask 1045504
        %v431 = vsel %vm429, %v397, 0
        %v434 = vsel %vm429, %v398, 0
        %v437 = vsel %vm429, %v399, 0
        %v440 = vsel %vm429, %v400, 0
        %442 = vmatprep.subr.bf16.mxu0 0
        %443 = vmatpush1.bf16.msra.mxu0 0
        %444 = vmatprep.subr.bf16.mxu0 %v434
        %445 = vmatpush1.bf16.msra.mxu0 %v431
        %446 = vmatprep.subr.bf16.mxu0 %v394
        %447 = vmatpush1.bf16.msra.mxu0 %v393
        %448 = vmatprep.subr.bf16.mxu0 %v390
        %449 = vmatpush1.bf16.msra.mxu0 %v389
        %450 = vmatprep.subr.bf16.mxu0 %v386
        %451 = vmatpush1.bf16.msra.mxu0 %v385
        %452 = vmatprep.subr.bf16.mxu0 %v382
        %453 = vmatpush1.bf16.msra.mxu0 %v381
        %454 = vmatprep.subr.bf16.mxu0 %v378
        %455 = vmatpush1.bf16.msra.mxu0 %v377
        %456 = vmatprep.subr.bf16.mxu0 %v374
        %457 = vmatpush1.bf16.msra.mxu0 %v373
        %458 = vmatprep.subr.bf16.mxu0 0
        %459 = vmatpush2.bf16.msra.mxu0 0
        %460 = vmatprep.subr.bf16.mxu0 0
        %461 = vmatpush2.bf16.msra.mxu0 0
        %462 = vmatprep.subr.bf16.mxu0 0
        %463 = vmatpush2.bf16.msra.mxu0 0
        %464 = vmatprep.subr.bf16.mxu0 0
        %465 = vmatpush2.bf16.msra.mxu0 0
        %466 = vmatprep.subr.bf16.mxu0 0
        %467 = vmatpush2.bf16.msra.mxu0 0
        %468 = vmatprep.subr.bf16.mxu0 0
        %469 = vmatpush2.bf16.msra.mxu0 0
        %470 = vmatprep.subr.bf16.mxu0 0
        %471 = vmatpush2.bf16.msra.mxu0 0
        %472 = vmatprep.subr.bf16.mxu0 0
        %473 = vmatpush2.bf16.msra.mxu0 0
        %474 = vmatprep.mubr.bf16.mxu0 0
        %475 = vmatmul.mubr.bf16.gmra.mxu0 %v427
        %v476 = vpop.f32.mrf.mxu0
        %v477 = vadd.f32 %v277, %v476
        %v478 = vpop.f32.mrf.mxu0
        %v479 = vadd.f32 %v277, %v478
        %v480 = vpop.f32.mrf.mxu0
        %v481 = vadd.f32 %v282, %v480
        %v482 = vpop.f32.mrf.mxu0
        %v483 = vadd.f32 %v282, %v482
        %484 = vdwg.mxu0
        %485 = vmatprep.subr.bf16.mxu0 0
        %486 = vmatpush1.bf16.msra.mxu0 0
        %487 = vmatprep.subr.bf16.mxu0 %v440
        %488 = vmatpush1.bf16.msra.mxu0 %v437
        %489 = vmatprep.subr.bf16.mxu0 %v396
        %490 = vmatpush1.bf16.msra.mxu0 %v395
        %491 = vmatprep.subr.bf16.mxu0 %v392
        %492 = vmatpush1.bf16.msra.mxu0 %v391
        %493 = vmatprep.subr.bf16.mxu0 %v388
        %494 = vmatpush1.bf16.msra.mxu0 %v387
        %495 = vmatprep.subr.bf16.mxu0 %v384
        %496 = vmatpush1.bf16.msra.mxu0 %v383
        %497 = vmatprep.subr.bf16.mxu0 %v380
        %498 = vmatpush1.bf16.msra.mxu0 %v379
        %499 = vmatprep.subr.bf16.mxu0 %v376
        %500 = vmatpush1.bf16.msra.mxu0 %v375
        %501 = vmatprep.subr.bf16.mxu0 0
        %502 = vmatpush2.bf16.msra.mxu0 0
        %503 = vmatprep.subr.bf16.mxu0 0
        %504 = vmatpush2.bf16.msra.mxu0 0
        %505 = vmatprep.subr.bf16.mxu0 0
        %506 = vmatpush2.bf16.msra.mxu0 0
        %507 = vmatprep.subr.bf16.mxu0 0
        %508 = vmatpush2.bf16.msra.mxu0 0
        %509 = vmatprep.subr.bf16.mxu0 0
        %510 = vmatpush2.bf16.msra.mxu0 0
        %511 = vmatprep.subr.bf16.mxu0 0
        %512 = vmatpush2.bf16.msra.mxu0 0
        %513 = vmatprep.subr.bf16.mxu0 0
        %514 = vmatpush2.bf16.msra.mxu0 0
        %515 = vmatprep.subr.bf16.mxu0 0
        %516 = vmatpush2.bf16.msra.mxu0 0
        %517 = vmatprep.mubr.bf16.mxu0 0
        %518 = vmatmul.mubr.bf16.gmra.mxu0 %v427
        %v519 = vpop.f32.mrf.mxu0
        %v520 = vadd.f32 %v277, %v519
        %v521 = vpop.f32.mrf.mxu0
        %v522 = vadd.f32 %v277, %v521
        %v523 = vpop.f32.mrf.mxu0
        %v524 = vadd.f32 %v282, %v523
        %v525 = vpop.f32.mrf.mxu0
        %v526 = vadd.f32 %v282, %v525
        %527 = vdwg.mxu0
        %vm528 = vcmp.gt.f32.partialorder %v477, 0.0
        %vm529 = vcmp.gt.f32.partialorder %v479, 0.0
        %vm530 = vcmp.gt.f32.partialorder %v520, 0.0
        %vm531 = vcmp.gt.f32.partialorder %v522, 0.0
        %vm532 = vcmp.gt.f32.partialorder %v481, 0.0
        %vm533 = vcmp.gt.f32.partialorder %v483, 0.0
        %vm534 = vcmp.gt.f32.partialorder %v524, 0.0
        %vm535 = vcmp.gt.f32.partialorder %v526, 0.0
        %v536 = vmul.f32 %v477, 0.01
        %v537 = vmul.f32 %v479, 0.01
        %v538 = vmul.f32 %v520, 0.01
        %v539 = vmul.f32 %v522, 0.01
        %v540 = vmul.f32 %v481, 0.01
        %v541 = vmul.f32 %v483, 0.01
        %v542 = vmul.f32 %v524, 0.01
        %v543 = vmul.f32 %v526, 0.01
        %v544 = vsel %vm528, %v477, %v536
        %v545 = vsel %vm529, %v479, %v537
        %v546 = vsel %vm530, %v520, %v538
        %v547 = vsel %vm531, %v522, %v539
        %v548 = vsel %vm532, %v481, %v540
        %v549 = vsel %vm533, %v483, %v541
        %v550 = vsel %vm534, %v524, %v542
        %v551 = vsel %vm535, %v526, %v543
        %552 = vst [vmem:[%s238] sm:$0xff] %v544
        %553 = vst [vmem:[%s238 + $0x8] sm:$0xff] %v545
        %554 = vst [vmem:[%s238 + $0x10] sm:$0xff] %v546
        %555 = vst [vmem:[%s238 + $0x18] sm:$0xff] %v547
        %556 = vst [vmem:[%s238 + $0x20] sm:$0xff] %v548
        %557 = vst [vmem:[%s238 + $0x28] sm:$0xff] %v549
        %558 = vst [vmem:[%s238 + $0x30] sm:$0xff] %v550
        %559 = vst [vmem:[%s238 + $0x38] sm:$0xff] %v551
        %s560 = sand.u32 %s90, 1
        %s561 = sand.u32 %s90, 1
        %s562 = smul.addr %s561, 64
        %s563 = scalar_lea.vmem [#allocation3], %s562
        // Predicated region
        $region56: #{run_train.7} parent=50 // pred_check
          %p564 = pneg %p100
        $region57: #{run_train.7} parent=50 // pred_check_branch
          %566 = sbr.rel (%p564) target = $region59
        $region58: #{run_train.7} parent=50 // pred_region
          %s567 = smul.u32 4, %s14
          %s568 = smul.addr %s567, 8
          %s569 = scalar_lea.vmem %s3, %s568
          // Predicated region
          $region60: #{run_train.7} parent=58 // pred_check
            _
          $region61: #{run_train.7} parent=58 // pred_check_branch
            %571 = sbr.rel (0) target = $region63
          $region62: #{run_train.7} parent=58 // pred_region
            // Predicated region
            $region64: #{run_train.7} parent=62 // pred_check
              _
            $region65: #{run_train.7} parent=62 // pred_check_branch
              %573 = sbr.rel (0) target = $region67
            $region66: #{run_train.7} parent=62 // pred_region
              loop: start=0, step=1, limit=1
              $region68: #{run_train.7} parent=66 // loop_pre_header
                _
              $region69: #{run_train.7} parent=66 // loop_header
                %s575 = sphi 0, %s579
                %p576 = scmp.ge.s32.totalorder %s575, 1
                %s580 = sphi %s563, %s563
                %s581 = sphi %s569, %s569
              $region70: #{run_train.7} parent=66 // loop_header_branch
                %578 = sbr.rel (%p576) target = $region74
              $region71: #{run_train.7} parent=66 // loop_body
                %v582 = vld [vmem:[%s580] sm:$0xff]
                %583 = vst [vmem:[%s581] sm:$0xff] %v582
                %v584 = vld [vmem:[%s580 + $0x8] sm:$0xff]
                %585 = vst [vmem:[%s581 + $0x8] sm:$0xff] %v584
                %v586 = vld [vmem:[%s580 + $0x10] sm:$0xff]
                %587 = vst [vmem:[%s581 + $0x10] sm:$0xff] %v586
                %v588 = vld [vmem:[%s580 + $0x18] sm:$0xff]
                %589 = vst [vmem:[%s581 + $0x18] sm:$0xff] %v588
                %v590 = vld [vmem:[%s580 + $0x20] sm:$0xff]
                %591 = vst [vmem:[%s581 + $0xc0] sm:$0xff] %v590
                %v592 = vld [vmem:[%s580 + $0x28] sm:$0xff]
                %593 = vst [vmem:[%s581 + $0xc8] sm:$0xff] %v592
                %v594 = vld [vmem:[%s580 + $0x30] sm:$0xff]
                %595 = vst [vmem:[%s581 + $0xd0] sm:$0xff] %v594
                %v596 = vld [vmem:[%s580 + $0x38] sm:$0xff]
                %597 = vst [vmem:[%s581 + $0xd8] sm:$0xff] %v596
              $region72: #{run_train.7} parent=66 // loop_footer
                %s579 = sadd.s32 1, %s575
              $region73: #{run_train.7} parent=66 // loop_footer_branch
                %574 = sbr.rel target = $region69
              $region74: #{run_train.7} parent=66 // loop_exit
                _
            $region67: #{run_train.7} parent=62 // pred_fallthru
              _
            // Predicated region
            $region75: #{run_train.7} parent=62 // pred_check
              _
            $region76: #{run_train.7} parent=62 // pred_check_branch
              %599 = sbr.rel target = $region78
            $region77: #{run_train.7} parent=62 // pred_region
              _
            $region78: #{run_train.7} parent=62 // pred_fallthru
              _
          $region63: #{run_train.7} parent=58 // pred_fallthru
            _
          %600 = vnop
        $region59: #{run_train.7} parent=50 // pred_fallthru
          _
      $region51: #{run_train.7} parent=5 // pred_fallthru
        _
      %p601 = scmp.le.s32.totalorder 2, %s9
      // Predicated region
      $region79: #{run_train.7} parent=5 // pred_check
        %p602 = pneg %p601
      $region80: #{run_train.7} parent=5 // pred_check_branch
        %604 = sbr.rel (%p602) target = $region82
      $region81: #{run_train.7} parent=5 // pred_region
        %s605 = ssub.s32 %s9, 2
        // Predicated region
        $region83: #{run_train.7} parent=81 // pred_check
          %p606 = pneg %p106
        $region84: #{run_train.7} parent=81 // pred_check_branch
          %608 = sbr.rel (%p606) target = $region86
        $region85: #{run_train.7} parent=81 // pred_region
          %s609 = sand.u32 %s91, 1
          %s610 = sand.u32 %s91, 1
          %s611 = smul.addr %s610, 64
          %s612 = scalar_lea.vmem [#allocation3], %s611
        $region86: #{run_train.7} parent=81 // pred_fallthru
          _
      $region82: #{run_train.7} parent=5 // pred_fallthru
        _
    $region6: #{run_train.7} parent=1 // loop_footer
      %s13 = sadd.s32 1, %s9
    $region7: #{run_train.7} parent=1 // loop_footer_branch
      %8 = sbr.rel target = $region3
    $region8: #{run_train.7} parent=1 // loop_exit
      _

// kernel: run_train.8
$region0: #{run_train.8}
  #allocation0 [shape = 'u32[]', space=smem, size = 0x4, offset = 0x4, fixed_abs, tag = 'smem constant byte address 0x4 - core index']
  #allocation1 [shape = 'u32[144,128]{1,0:T(1,128)}', space=vmem, size = 0x12000, scoped, tag = 'internal scratch']
  %s0 = inlined_call_operand.vmem [shape: bf16[16,432], index: 0, kind: input, shape index: {}]
  %s1 = inlined_call_operand.vmem [shape: f32[16,1], index: 1, kind: input, shape index: {}]
  %s2 = inlined_call_operand.vmem [shape: f32[8,16], index: 2, kind: input, shape index: {}]
  %s3 = inlined_call_operand.vmem [shape: f32[8,1], index: 3, kind: input, shape index: {}]
  %s4 = inlined_call_operand.vmem [shape: bf16[432,384], index: 4, kind: input, shape index: {}]
  %s5 = inlined_call_operand.vmem [shape: f32[8,384], index: 5, kind: output, shape index: {}]
  %s6 = sld [smem:[#allocation0]]
  $region94: #{run_train.8} parent=0
    _
  %s8 = ssub.s32 1, %s6
  %s9 = scalar_select 0, %s8, %s6
  $region1: #{run_train.8} parent=0
    #allocation2 [shape = 'u8[221184]{0}', space=vmem, size = 0x36000, scoped, tag = 'input window, operand 4']
    loop: start=0, step=1, limit=5
    $region2: #{run_train.8} parent=1 // loop_pre_header
      _
    $region3: #{run_train.8} parent=1 // loop_header
      %s11 = sphi 0, %s15
      %p12 = scmp.ge.s32.totalorder %s11, 5
      %s19 = sphi 0, %s19
      %s21 = sphi 0, %s19
      %s22 = sphi 0, %s21
      %s36 = sphi 0, %s22
      %s40 = sphi 0, %s40
      %s42 = sphi 0, %s40
      %s43 = sphi 0, %s42
      %s57 = sphi 0, %s43
      %s61 = sphi 0, %s61
      %s63 = sphi 0, %s61
      %s64 = sphi 0, %s63
      %s78 = sphi 0, %s64
      %s82 = sphi 0, %s82
      %s84 = sphi 0, %s82
      %s85 = sphi 0, %s84
      %s99 = sphi 0, %s85
      %s105 = sphi 0, %s107
      %s108 = sphi 0, %s105
      %s109 = sphi 0, %s108
      %s125 = sphi 0, %s109
      %s131 = sphi 0, %s133
      %s134 = sphi 0, %s131
      %s135 = sphi 0, %s134
      %s151 = sphi 0, %s135
    $region4: #{run_train.8} parent=1 // loop_header_branch
      %14 = sbr.rel (%p12) target = $region8
    $region5: #{run_train.8} parent=1 // loop_body
      %s16 = ssub.s32 %s11, 1
      %s17 = ssub.s32 %s11, 2
      %s18 = sadd.s32 %s11, 1
      %s20 = sadd.s32 %s19, 1
      %p23 = scmp.eq.s32.totalorder %s11, 2
      %p24 = scmp.ne.s32.totalorder %s19, %s21
      %p25 = scmp.eq.s32.totalorder %s11, 0
      %p26 = por %p24, %p25
      %p27 = scmp.ne.s32.totalorder %s19, %s21
      %p28 = scmp.eq.s32.totalorder %s16, 2
      %p29 = por %p27, %p28
      %p30 = scmp.ne.s32.totalorder %s21, %s22
      %p31 = scmp.eq.s32.totalorder %s16, 0
      %p32 = por %p30, %p31
      %p33 = scmp.ne.s32.totalorder %s21, %s22
      %p34 = scmp.eq.s32.totalorder %s17, 2
      %p35 = por %p33, %p34
      %p37 = scmp.ne.s32.totalorder %s22, %s36
      %p38 = scmp.eq.s32.totalorder %s17, 0
      %p39 = por %p37, %p38
      %s41 = sadd.s32 %s40, 1
      %p44 = scmp.eq.s32.totalorder %s11, 2
      %p45 = scmp.ne.s32.totalorder %s40, %s42
      %p46 = scmp.eq.s32.totalorder %s11, 0
      %p47 = por %p45, %p46
      %p48 = scmp.ne.s32.totalorder %s40, %s42
      %p49 = scmp.eq.s32.totalorder %s16, 2
      %p50 = por %p48, %p49
      %p51 = scmp.ne.s32.totalorder %s42, %s43
      %p52 = scmp.eq.s32.totalorder %s16, 0
      %p53 = por %p51, %p52
      %p54 = scmp.ne.s32.totalorder %s42, %s43
      %p55 = scmp.eq.s32.totalorder %s17, 2
      %p56 = por %p54, %p55
      %p58 = scmp.ne.s32.totalorder %s43, %s57
      %p59 = scmp.eq.s32.totalorder %s17, 0
      %p60 = por %p58, %p59
      %s62 = sadd.s32 %s61, 1
      %p65 = scmp.eq.s32.totalorder %s11, 2
      %p66 = scmp.ne.s32.totalorder %s61, %s63
      %p67 = scmp.eq.s32.totalorder %s11, 0
      %p68 = por %p66, %p67
      %p69 = scmp.ne.s32.totalorder %s61, %s63
      %p70 = scmp.eq.s32.totalorder %s16, 2
      %p71 = por %p69, %p70
      %p72 = scmp.ne.s32.totalorder %s63, %s64
      %p73 = scmp.eq.s32.totalorder %s16, 0
      %p74 = por %p72, %p73
      %p75 = scmp.ne.s32.totalorder %s63, %s64
      %p76 = scmp.eq.s32.totalorder %s17, 2
      %p77 = por %p75, %p76
      %p79 = scmp.ne.s32.totalorder %s64, %s78
      %p80 = scmp.eq.s32.totalorder %s17, 0
      %p81 = por %p79, %p80
      %s83 = sadd.s32 %s82, 1
      %p86 = scmp.eq.s32.totalorder %s11, 2
      %p87 = scmp.ne.s32.totalorder %s82, %s84
      %p88 = scmp.eq.s32.totalorder %s11, 0
      %p89 = por %p87, %p88
      %p90 = scmp.ne.s32.totalorder %s82, %s84
      %p91 = scmp.eq.s32.totalorder %s16, 2
      %p92 = por %p90, %p91
      %p93 = scmp.ne.s32.totalorder %s84, %s85
      %p94 = scmp.eq.s32.totalorder %s16, 0
      %p95 = por %p93, %p94
      %p96 = scmp.ne.s32.totalorder %s84, %s85
      %p97 = scmp.eq.s32.totalorder %s17, 2
      %p98 = por %p96, %p97
      %p100 = scmp.ne.s32.totalorder %s85, %s99
      %p101 = scmp.eq.s32.totalorder %s17, 0
      %p102 = por %p100, %p101
      %s103 = ssub.s32 %s11, %s18
      %p104 = scmp.eq.s32.totalorder %s103, 0
      %s106 = sadd.s32 %s105, 1
      %s107 = scalar_select %p104, %s105, %s106
      %p110 = pneg %p104
      %p111 = scmp.eq.s32.totalorder %s11, 2
      %p112 = por %p110, %p111
      %p113 = scmp.ne.s32.totalorder %s105, %s108
      %p114 = scmp.eq.s32.totalorder %s11, 0
      %p115 = por %p113, %p114
      %p116 = scmp.ne.s32.totalorder %s105, %s108
      %p117 = scmp.eq.s32.totalorder %s16, 2
      %p118 = por %p116, %p117
      %p119 = scmp.ne.s32.totalorder %s108, %s109
      %p120 = scmp.eq.s32.totalorder %s16, 0
      %p121 = por %p119, %p120
      %p122 = scmp.ne.s32.totalorder %s108, %s109
      %p123 = scmp.eq.s32.totalorder %s17, 2
      %p124 = por %p122, %p123
      %p126 = scmp.ne.s32.totalorder %s109, %s125
      %p127 = scmp.eq.s32.totalorder %s17, 0
      %p128 = por %p126, %p127
      %s129 = ssub.s32 %s11, %s18
      %p130 = scmp.eq.s32.totalorder %s129, 0
      %s132 = sadd.s32 %s131, 1
      %s133 = scalar_select %p130, %s131, %s132
      %p136 = pneg %p130
      %p137 = scmp.eq.s32.totalorder %s11, 2
      %p138 = por %p136, %p137
      %p139 = scmp.ne.s32.totalorder %s131, %s134
      %p140 = scmp.eq.s32.totalorder %s11, 0
      %p141 = por %p139, %p140
      %p142 = scmp.ne.s32.totalorder %s131, %s134
      %p143 = scmp.eq.s32.totalorder %s16, 2
      %p144 = por %p142, %p143
      %p145 = scmp.ne.s32.totalorder %s134, %s135
      %p146 = scmp.eq.s32.totalorder %s16, 0
      %p147 = por %p145, %p146
      %p148 = scmp.ne.s32.totalorder %s134, %s135
      %p149 = scmp.eq.s32.totalorder %s17, 2
      %p150 = por %p148, %p149
      %p152 = scmp.ne.s32.totalorder %s135, %s151
      %p153 = scmp.eq.s32.totalorder %s17, 0
      %p154 = por %p152, %p153
      %p155 = scmp.le.s32.totalorder 1, %s11
      %p156 = scmp.lt.s32.totalorder %s11, 4
      %p157 = pnand %p155, %p156
      %p158 = pneg %p157
      // Predicated region
      $region9: #{run_train.8} parent=5 // pred_check
        _
      $region10: #{run_train.8} parent=5 // pred_check_branch
        %160 = sbr.rel (%p157) target = $region12
      $region11: #{run_train.8} parent=5 // pred_region
        %s161 = ssub.s32 %s11, 1
        // Predicated region
        $region13: #{run_train.8} parent=11 // pred_check
          %p162 = pneg %p32
        $region14: #{run_train.8} parent=11 // pred_check_branch
          %164 = sbr.rel (%p162) target = $region16
        $region15: #{run_train.8} parent=11 // pred_region
          _
        $region16: #{run_train.8} parent=11 // pred_fallthru
          _
        // Predicated region
        $region17: #{run_train.8} parent=11 // pred_check
          %p165 = pneg %p53
        $region18: #{run_train.8} parent=11 // pred_check_branch
          %167 = sbr.rel (%p165) target = $region20
        $region19: #{run_train.8} parent=11 // pred_region
          _
        $region20: #{run_train.8} parent=11 // pred_fallthru
          _
        // Predicated region
        $region21: #{run_train.8} parent=11 // pred_check
          %p168 = pneg %p74
        $region22: #{run_train.8} parent=11 // pred_check_branch
          %170 = sbr.rel (%p168) target = $region24
        $region23: #{run_train.8} parent=11 // pred_region
          _
        $region24: #{run_train.8} parent=11 // pred_fallthru
          _
        // Predicated region
        $region25: #{run_train.8} parent=11 // pred_check
          %p171 = pneg %p95
        $region26: #{run_train.8} parent=11 // pred_check_branch
          %173 = sbr.rel (%p171) target = $region28
        $region27: #{run_train.8} parent=11 // pred_region
          _
        $region28: #{run_train.8} parent=11 // pred_fallthru
          _
      $region12: #{run_train.8} parent=5 // pred_fallthru
        _
      %p174 = scmp.lt.s32.totalorder %s11, 3
      // Predicated region
      $region29: #{run_train.8} parent=5 // pred_check
        %p175 = pneg %p174
      $region30: #{run_train.8} parent=5 // pred_check_branch
        %177 = sbr.rel (%p175) target = $region32
      $region31: #{run_train.8} parent=5 // pred_region
        // Predicated region
        $region33: #{run_train.8} parent=31 // pred_check
          %p178 = pneg %p115
        $region34: #{run_train.8} parent=31 // pred_check_branch
          %180 = sbr.rel (%p178) target = $region36
        $region35: #{run_train.8} parent=31 // pred_region
          %s181 = sand.u32 %s105, 1
          %s182 = sand.u32 %s105, 1
          %s183 = smul.addr %s182, 216
          %s184 = scalar_lea.vmem [#allocation2], %s183
          %s185 = smul.addr %s11, 4
          %s186 = scalar_lea.vmem %s4, %s185
          // Predicated region
          $region37: #{run_train.8} parent=35 // pred_check
            _
          $region38: #{run_train.8} parent=35 // pred_check_branch
            %188 = sbr.rel (0) target = $region40
          $region39: #{run_train.8} parent=35 // pred_region
            // Predicated region
            $region41: #{run_train.8} parent=39 // pred_check
              _
            $region42: #{run_train.8} parent=39 // pred_check_branch
              %190 = sbr.rel target = $region44
            $region43: #{run_train.8} parent=39 // pred_region
              // Predicated region
              $region56: #{run_train.8} parent=43 // pred_check
                _
              $region57: #{run_train.8} parent=43 // pred_check_branch
                %312 = sbr.rel (0) target = $region59
              $region58: #{run_train.8} parent=43 // pred_region
                loop: start=0, step=1, limit=1
                $region60: #{run_train.8} parent=58 // loop_pre_header
                  _
                $region61: #{run_train.8} parent=58 // loop_header
                  %s314 = sphi 0, %s318
                  %p315 = scmp.ge.s32.totalorder %s314, 1
                  %s319 = sphi %s186, %s186
                  %s320 = sphi %s184, %s184
                $region62: #{run_train.8} parent=58 // loop_header_branch
                  %317 = sbr.rel (%p315) target = $region66
                $region63: #{run_train.8} parent=58 // loop_body
                  _
                $region64: #{run_train.8} parent=58 // loop_footer
                  %s318 = sadd.s32 1, %s314
                $region65: #{run_train.8} parent=58 // loop_footer_branch
                  %313 = sbr.rel target = $region61
                $region66: #{run_train.8} parent=58 // loop_exit
                  _
                %s322 = ssub.s32 16, 1
                loop: start=0, step=1, limit=1
                $region67: #{run_train.8} parent=58 // loop_pre_header
                  _
                $region68: #{run_train.8} parent=58 // loop_header
                  %s324 = sphi 0, %s328
                  %p325 = scmp.ge.s32.totalorder %s324, 1
                  %s329 = sphi %s186, %s186
                  %s330 = sphi %s184, %s184
                $region69: #{run_train.8} parent=58 // loop_header_branch
                  %327 = sbr.rel (%p325) target = $region73
                $region70: #{run_train.8} parent=58 // loop_body
                  %v331 = vld [vmem:[%s329] sm:%s322]
                  %332 = vst [vmem:[%s330] sm:%s322] %v331
                  %v333 = vld [vmem:[%s329 + $0xc] sm:%s322]
                  %334 = vst [vmem:[%s330 + $0x4] sm:%s322] %v333
                  %v335 = vld [vmem:[%s329 + $0x18] sm:%s322]
                  %336 = vst [vmem:[%s330 + $0x8] sm:%s322] %v335
                  %v337 = vld [vmem:[%s329 + $0x24] sm:%s322]
                  %338 = vst [vmem:[%s330 + $0xc] sm:%s322] %v337
                  %v339 = vld [vmem:[%s329 + $0x30] sm:%s322]
                  %340 = vst [vmem:[%s330 + $0x10] sm:%s322] %v339
                  %v341 = vld [vmem:[%s329 + $0x3c] sm:%s322]
                  %342 = vst [vmem:[%s330 + $0x14] sm:%s322] %v341
                  %v343 = vld [vmem:[%s329 + $0x48] sm:%s322]
                  %344 = vst [vmem:[%s330 + $0x18] sm:%s322] %v343
                  %v345 = vld [vmem:[%s329 + $0x54] sm:%s322]
                  %346 = vst [vmem:[%s330 + $0x1c] sm:%s322] %v345
                  %v347 = vld [vmem:[%s329 + $0x60] sm:%s322]
                  %348 = vst [vmem:[%s330 + $0x20] sm:%s322] %v347
                  %v349 = vld [vmem:[%s329 + $0x6c] sm:%s322]
                  %350 = vst [vmem:[%s330 + $0x24] sm:%s322] %v349
                  %v351 = vld [vmem:[%s329 + $0x78] sm:%s322]
                  %352 = vst [vmem:[%s330 + $0x28] sm:%s322] %v351
                  %v353 = vld [vmem:[%s329 + $0x84] sm:%s322]
                  %354 = vst [vmem:[%s330 + $0x2c] sm:%s322] %v353
                  %v355 = vld [vmem:[%s329 + $0x90] sm:%s322]
                  %356 = vst [vmem:[%s330 + $0x30] sm:%s322] %v355
                  %v357 = vld [vmem:[%s329 + $0x9c] sm:%s322]
                  %358 = vst [vmem:[%s330 + $0x34] sm:%s322] %v357
                  %v359 = vld [vmem:[%s329 + $0xa8] sm:%s322]
                  %360 = vst [vmem:[%s330 + $0x38] sm:%s322] %v359
                  %v361 = vld [vmem:[%s329 + $0xb4] sm:%s322]
                  %362 = vst [vmem:[%s330 + $0x3c] sm:%s322] %v361
                  %v363 = vld [vmem:[%s329 + $0xc0] sm:%s322]
                  %364 = vst [vmem:[%s330 + $0x40] sm:%s322] %v363
                  %v365 = vld [vmem:[%s329 + $0xcc] sm:%s322]
                  %366 = vst [vmem:[%s330 + $0x44] sm:%s322] %v365
                  %v367 = vld [vmem:[%s329 + $0xd8] sm:%s322]
                  %368 = vst [vmem:[%s330 + $0x48] sm:%s322] %v367
                  %v369 = vld [vmem:[%s329 + $0xe4] sm:%s322]
                  %370 = vst [vmem:[%s330 + $0x4c] sm:%s322] %v369
                  %v371 = vld [vmem:[%s329 + $0xf0] sm:%s322]
                  %372 = vst [vmem:[%s330 + $0x50] sm:%s322] %v371
                  %v373 = vld [vmem:[%s329 + $0xfc] sm:%s322]
                  %374 = vst [vmem:[%s330 + $0x54] sm:%s322] %v373
                  %v375 = vld [vmem:[%s329 + $0x108] sm:%s322]
                  %376 = vst [vmem:[%s330 + $0x58] sm:%s322] %v375
                  %v377 = vld [vmem:[%s329 + $0x114] sm:%s322]
                  %378 = vst [vmem:[%s330 + $0x5c] sm:%s322] %v377
                  %v379 = vld [vmem:[%s329 + $0x120] sm:%s322]
                  %380 = vst [vmem:[%s330 + $0x60] sm:%s322] %v379
                  %v381 = vld [vmem:[%s329 + $0x12c] sm:%s322]
                  %382 = vst [vmem:[%s330 + $0x64] sm:%s322] %v381
                  %v383 = vld [vmem:[%s329 + $0x138] sm:%s322]
                  %384 = vst [vmem:[%s330 + $0x68] sm:%s322] %v383
                  %v385 = vld [vmem:[%s329 + $0x144] sm:%s322]
                  %386 = vst [vmem:[%s330 + $0x6c] sm:%s322] %v385
                  %v387 = vld [vmem:[%s329 + $0x150] sm:%s322]
                  %388 = vst [vmem:[%s330 + $0x70] sm:%s322] %v387
                  %v389 = vld [vmem:[%s329 + $0x15c] sm:%s322]
                  %390 = vst [vmem:[%s330 + $0x74] sm:%s322] %v389
                  %v391 = vld [vmem:[%s329 + $0x168] sm:%s322]
                  %392 = vst [vmem:[%s330 + $0x78] sm:%s322] %v391
                  %v393 = vld [vmem:[%s329 + $0x174] sm:%s322]
                  %394 = vst [vmem:[%s330 + $0x7c] sm:%s322] %v393
                  %v395 = vld [vmem:[%s329 + $0x180] sm:%s322]
                  %396 = vst [vmem:[%s330 + $0x80] sm:%s322] %v395
                  %v397 = vld [vmem:[%s329 + $0x18c] sm:%s322]
                  %398 = vst [vmem:[%s330 + $0x84] sm:%s322] %v397
                  %v399 = vld [vmem:[%s329 + $0x198] sm:%s322]
                  %400 = vst [vmem:[%s330 + $0x88] sm:%s322] %v399
                  %v401 = vld [vmem:[%s329 + $0x1a4] sm:%s322]
                  %402 = vst [vmem:[%s330 + $0x8c] sm:%s322] %v401
                  %v403 = vld [vmem:[%s329 + $0x1b0] sm:%s322]
                  %404 = vst [vmem:[%s330 + $0x90] sm:%s322] %v403
                  %v405 = vld [vmem:[%s329 + $0x1bc] sm:%s322]
                  %406 = vst [vmem:[%s330 + $0x94] sm:%s322] %v405
                  %v407 = vld [vmem:[%s329 + $0x1c8] sm:%s322]
                  %408 = vst [vmem:[%s330 + $0x98] sm:%s322] %v407
                  %v409 = vld [vmem:[%s329 + $0x1d4] sm:%s322]
                  %410 = vst [vmem:[%s330 + $0x9c] sm:%s322] %v409
                  %v411 = vld [vmem:[%s329 + $0x1e0] sm:%s322]
                  %412 = vst [vmem:[%s330 + $0xa0] sm:%s322] %v411
                  %v413 = vld [vmem:[%s329 + $0x1ec] sm:%s322]
                  %414 = vst [vmem:[%s330 + $0xa4] sm:%s322] %v413
                  %v415 = vld [vmem:[%s329 + $0x1f8] sm:%s322]
                  %416 = vst [vmem:[%s330 + $0xa8] sm:%s322] %v415
                  %v417 = vld [vmem:[%s329 + $0x204] sm:%s322]
                  %418 = vst [vmem:[%s330 + $0xac] sm:%s322] %v417
                  %v419 = vld [vmem:[%s329 + $0x210] sm:%s322]
                  %420 = vst [vmem:[%s330 + $0xb0] sm:%s322] %v419
                  %v421 = vld [vmem:[%s329 + $0x21c] sm:%s322]
                  %422 = vst [vmem:[%s330 + $0xb4] sm:%s322] %v421
                  %v423 = vld [vmem:[%s329 + $0x228] sm:%s322]
                  %424 = vst [vmem:[%s330 + $0xb8] sm:%s322] %v423
                  %v425 = vld [vmem:[%s329 + $0x234] sm:%s322]
                  %426 = vst [vmem:[%s330 + $0xbc] sm:%s322] %v425
                  %v427 = vld [vmem:[%s329 + $0x240] sm:%s322]
                  %428 = vst [vmem:[%s330 + $0xc0] sm:%s322] %v427
                  %v429 = vld [vmem:[%s329 + $0x24c] sm:%s322]
                  %430 = vst [vmem:[%s330 + $0xc4] sm:%s322] %v429
                  %v431 = vld [vmem:[%s329 + $0x258] sm:%s322]
                  %432 = vst [vmem:[%s330 + $0xc8] sm:%s322] %v431
                  %v433 = vld [vmem:[%s329 + $0x264] sm:%s322]
                  %434 = vst [vmem:[%s330 + $0xcc] sm:%s322] %v433
                  %v435 = vld [vmem:[%s329 + $0x270] sm:%s322]
                  %436 = vst [vmem:[%s330 + $0xd0] sm:%s322] %v435
                  %v437 = vld [vmem:[%s329 + $0x27c] sm:%s322]
                  %438 = vst [vmem:[%s330 + $0xd4] sm:%s322] %v437
                $region71: #{run_train.8} parent=58 // loop_footer
                  %s328 = sadd.s32 1, %s324
                $region72: #{run_train.8} parent=58 // loop_footer_branch
                  %323 = sbr.rel target = $region68
                $region73: #{run_train.8} parent=58 // loop_exit
                  _
              $region59: #{run_train.8} parent=43 // pred_fallthru
                _
            $region44: #{run_train.8} parent=39 // pred_fallthru
              _
            // Predicated region
            $region45: #{run_train.8} parent=39 // pred_check
              _
            $region46: #{run_train.8} parent=39 // pred_check_branch
              %192 = sbr.rel (0) target = $region48
            $region47: #{run_train.8} parent=39 // pred_region
              %s194 = ssub.s32 16, 1
              loop: start=0, step=1, limit=1
              $region49: #{run_train.8} parent=47 // loop_pre_header
                _
              $region50: #{run_train.8} parent=47 // loop_header
                %s196 = sphi 0, %s200
                %p197 = scmp.ge.s32.totalorder %s196, 1
                %s201 = sphi %s186, %s186
                %s202 = sphi %s184, %s184
              $region51: #{run_train.8} parent=47 // loop_header_branch
                %199 = sbr.rel (%p197) target = $region55
              $region52: #{run_train.8} parent=47 // loop_body
                %v203 = vld [vmem:[%s201] sm:%s194]
                %204 = vst [vmem:[%s202] sm:%s194] %v203
                %v205 = vld [vmem:[%s201 + $0xc] sm:%s194]
                %206 = vst [vmem:[%s202 + $0x4] sm:%s194] %v205
                %v207 = vld [vmem:[%s201 + $0x18] sm:%s194]
                %208 = vst [vmem:[%s202 + $0x8] sm:%s194] %v207
                %v209 = vld [vmem:[%s201 + $0x24] sm:%s194]
                %210 = vst [vmem:[%s202 + $0xc] sm:%s194] %v209
                %v211 = vld [vmem:[%s201 + $0x30] sm:%s194]
                %212 = vst [vmem:[%s202 + $0x10] sm:%s194] %v211
                %v213 = vld [vmem:[%s201 + $0x3c] sm:%s194]
                %214 = vst [vmem:[%s202 + $0x14] sm:%s194] %v213
                %v215 = vld [vmem:[%s201 + $0x48] sm:%s194]
                %216 = vst [vmem:[%s202 + $0x18] sm:%s194] %v215
                %v217 = vld [vmem:[%s201 + $0x54] sm:%s194]
                %218 = vst [vmem:[%s202 + $0x1c] sm:%s194] %v217
                %v219 = vld [vmem:[%s201 + $0x60] sm:%s194]
                %220 = vst [vmem:[%s202 + $0x20] sm:%s194] %v219
                %v221 = vld [vmem:[%s201 + $0x6c] sm:%s194]
                %222 = vst [vmem:[%s202 + $0x24] sm:%s194] %v221
                %v223 = vld [vmem:[%s201 + $0x78] sm:%s194]
                %224 = vst [vmem:[%s202 + $0x28] sm:%s194] %v223
                %v225 = vld [vmem:[%s201 + $0x84] sm:%s194]
                %226 = vst [vmem:[%s202 + $0x2c] sm:%s194] %v225
                %v227 = vld [vmem:[%s201 + $0x90] sm:%s194]
                %228 = vst [vmem:[%s202 + $0x30] sm:%s194] %v227
                %v229 = vld [vmem:[%s201 + $0x9c] sm:%s194]
                %230 = vst [vmem:[%s202 + $0x34] sm:%s194] %v229
                %v231 = vld [vmem:[%s201 + $0xa8] sm:%s194]
                %232 = vst [vmem:[%s202 + $0x38] sm:%s194] %v231
                %v233 = vld [vmem:[%s201 + $0xb4] sm:%s194]
                %234 = vst [vmem:[%s202 + $0x3c] sm:%s194] %v233
                %v235 = vld [vmem:[%s201 + $0xc0] sm:%s194]
                %236 = vst [vmem:[%s202 + $0x40] sm:%s194] %v235
                %v237 = vld [vmem:[%s201 + $0xcc] sm:%s194]
                %238 = vst [vmem:[%s202 + $0x44] sm:%s194] %v237
                %v239 = vld [vmem:[%s201 + $0xd8] sm:%s194]
                %240 = vst [vmem:[%s202 + $0x48] sm:%s194] %v239
                %v241 = vld [vmem:[%s201 + $0xe4] sm:%s194]
                %242 = vst [vmem:[%s202 + $0x4c] sm:%s194] %v241
                %v243 = vld [vmem:[%s201 + $0xf0] sm:%s194]
                %244 = vst [vmem:[%s202 + $0x50] sm:%s194] %v243
                %v245 = vld [vmem:[%s201 + $0xfc] sm:%s194]
                %246 = vst [vmem:[%s202 + $0x54] sm:%s194] %v245
                %v247 = vld [vmem:[%s201 + $0x108] sm:%s194]
                %248 = vst [vmem:[%s202 + $0x58] sm:%s194] %v247
                %v249 = vld [vmem:[%s201 + $0x114] sm:%s194]
                %250 = vst [vmem:[%s202 + $0x5c] sm:%s194] %v249
                %v251 = vld [vmem:[%s201 + $0x120] sm:%s194]
                %252 = vst [vmem:[%s202 + $0x60] sm:%s194] %v251
                %v253 = vld [vmem:[%s201 + $0x12c] sm:%s194]
                %254 = vst [vmem:[%s202 + $0x64] sm:%s194] %v253
                %v255 = vld [vmem:[%s201 + $0x138] sm:%s194]
                %256 = vst [vmem:[%s202 + $0x68] sm:%s194] %v255
                %v257 = vld [vmem:[%s201 + $0x144] sm:%s194]
                %258 = vst [vmem:[%s202 + $0x6c] sm:%s194] %v257
                %v259 = vld [vmem:[%s201 + $0x150] sm:%s194]
                %260 = vst [vmem:[%s202 + $0x70] sm:%s194] %v259
                %v261 = vld [vmem:[%s201 + $0x15c] sm:%s194]
                %262 = vst [vmem:[%s202 + $0x74] sm:%s194] %v261
                %v263 = vld [vmem:[%s201 + $0x168] sm:%s194]
                %264 = vst [vmem:[%s202 + $0x78] sm:%s194] %v263
                %v265 = vld [vmem:[%s201 + $0x174] sm:%s194]
                %266 = vst [vmem:[%s202 + $0x7c] sm:%s194] %v265
                %v267 = vld [vmem:[%s201 + $0x180] sm:%s194]
                %268 = vst [vmem:[%s202 + $0x80] sm:%s194] %v267
                %v269 = vld [vmem:[%s201 + $0x18c] sm:%s194]
                %270 = vst [vmem:[%s202 + $0x84] sm:%s194] %v269
                %v271 = vld [vmem:[%s201 + $0x198] sm:%s194]
                %272 = vst [vmem:[%s202 + $0x88] sm:%s194] %v271
                %v273 = vld [vmem:[%s201 + $0x1a4] sm:%s194]
                %274 = vst [vmem:[%s202 + $0x8c] sm:%s194] %v273
                %v275 = vld [vmem:[%s201 + $0x1b0] sm:%s194]
                %276 = vst [vmem:[%s202 + $0x90] sm:%s194] %v275
                %v277 = vld [vmem:[%s201 + $0x1bc] sm:%s194]
                %278 = vst [vmem:[%s202 + $0x94] sm:%s194] %v277
                %v279 = vld [vmem:[%s201 + $0x1c8] sm:%s194]
                %280 = vst [vmem:[%s202 + $0x98] sm:%s194] %v279
                %v281 = vld [vmem:[%s201 + $0x1d4] sm:%s194]
                %282 = vst [vmem:[%s202 + $0x9c] sm:%s194] %v281
                %v283 = vld [vmem:[%s201 + $0x1e0] sm:%s194]
                %284 = vst [vmem:[%s202 + $0xa0] sm:%s194] %v283
                %v285 = vld [vmem:[%s201 + $0x1ec] sm:%s194]
                %286 = vst [vmem:[%s202 + $0xa4] sm:%s194] %v285
                %v287 = vld [vmem:[%s201 + $0x1f8] sm:%s194]
                %288 = vst [vmem:[%s202 + $0xa8] sm:%s194] %v287
                %v289 = vld [vmem:[%s201 + $0x204] sm:%s194]
                %290 = vst [vmem:[%s202 + $0xac] sm:%s194] %v289
                %v291 = vld [vmem:[%s201 + $0x210] sm:%s194]
                %292 = vst [vmem:[%s202 + $0xb0] sm:%s194] %v291
                %v293 = vld [vmem:[%s201 + $0x21c] sm:%s194]
                %294 = vst [vmem:[%s202 + $0xb4] sm:%s194] %v293
                %v295 = vld [vmem:[%s201 + $0x228] sm:%s194]
                %296 = vst [vmem:[%s202 + $0xb8] sm:%s194] %v295
                %v297 = vld [vmem:[%s201 + $0x234] sm:%s194]
                %298 = vst [vmem:[%s202 + $0xbc] sm:%s194] %v297
                %v299 = vld [vmem:[%s201 + $0x240] sm:%s194]
                %300 = vst [vmem:[%s202 + $0xc0] sm:%s194] %v299
                %v301 = vld [vmem:[%s201 + $0x24c] sm:%s194]
                %302 = vst [vmem:[%s202 + $0xc4] sm:%s194] %v301
                %v303 = vld [vmem:[%s201 + $0x258] sm:%s194]
                %304 = vst [vmem:[%s202 + $0xc8] sm:%s194] %v303
                %v305 = vld [vmem:[%s201 + $0x264] sm:%s194]
                %306 = vst [vmem:[%s202 + $0xcc] sm:%s194] %v305
                %v307 = vld [vmem:[%s201 + $0x270] sm:%s194]
                %308 = vst [vmem:[%s202 + $0xd0] sm:%s194] %v307
                %v309 = vld [vmem:[%s201 + $0x27c] sm:%s194]
                %310 = vst [vmem:[%s202 + $0xd4] sm:%s194] %v309
              $region53: #{run_train.8} parent=47 // loop_footer
                %s200 = sadd.s32 1, %s196
              $region54: #{run_train.8} parent=47 // loop_footer_branch
                %195 = sbr.rel target = $region50
              $region55: #{run_train.8} parent=47 // loop_exit
                _
            $region48: #{run_train.8} parent=39 // pred_fallthru
              _
          $region40: #{run_train.8} parent=35 // pred_fallthru
            _
          %439 = vnop
        $region36: #{run_train.8} parent=31 // pred_fallthru
          _
      $region32: #{run_train.8} parent=5 // pred_fallthru
        _
      %p440 = scmp.le.s32.totalorder 1, %s11
      %p441 = scmp.lt.s32.totalorder %s11, 4
      %p442 = pnand %p440, %p441
      %p443 = pneg %p442
      // Predicated region
      $region74: #{run_train.8} parent=5 // pred_check
        _
      $region75: #{run_train.8} parent=5 // pred_check_branch
        %445 = sbr.rel (%p442) target = $region77
      $region76: #{run_train.8} parent=5 // pred_region
        %s446 = ssub.s32 %s11, 1
        %s447 = sand.u32 %s108, 1
        %s448 = sand.u32 %s108, 1
        %s449 = smul.addr %s448, 216
        %s450 = scalar_lea.vmem [#allocation2], %s449
        // Predicated region
        $region78: #{run_train.8} parent=76 // pred_check
          %p451 = pneg %p121
        $region79: #{run_train.8} parent=76 // pred_check_branch
          %453 = sbr.rel (%p451) target = $region81
        $region80: #{run_train.8} parent=76 // pred_region
          _
        $region81: #{run_train.8} parent=76 // pred_fallthru
          _
        %p454 = pneg %p32
        %p455 = pneg %p29
        %p456 = pneg %p53
        %p457 = pneg %p50
        %p458 = pneg %p74
        %p459 = pneg %p71
        %p460 = pneg %p95
        %p461 = pneg %p92
        %s462 = sand.u32 %s108, 1
        %s463 = sand.u32 %s108, 1
        %s464 = smul.addr %s463, 216
        %s465 = scalar_lea.vmem [#allocation2], %s464
        %p466 = pneg %p121
        %p467 = pneg %p118
        %p468 = pneg %p147
        %p469 = pneg %p144
        %p470 = scmp.lt.s32.totalorder %s16, 2
        %s471 = scalar_select %p470, %s16, 2
        %s472 = smul.addr %s471, 8
        %s473 = scalar_lea.vmem %s5, %s472
        %p474 = scmp.lt.s32.totalorder %s16, 2
        %s475 = scalar_select %p474, %s16, 2
        %s476 = smul.addr %s475, 8
        %s477 = scalar_lea.vmem %s5, %s476
        %v479 = vld [vmem:[%s0] sm:$0xff]
        %v480 = vld [vmem:[%s0 + $0x8] sm:$0xff]
        %v481 = vld [vmem:[%s0 + $0x10] sm:$0xff]
        %v482 = vld [vmem:[%s0 + $0x18] sm:$0xff]
        %v483 = vld [vmem:[%s450] sm:$0xf]
        %v484 = vld [vmem:[%s450 + $0x4] sm:$0xf]
        %v485 = vld [vmem:[%s450 + $0x8] sm:$0xf]
        %v486 = vld [vmem:[%s450 + $0xc] sm:$0xf]
        %v487 = vld [vmem:[%s450 + $0x10] sm:$0xf]
        %v488 = vld [vmem:[%s450 + $0x14] sm:$0xf]
        %v489 = vld [vmem:[%s450 + $0x18] sm:$0xf]
        %v490 = vld [vmem:[%s450 + $0x1c] sm:$0xf]
        %v491 = vld [vmem:[%s450 + $0x20] sm:$0xf]
        %v492 = vld [vmem:[%s450 + $0x24] sm:$0xf]
        %v493 = vld [vmem:[%s450 + $0x28] sm:$0xf]
        %v494 = vld [vmem:[%s450 + $0x2c] sm:$0xf]
        %v495 = vld [vmem:[%s450 + $0x30] sm:$0xf]
        %v496 = vld [vmem:[%s450 + $0x34] sm:$0xf]
        %v497 = vld [vmem:[%s450 + $0x38] sm:$0xf]
        %v498 = vld [vmem:[%s450 + $0x3c] sm:$0xf]
        %v499 = vld [vmem:[%s450 + $0x40] sm:$0xf]
        %v500 = vld [vmem:[%s450 + $0x44] sm:$0xf]
        %v501 = vld [vmem:[%s450 + $0x48] sm:$0xf]
        %v502 = vld [vmem:[%s450 + $0x4c] sm:$0xf]
        %v503 = vld [vmem:[%s450 + $0x50] sm:$0xf]
        %v504 = vld [vmem:[%s450 + $0x54] sm:$0xf]
        %v505 = vld [vmem:[%s450 + $0x58] sm:$0xf]
        %v506 = vld [vmem:[%s450 + $0x5c] sm:$0xf]
        %v507 = vld [vmem:[%s450 + $0x60] sm:$0xf]
        %v508 = vld [vmem:[%s450 + $0x64] sm:$0xf]
        %v509 = vld [vmem:[%s450 + $0x68] sm:$0xf]
        %v510 = vld [vmem:[%s450 + $0x6c] sm:$0xf]
        %v511 = vld [vmem:[%s450 + $0x70] sm:$0xf]
        %v512 = vld [vmem:[%s450 + $0x74] sm:$0xf]
        %v513 = vld [vmem:[%s450 + $0x78] sm:$0xf]
        %v514 = vld [vmem:[%s450 + $0x7c] sm:$0xf]
        %v515 = vld [vmem:[%s450 + $0x80] sm:$0xf]
        %v516 = vld [vmem:[%s450 + $0x84] sm:$0xf]
        %v517 = vld [vmem:[%s450 + $0x88] sm:$0xf]
        %v518 = vld [vmem:[%s450 + $0x8c] sm:$0xf]
        %v519 = vld [vmem:[%s450 + $0x90] sm:$0xf]
        %v520 = vld [vmem:[%s450 + $0x94] sm:$0xf]
        %v521 = vld [vmem:[%s450 + $0x98] sm:$0xf]
        %v522 = vld [vmem:[%s450 + $0x9c] sm:$0xf]
        %v523 = vld [vmem:[%s450 + $0xa0] sm:$0xf]
        %v524 = vld [vmem:[%s450 + $0xa4] sm:$0xf]
        %v525 = vld [vmem:[%s450 + $0xa8] sm:$0xf]
        %v526 = vld [vmem:[%s450 + $0xac] sm:$0xf]
        %v527 = vld [vmem:[%s450 + $0xb0] sm:$0xf]
        %v528 = vld [vmem:[%s450 + $0xb4] sm:$0xf]
        %v529 = vld [vmem:[%s450 + $0xb8] sm:$0xf]
        %v530 = vld [vmem:[%s450 + $0xbc] sm:$0xf]
        %v531 = vld [vmem:[%s450 + $0xc0] sm:$0xf]
        %v532 = vld [vmem:[%s450 + $0xc4] sm:$0xf]
        %v533 = vld [vmem:[%s450 + $0xc8] sm:$0xf]
        %v534 = vld [vmem:[%s450 + $0xcc] sm:$0xf]
        %v535 = vld [vmem:[%s450 + $0xd0] sm:$0xf]
        %v536 = vld [vmem:[%s450 + $0xd4] sm:$0xf]
        %v537 = vld [vmem:[%s1] sm:$0xff]
        %v538 = vld [vmem:[%s1 + $0x8] sm:$0xff]
        %540 = vset.pattern.permute.xlu0 0
        %541 = vperm.xlu0 %540, %v537
        %v542 = vpop.permute.xlu0 %541
        %545 = vset.pattern.permute.xlu0 0
        %546 = vperm.xlu0 %545, %v538
        %v547 = vpop.permute.xlu0 %546
        %v553 = vunpack.c.l.b16 %v479
        %v554 = vunpack.c.h.b16 %v479
        %v555 = vunpack.c.l.b16 %v480
        %v556 = vunpack.c.h.b16 %v480
        %v557 = vunpack.c.l.b16 %v481
        %v558 = vunpack.c.h.b16 %v481
        %v559 = vunpack.c.l.b16 %v482
        %v560 = vunpack.c.h.b16 %v482
        %v561 = vpack.c.b16 %v557, %v553
        %v562 = vpack.c.b16 %v558, %v554
        %v563 = vpack.c.b16 %v559, %v555
        %v564 = vpack.c.b16 %v560, %v556
        %v622 = vunpack.c.l.b16 %v483
        %v623 = vunpack.c.l.b16 %v484
        %v624 = vunpack.c.l.b16 %v485
        %v625 = vunpack.c.l.b16 %v486
        %v626 = vunpack.c.l.b16 %v487
        %v627 = vunpack.c.l.b16 %v488
        %v628 = vunpack.c.l.b16 %v489
        %v629 = vunpack.c.l.b16 %v490
        %v630 = vunpack.c.l.b16 %v491
        %v631 = vunpack.c.l.b16 %v492
        %v632 = vunpack.c.l.b16 %v493
        %v633 = vunpack.c.l.b16 %v494
        %v634 = vunpack.c.l.b16 %v495
        %v635 = vunpack.c.l.b16 %v496
        %v636 = vunpack.c.l.b16 %v497
        %v637 = vunpack.c.l.b16 %v498
        %v638 = vunpack.c.l.b16 %v499
        %v639 = vunpack.c.l.b16 %v500
        %v640 = vunpack.c.l.b16 %v501
        %v641 = vunpack.c.l.b16 %v502
        %v642 = vunpack.c.l.b16 %v503
        %v643 = vunpack.c.l.b16 %v504
        %v644 = vunpack.c.l.b16 %v505
        %v645 = vunpack.c.l.b16 %v506
        %v646 = vunpack.c.l.b16 %v507
        %v647 = vunpack.c.l.b16 %v508
        %v648 = vunpack.c.l.b16 %v509
        %v649 = vunpack.c.l.b16 %v510
        %v650 = vunpack.c.l.b16 %v511
        %v651 = vunpack.c.l.b16 %v512
        %v652 = vunpack.c.l.b16 %v513
        %v653 = vunpack.c.l.b16 %v514
        %v654 = vunpack.c.l.b16 %v515
        %v655 = vunpack.c.l.b16 %v516
        %v656 = vunpack.c.l.b16 %v517
        %v657 = vunpack.c.l.b16 %v518
        %v658 = vunpack.c.l.b16 %v519
        %v659 = vunpack.c.l.b16 %v520
        %v660 = vunpack.c.l.b16 %v521
        %v661 = vunpack.c.l.b16 %v522
        %v662 = vunpack.c.l.b16 %v523
        %v663 = vunpack.c.l.b16 %v524
        %v664 = vunpack.c.l.b16 %v525
        %v665 = vunpack.c.l.b16 %v526
        %v666 = vunpack.c.l.b16 %v527
        %v667 = vunpack.c.l.b16 %v528
        %v668 = vunpack.c.l.b16 %v529
        %v669 = vunpack.c.l.b16 %v530
        %v670 = vunpack.c.l.b16 %v531
        %v671 = vunpack.c.l.b16 %v532
        %v672 = vunpack.c.l.b16 %v533
        %v673 = vunpack.c.l.b16 %v534
        %v674 = vunpack.c.l.b16 %v535
        %v675 = vunpack.c.l.b16 %v536
        %v676 = vpack.c.b16 %v623, %v622
        %v677 = vpack.c.b16 %v625, %v624
        %v678 = vpack.c.b16 %v627, %v626
        %v679 = vpack.c.b16 %v629, %v628
        %v680 = vpack.c.b16 %v631, %v630
        %v681 = vpack.c.b16 %v633, %v632
        %v682 = vpack.c.b16 %v635, %v634
        %v683 = vpack.c.b16 %v637, %v636
        %v684 = vpack.c.b16 %v639, %v638
        %v685 = vpack.c.b16 %v641, %v640
        %v686 = vpack.c.b16 %v643, %v642
        %v687 = vpack.c.b16 %v645, %v644
        %v688 = vpack.c.b16 %v647, %v646
        %v689 = vpack.c.b16 %v649, %v648
        %v690 = vpack.c.b16 %v651, %v650
        %v691 = vpack.c.b16 %v653, %v652
        %v692 = vpack.c.b16 %v655, %v654
        %v693 = vpack.c.b16 %v657, %v656
        %v694 = vpack.c.b16 %v659, %v658
        %v695 = vpack.c.b16 %v661, %v660
        %v696 = vpack.c.b16 %v663, %v662
        %v697 = vpack.c.b16 %v665, %v664
        %v698 = vpack.c.b16 %v667, %v666
        %v699 = vpack.c.b16 %v669, %v668
        %v700 = vpack.c.b16 %v671, %v670
        %v701 = vpack.c.b16 %v673, %v672
        %v702 = vpack.c.b16 %v675, %v674
        %vm730 = vcmask 392192
        %v732 = vsel %vm730, %v564, 0
        %734 = vmatprep.subr.bf16.mxu0 0
        %735 = vmatpush1.bf16.msra.mxu0 %v683
        %736 = vmatprep.subr.bf16.mxu0 0
        %737 = vmatpush1.bf16.msra.mxu0 %v682
        %738 = vmatprep.subr.bf16.mxu0 0
        %739 = vmatpush1.bf16.msra.mxu0 %v681
        %740 = vmatprep.subr.bf16.mxu0 0
        %741 = vmatpush1.bf16.msra.mxu0 %v680
        %742 = vmatprep.subr.bf16.mxu0 0
        %743 = vmatpush1.bf16.msra.mxu0 %v679
        %744 = vmatprep.subr.bf16.mxu0 0
        %745 = vmatpush1.bf16.msra.mxu0 %v678
        %746 = vmatprep.subr.bf16.mxu0 0
        %747 = vmatpush1.bf16.msra.mxu0 %v677
        %748 = vmatprep.subr.bf16.mxu0 0
        %749 = vmatpush1.bf16.msra.mxu0 %v676
        %750 = vmatprep.subr.bf16.mxu0 0
        %751 = vmatpush2.bf16.msra.mxu0 %v691
        %752 = vmatprep.subr.bf16.mxu0 0
        %753 = vmatpush2.bf16.msra.mxu0 %v690
        %754 = vmatprep.subr.bf16.mxu0 0
        %755 = vmatpush2.bf16.msra.mxu0 %v689
        %756 = vmatprep.subr.bf16.mxu0 0
        %757 = vmatpush2.bf16.msra.mxu0 %v688
        %758 = vmatprep.subr.bf16.mxu0 0
        %759 = vmatpush2.bf16.msra.mxu0 %v687
        %760 = vmatprep.subr.bf16.mxu0 0
        %761 = vmatpush2.bf16.msra.mxu0 %v686
        %762 = vmatprep.subr.bf16.mxu0 0
        %763 = vmatpush2.bf16.msra.mxu0 %v685
        %764 = vmatprep.subr.bf16.mxu0 0
        %765 = vmatpush2.bf16.msra.mxu0 %v684
        %766 = vmatprep.mubr.bf16.mxu0 %v562
        %767 = vmatmul.mubr.bf16.gmra.mxu0 %v561
        %v768 = vpop.f32.mrf.mxu0
        %v769 = vadd.f32 %v542, %v768
        %v770 = vpop.f32.mrf.mxu0
        %v771 = vpop.f32.mrf.mxu0
        %v772 = vadd.f32 %v547, %v771
        %v773 = vpop.f32.mrf.mxu0
        %774 = vdwg.mxu0
        %775 = vmatprep.subr.bf16.mxu0 0
        %776 = vmatpush1.bf16.msra.mxu0 %v699
        %777 = vmatprep.subr.bf16.mxu0 0
        %778 = vmatpush1.bf16.msra.mxu0 %v698
        %779 = vmatprep.subr.bf16.mxu0 0
        %780 = vmatpush1.bf16.msra.mxu0 %v697
        %781 = vmatprep.subr.bf16.mxu0 0
        %782 = vmatpush1.bf16.msra.mxu0 %v696
        %783 = vmatprep.subr.bf16.mxu0 0
        %784 = vmatpush1.bf16.msra.mxu0 %v695
        %785 = vmatprep.subr.bf16.mxu0 0
        %786 = vmatpush1.bf16.msra.mxu0 %v694
        %787 = vmatprep.subr.bf16.mxu0 0
        %788 = vmatpush1.bf16.msra.mxu0 %v693
        %789 = vmatprep.subr.bf16.mxu0 0
        %790 = vmatpush1.bf16.msra.mxu0 %v692
        %791 = vmatprep.subr.bf16.mxu0 0
        %792 = vmatpush2.bf16.msra.mxu0 0
        %793 = vmatprep.subr.bf16.mxu0 0
        %794 = vmatpush2.bf16.msra.mxu0 0
        %795 = vmatprep.subr.bf16.mxu0 0
        %796 = vmatpush2.bf16.msra.mxu0 0
        %797 = vmatprep.subr.bf16.mxu0 0
        %798 = vmatpush2.bf16.msra.mxu0 0
        %799 = vmatprep.subr.bf16.mxu0 0
        %800 = vmatpush2.bf16.msra.mxu0 0
        %801 = vmatprep.subr.bf16.mxu0 0
        %802 = vmatpush2.bf16.msra.mxu0 %v702
        %803 = vmatprep.subr.bf16.mxu0 0
        %804 = vmatpush2.bf16.msra.mxu0 %v701
        %805 = vmatprep.subr.bf16.mxu0 0
        %806 = vmatpush2.bf16.msra.mxu0 %v700
        %807 = vmatprep.mubr.bf16.mxu0 %v732
        %808 = vmatmul.mubr.bf16.gmra.mxu0 %v563
        %v809 = vpop.f32.mrf.mxu0
        %v810 = vadd.f32 %v769, %v809
        %v811 = vpop.f32.mrf.mxu0
        %v812 = vpop.f32.mrf.mxu0
        %v813 = vadd.f32 %v772, %v812
        %v814 = vpop.f32.mrf.mxu0
        %815 = vdwg.mxu0
        %vm816 = vcmp.gt.f32.partialorder %v810, 0.0
        %vm817 = vcmp.gt.f32.partialorder %v813, 0.0
        %v818 = vmul.f32 %v810, 0.01
        %v819 = vmul.f32 %v813, 0.01
        %v820 = vsel %vm816, %v810, %v818
        %v821 = vsel %vm817, %v813, %v819
        %v822 = vld [vmem:[%s2] sm:$0xff]
        %v823 = vld [vmem:[%s3] sm:$0xff]
        %825 = vset.pattern.permute.xlu0 0
        %826 = vperm.xlu0 %825, %v823
        %v827 = vpop.permute.xlu0 %826
        %vm829 = vcmask 130048
        %v831 = vsel %vm829, %v822, 0
        %833 = vmatprep.subr.mxu0 0.0
        %834 = vmatpush1.msra.mxu0 0.0
        %835 = vmatprep.subr.mxu0 0.0
        %836 = vmatpush1.msra.mxu0 0.0
        %837 = vmatprep.subr.mxu0 0.0
        %838 = vmatpush1.msra.mxu0 0.0
        %839 = vmatprep.subr.mxu0 0.0
        %840 = vmatpush1.msra.mxu0 0.0
        %841 = vmatprep.subr.mxu0 0.0
        %842 = vmatpush1.msra.mxu0 0.0
        %843 = vmatprep.subr.mxu0 0.0
        %844 = vmatpush1.msra.mxu0 0.0
        %845 = vmatprep.subr.mxu0 0.0
        %846 = vmatpush1.msra.mxu0 0.0
        %847 = vmatprep.subr.mxu0 0.0
        %848 = vmatpush1.msra.mxu0 0.0
        %849 = vmatprep.subr.mxu0 0.0
        %850 = vmatpush1.msra.mxu0 0.0
        %851 = vmatprep.subr.mxu0 0.0
        %852 = vmatpush1.msra.mxu0 0.0
        %853 = vmatprep.subr.mxu0 0.0
        %854 = vmatpush1.msra.mxu0 0.0
        %855 = vmatprep.subr.mxu0 0.0
        %856 = vmatpush1.msra.mxu0 0.0
        %857 = vmatprep.subr.mxu0 0.0
        %858 = vmatpush1.msra.mxu0 0.0
        %859 = vmatprep.subr.mxu0 0.0
        %860 = vmatpush1.msra.mxu0 0.0
        %861 = vmatprep.subr.mxu0 0.0
        %862 = vmatpush1.msra.mxu0 %v821
        %863 = vmatprep.subr.mxu0 0.0
        %864 = vmatpush1.msra.mxu0 %v820
        %865 = vmatprep.subr.mxu0 0.0
        %866 = vmatpush2.msra.mxu0 0.0
        %867 = vmatprep.subr.mxu0 0.0
        %868 = vmatpush2.msra.mxu0 0.0
        %869 = vmatprep.subr.mxu0 0.0
        %870 = vmatpush2.msra.mxu0 0.0
        %871 = vmatprep.subr.mxu0 0.0
        %872 = vmatpush2.msra.mxu0 0.0
        %873 = vmatprep.subr.mxu0 0.0
        %874 = vmatpush2.msra.mxu0 0.0
        %875 = vmatprep.subr.mxu0 0.0
        %876 = vmatpush2.msra.mxu0 0.0
        %877 = vmatprep.subr.mxu0 0.0
        %878 = vmatpush2.msra.mxu0 0.0
        %879 = vmatprep.subr.mxu0 0.0
        %880 = vmatpush2.msra.mxu0 0.0
        %881 = vmatprep.subr.mxu0 0.0
        %882 = vmatpush2.msra.mxu0 0.0
        %883 = vmatprep.subr.mxu0 0.0
        %884 = vmatpush2.msra.mxu0 0.0
        %885 = vmatprep.subr.mxu0 0.0
        %886 = vmatpush2.msra.mxu0 0.0
        %887 = vmatprep.subr.mxu0 0.0
        %888 = vmatpush2.msra.mxu0 0.0
        %889 = vmatprep.subr.mxu0 0.0
        %890 = vmatpush2.msra.mxu0 0.0
        %891 = vmatprep.subr.mxu0 0.0
        %892 = vmatpush2.msra.mxu0 0.0
        %893 = vmatprep.subr.mxu0 0.0
        %894 = vmatpush2.msra.mxu0 0.0
        %895 = vmatprep.subr.mxu0 0.0
        %896 = vmatpush2.msra.mxu0 0.0
        %897 = vmatprep.mubr.f32.mxu0 0.0
        %898 = vmatmul.mubr.f32.gmra.mxu0 %v831
        %v899 = vpop.f32.mrf.mxu0
        %v900 = vadd.f32 %v827, %v899
        %v901 = vpop.f32.mrf.mxu0
        %902 = vdwg.mxu0
        %v903 = vmul.f32 %v900, %v900
        %v904 = vrot.slane %v903, 4
        %v905 = vadd.f32 %v903, %v904
        %v906 = vrot.slane %v905, 2
        %v907 = vadd.f32 %v905, %v906
        %v908 = vrot.slane %v907, 1
        %v909 = vadd.f32 %v907, %v908
        %v910 = vrsqrt.pop %v909
        %v911 = vmul.f32 %v909, %v910
        %vm912 = vcmp.eq.f32.partialorder %v909, inf
        %v913 = vsel %vm912, %v909, %v911
        %vm914 = vcmp.eq.f32.partialorder %v909, 0.0
        %v915 = vand.u32 %v909, 2147483648
        %v916 = vsel %vm914, %v915, %v913
        %v917 = vadd.f32 %v916, 1e-06
        %v918 = vrcp.pop %v917
        %v919 = vmul.f32 %v900, %v918
        %920 = vst [vmem:[%s477] sm:$0xff] %v919
        %p921 = scmp.lt.s32.totalorder %s16, 2
        %s922 = scalar_select %p921, %s16, 2
        %s923 = smul.addr %s922, 8
        %s924 = scalar_lea.vmem %s5, %s923
        // Predicated region
        $region82: #{run_train.8} parent=76 // pred_check
          %p925 = pneg %p144
        $region83: #{run_train.8} parent=76 // pred_check_branch
          %927 = sbr.rel (%p925) target = $region85
        $region84: #{run_train.8} parent=76 // pred_region
          _
        $region85: #{run_train.8} parent=76 // pred_fallthru
          _
      $region77: #{run_train.8} parent=5 // pred_fallthru
        _
      %p928 = scmp.le.s32.totalorder 2, %s11
      // Predicated region
      $region86: #{run_train.8} parent=5 // pred_check
        %p929 = pneg %p928
      $region87: #{run_train.8} parent=5 // pred_check_branch
        %931 = sbr.rel (%p929) target = $region89
      $region88: #{run_train.8} parent=5 // pred_region
        %s932 = ssub.s32 %s11, 2
        // Predicated region
        $region90: #{run_train.8} parent=88 // pred_check
          %p933 = pneg %p150
        $region91: #{run_train.8} parent=88 // pred_check_branch
          %935 = sbr.rel (%p933) target = $region93
        $region92: #{run_train.8} parent=88 // pred_region
          %p936 = scmp.lt.s32.totalorder %s17, 2
          %s937 = scalar_select %p936, %s17, 2
          %s938 = smul.addr %s937, 8
          %s939 = scalar_lea.vmem %s5, %s938
        $region93: #{run_train.8} parent=88 // pred_fallthru
          _
      $region89: #{run_train.8} parent=5 // pred_fallthru
        _
    $region6: #{run_train.8} parent=1 // loop_footer
      %s15 = sadd.s32 1, %s11
    $region7: #{run_train.8} parent=1 // loop_footer_branch
      %10 = sbr.rel target = $region3
    $region8: #{run_train.8} parent=1 // loop_exit
      _

// kernel: run_train.9
$region0: #{run_train.9}
  #allocation0 [shape = 'u32[]', space=smem, size = 0x4, offset = 0x4, fixed_abs, tag = 'smem constant byte address 0x4 - core index']
  #allocation1 [shape = 'u32[144,128]{1,0:T(1,128)}', space=vmem, size = 0x12000, scoped, tag = 'internal scratch']
  %s0 = inlined_call_operand.vmem [shape: f32[2,64,108], index: 0, kind: input, shape index: {}]
  %s1 = inlined_call_operand.vmem [shape: f32[108,16], index: 1, kind: input, shape index: {}]
  %s2 = inlined_call_operand.vmem [shape: f32[1,16], index: 2, kind: input, shape index: {}]
  %s3 = inlined_call_operand.vmem [shape: f32[216,64], index: 3, kind: input, shape index: {}]
  %s4 = inlined_call_operand.vmem [shape: f32[27,16,16], index: 4, kind: input, shape index: {}]
  %s5 = inlined_call_operand.vmem [shape: f32[1,16], index: 5, kind: input, shape index: {}]
  %s6 = inlined_call_operand.vmem [shape: f32[16,8], index: 6, kind: input, shape index: {}]
  %s7 = inlined_call_operand.vmem [shape: f32[1,8], index: 7, kind: input, shape index: {}]
  %s8 = inlined_call_operand.vmem [shape: f32[2,8,8,27], index: 8, kind: input, shape index: {}]
  %s9 = inlined_call_operand.vmem [shape: f32[3,27], index: 9, kind: input, shape index: {}]
  %s10 = inlined_call_operand.vmem [shape: f32[2,8,8], index: 10, kind: output, shape index: {0}]
  %s11 = inlined_call_operand.vmem [shape: f32[2,3,1], index: 11, kind: output, shape index: {1}]
  %12 = xla_tuple %s10, %s11
  %s13 = sld [smem:[#allocation0]]
  $region81: #{run_train.9} parent=0
    _
  %s15 = ssub.s32 1, %s13
  %s16 = scalar_select 0, %s15, %s13
  loop: start=0, step=1, limit=4
  $region2: #{run_train.9} parent=0 // loop_pre_header
    _
  $region3: #{run_train.9} parent=0 // loop_header
    %s18 = sphi 0, %s22
    %p19 = scmp.ge.s32.totalorder %s18, 4
    %s28 = sphi 0, %s30
    %s31 = sphi 0, %s28
    %s32 = sphi 0, %s31
    %s48 = sphi 0, %s32
    %s52 = sphi 0, %s52
    %s54 = sphi 0, %s52
    %s55 = sphi 0, %s54
    %s69 = sphi 0, %s55
    %s73 = sphi 0, %s73
    %s75 = sphi 0, %s73
    %s76 = sphi 0, %s75
    %s90 = sphi 0, %s76
    %s94 = sphi 0, %s94
    %s96 = sphi 0, %s94
    %s97 = sphi 0, %s96
    %s111 = sphi 0, %s97
    %s115 = sphi 0, %s115
    %s117 = sphi 0, %s115
    %s118 = sphi 0, %s117
    %s132 = sphi 0, %s118
    %s136 = sphi 0, %s136
    %s138 = sphi 0, %s136
    %s139 = sphi 0, %s138
    %s153 = sphi 0, %s139
    %s157 = sphi 0, %s157
    %s159 = sphi 0, %s157
    %s160 = sphi 0, %s159
    %s174 = sphi 0, %s160
    %s178 = sphi 0, %s178
    %s180 = sphi 0, %s178
    %s181 = sphi 0, %s180
    %s195 = sphi 0, %s181
    %s201 = sphi 0, %s203
    %s204 = sphi 0, %s201
    %s205 = sphi 0, %s204
    %s221 = sphi 0, %s205
    %s225 = sphi 0, %s225
    %s227 = sphi 0, %s225
    %s228 = sphi 0, %s227
    %s242 = sphi 0, %s228
    %s248 = sphi 0, %s250
    %s251 = sphi 0, %s248
    %s252 = sphi 0, %s251
    %s268 = sphi 0, %s252
    %s274 = sphi 0, %s276
    %s277 = sphi 0, %s274
    %s278 = sphi 0, %s277
    %s294 = sphi 0, %s278
  $region4: #{run_train.9} parent=0 // loop_header_branch
    %21 = sbr.rel (%p19) target = $region8
  $region5: #{run_train.9} parent=0 // loop_body
    %s23 = ssub.s32 %s18, 1
    %s24 = ssub.s32 %s18, 2
    %s25 = sadd.s32 %s18, 1
    %s26 = ssub.s32 %s18, %s25
    %p27 = scmp.eq.s32.totalorder %s26, 0
    %s29 = sadd.s32 %s28, 1
    %s30 = scalar_select %p27, %s28, %s29
    %p33 = pneg %p27
    %p34 = scmp.eq.s32.totalorder %s18, 1
    %p35 = por %p33, %p34
    %p36 = scmp.ne.s32.totalorder %s28, %s31
    %p37 = scmp.eq.s32.totalorder %s18, 0
    %p38 = por %p36, %p37
    %p39 = scmp.ne.s32.totalorder %s28, %s31
    %p40 = scmp.eq.s32.totalorder %s23, 1
    %p41 = por %p39, %p40
    %p42 = scmp.ne.s32.totalorder %s31, %s32
    %p43 = scmp.eq.s32.totalorder %s23, 0
    %p44 = por %p42, %p43
    %p45 = scmp.ne.s32.totalorder %s31, %s32
    %p46 = scmp.eq.s32.totalorder %s24, 1
    %p47 = por %p45, %p46
    %p49 = scmp.ne.s32.totalorder %s32, %s48
    %p50 = scmp.eq.s32.totalorder %s24, 0
    %p51 = por %p49, %p50
    %s53 = sadd.s32 %s52, 1
    %p56 = scmp.eq.s32.totalorder %s18, 1
    %p57 = scmp.ne.s32.totalorder %s52, %s54
    %p58 = scmp.eq.s32.totalorder %s18, 0
    %p59 = por %p57, %p58
    %p60 = scmp.ne.s32.totalorder %s52, %s54
    %p61 = scmp.eq.s32.totalorder %s23, 1
    %p62 = por %p60, %p61
    %p63 = scmp.ne.s32.totalorder %s54, %s55
    %p64 = scmp.eq.s32.totalorder %s23, 0
    %p65 = por %p63, %p64
    %p66 = scmp.ne.s32.totalorder %s54, %s55
    %p67 = scmp.eq.s32.totalorder %s24, 1
    %p68 = por %p66, %p67
    %p70 = scmp.ne.s32.totalorder %s55, %s69
    %p71 = scmp.eq.s32.totalorder %s24, 0
    %p72 = por %p70, %p71
    %s74 = sadd.s32 %s73, 1
    %p77 = scmp.eq.s32.totalorder %s18, 1
    %p78 = scmp.ne.s32.totalorder %s73, %s75
    %p79 = scmp.eq.s32.totalorder %s18, 0
    %p80 = por %p78, %p79
    %p81 = scmp.ne.s32.totalorder %s73, %s75
    %p82 = scmp.eq.s32.totalorder %s23, 1
    %p83 = por %p81, %p82
    %p84 = scmp.ne.s32.totalorder %s75, %s76
    %p85 = scmp.eq.s32.totalorder %s23, 0
    %p86 = por %p84, %p85
    %p87 = scmp.ne.s32.totalorder %s75, %s76
    %p88 = scmp.eq.s32.totalorder %s24, 1
    %p89 = por %p87, %p88
    %p91 = scmp.ne.s32.totalorder %s76, %s90
    %p92 = scmp.eq.s32.totalorder %s24, 0
    %p93 = por %p91, %p92
    %s95 = sadd.s32 %s94, 1
    %p98 = scmp.eq.s32.totalorder %s18, 1
    %p99 = scmp.ne.s32.totalorder %s94, %s96
    %p100 = scmp.eq.s32.totalorder %s18, 0
    %p101 = por %p99, %p100
    %p102 = scmp.ne.s32.totalorder %s94, %s96
    %p103 = scmp.eq.s32.totalorder %s23, 1
    %p104 = por %p102, %p103
    %p105 = scmp.ne.s32.totalorder %s96, %s97
    %p106 = scmp.eq.s32.totalorder %s23, 0
    %p107 = por %p105, %p106
    %p108 = scmp.ne.s32.totalorder %s96, %s97
    %p109 = scmp.eq.s32.totalorder %s24, 1
    %p110 = por %p108, %p109
    %p112 = scmp.ne.s32.totalorder %s97, %s111
    %p113 = scmp.eq.s32.totalorder %s24, 0
    %p114 = por %p112, %p113
    %s116 = sadd.s32 %s115, 1
    %p119 = scmp.eq.s32.totalorder %s18, 1
    %p120 = scmp.ne.s32.totalorder %s115, %s117
    %p121 = scmp.eq.s32.totalorder %s18, 0
    %p122 = por %p120, %p121
    %p123 = scmp.ne.s32.totalorder %s115, %s117
    %p124 = scmp.eq.s32.totalorder %s23, 1
    %p125 = por %p123, %p124
    %p126 = scmp.ne.s32.totalorder %s117, %s118
    %p127 = scmp.eq.s32.totalorder %s23, 0
    %p128 = por %p126, %p127
    %p129 = scmp.ne.s32.totalorder %s117, %s118
    %p130 = scmp.eq.s32.totalorder %s24, 1
    %p131 = por %p129, %p130
    %p133 = scmp.ne.s32.totalorder %s118, %s132
    %p134 = scmp.eq.s32.totalorder %s24, 0
    %p135 = por %p133, %p134
    %s137 = sadd.s32 %s136, 1
    %p140 = scmp.eq.s32.totalorder %s18, 1
    %p141 = scmp.ne.s32.totalorder %s136, %s138
    %p142 = scmp.eq.s32.totalorder %s18, 0
    %p143 = por %p141, %p142
    %p144 = scmp.ne.s32.totalorder %s136, %s138
    %p145 = scmp.eq.s32.totalorder %s23, 1
    %p146 = por %p144, %p145
    %p147 = scmp.ne.s32.totalorder %s138, %s139
    %p148 = scmp.eq.s32.totalorder %s23, 0
    %p149 = por %p147, %p148
    %p150 = scmp.ne.s32.totalorder %s138, %s139
    %p151 = scmp.eq.s32.totalorder %s24, 1
    %p152 = por %p150, %p151
    %p154 = scmp.ne.s32.totalorder %s139, %s153
    %p155 = scmp.eq.s32.totalorder %s24, 0
    %p156 = por %p154, %p155
    %s158 = sadd.s32 %s157, 1
    %p161 = scmp.eq.s32.totalorder %s18, 1
    %p162 = scmp.ne.s32.totalorder %s157, %s159
    %p163 = scmp.eq.s32.totalorder %s18, 0
    %p164 = por %p162, %p163
    %p165 = scmp.ne.s32.totalorder %s157, %s159
    %p166 = scmp.eq.s32.totalorder %s23, 1
    %p167 = por %p165, %p166
    %p168 = scmp.ne.s32.totalorder %s159, %s160
    %p169 = scmp.eq.s32.totalorder %s23, 0
    %p170 = por %p168, %p169
    %p171 = scmp.ne.s32.totalorder %s159, %s160
    %p172 = scmp.eq.s32.totalorder %s24, 1
    %p173 = por %p171, %p172
    %p175 = scmp.ne.s32.totalorder %s160, %s174
    %p176 = scmp.eq.s32.totalorder %s24, 0
    %p177 = por %p175, %p176
    %s179 = sadd.s32 %s178, 1
    %p182 = scmp.eq.s32.totalorder %s18, 1
    %p183 = scmp.ne.s32.totalorder %s178, %s180
    %p184 = scmp.eq.s32.totalorder %s18, 0
    %p185 = por %p183, %p184
    %p186 = scmp.ne.s32.totalorder %s178, %s180
    %p187 = scmp.eq.s32.totalorder %s23, 1
    %p188 = por %p186, %p187
    %p189 = scmp.ne.s32.totalorder %s180, %s181
    %p190 = scmp.eq.s32.totalorder %s23, 0
    %p191 = por %p189, %p190
    %p192 = scmp.ne.s32.totalorder %s180, %s181
    %p193 = scmp.eq.s32.totalorder %s24, 1
    %p194 = por %p192, %p193
    %p196 = scmp.ne.s32.totalorder %s181, %s195
    %p197 = scmp.eq.s32.totalorder %s24, 0
    %p198 = por %p196, %p197
    %s199 = ssub.s32 %s18, %s25
    %p200 = scmp.eq.s32.totalorder %s199, 0
    %s202 = sadd.s32 %s201, 1
    %s203 = scalar_select %p200, %s201, %s202
    %p206 = pneg %p200
    %p207 = scmp.eq.s32.totalorder %s18, 1
    %p208 = por %p206, %p207
    %p209 = scmp.ne.s32.totalorder %s201, %s204
    %p210 = scmp.eq.s32.totalorder %s18, 0
    %p211 = por %p209, %p210
    %p212 = scmp.ne.s32.totalorder %s201, %s204
    %p213 = scmp.eq.s32.totalorder %s23, 1
    %p214 = por %p212, %p213
    %p215 = scmp.ne.s32.totalorder %s204, %s205
    %p216 = scmp.eq.s32.totalorder %s23, 0
    %p217 = por %p215, %p216
    %p218 = scmp.ne.s32.totalorder %s204, %s205
    %p219 = scmp.eq.s32.totalorder %s24, 1
    %p220 = por %p218, %p219
    %p222 = scmp.ne.s32.totalorder %s205, %s221
    %p223 = scmp.eq.s32.totalorder %s24, 0
    %p224 = por %p222, %p223
    %s226 = sadd.s32 %s225, 1
    %p229 = scmp.eq.s32.totalorder %s18, 1
    %p230 = scmp.ne.s32.totalorder %s225, %s227
    %p231 = scmp.eq.s32.totalorder %s18, 0
    %p232 = por %p230, %p231
    %p233 = scmp.ne.s32.totalorder %s225, %s227
    %p234 = scmp.eq.s32.totalorder %s23, 1
    %p235 = por %p233, %p234
    %p236 = scmp.ne.s32.totalorder %s227, %s228
    %p237 = scmp.eq.s32.totalorder %s23, 0
    %p238 = por %p236, %p237
    %p239 = scmp.ne.s32.totalorder %s227, %s228
    %p240 = scmp.eq.s32.totalorder %s24, 1
    %p241 = por %p239, %p240
    %p243 = scmp.ne.s32.totalorder %s228, %s242
    %p244 = scmp.eq.s32.totalorder %s24, 0
    %p245 = por %p243, %p244
    %s246 = ssub.s32 %s18, %s25
    %p247 = scmp.eq.s32.totalorder %s246, 0
    %s249 = sadd.s32 %s248, 1
    %s250 = scalar_select %p247, %s248, %s249
    %p253 = pneg %p247
    %p254 = scmp.eq.s32.totalorder %s18, 1
    %p255 = por %p253, %p254
    %p256 = scmp.ne.s32.totalorder %s248, %s251
    %p257 = scmp.eq.s32.totalorder %s18, 0
    %p258 = por %p256, %p257
    %p259 = scmp.ne.s32.totalorder %s248, %s251
    %p260 = scmp.eq.s32.totalorder %s23, 1
    %p261 = por %p259, %p260
    %p262 = scmp.ne.s32.totalorder %s251, %s252
    %p263 = scmp.eq.s32.totalorder %s23, 0
    %p264 = por %p262, %p263
    %p265 = scmp.ne.s32.totalorder %s251, %s252
    %p266 = scmp.eq.s32.totalorder %s24, 1
    %p267 = por %p265, %p266
    %p269 = scmp.ne.s32.totalorder %s252, %s268
    %p270 = scmp.eq.s32.totalorder %s24, 0
    %p271 = por %p269, %p270
    %s272 = ssub.s32 %s18, %s25
    %p273 = scmp.eq.s32.totalorder %s272, 0
    %s275 = sadd.s32 %s274, 1
    %s276 = scalar_select %p273, %s274, %s275
    %p279 = pneg %p273
    %p280 = scmp.eq.s32.totalorder %s18, 1
    %p281 = por %p279, %p280
    %p282 = scmp.ne.s32.totalorder %s274, %s277
    %p283 = scmp.eq.s32.totalorder %s18, 0
    %p284 = por %p282, %p283
    %p285 = scmp.ne.s32.totalorder %s274, %s277
    %p286 = scmp.eq.s32.totalorder %s23, 1
    %p287 = por %p285, %p286
    %p288 = scmp.ne.s32.totalorder %s277, %s278
    %p289 = scmp.eq.s32.totalorder %s23, 0
    %p290 = por %p288, %p289
    %p291 = scmp.ne.s32.totalorder %s277, %s278
    %p292 = scmp.eq.s32.totalorder %s24, 1
    %p293 = por %p291, %p292
    %p295 = scmp.ne.s32.totalorder %s278, %s294
    %p296 = scmp.eq.s32.totalorder %s24, 0
    %p297 = por %p295, %p296
    %p298 = scmp.le.s32.totalorder 1, %s18
    %p299 = scmp.lt.s32.totalorder %s18, 3
    %p300 = pnand %p298, %p299
    %p301 = pneg %p300
    // Predicated region
    $region9: #{run_train.9} parent=5 // pred_check
      _
    $region10: #{run_train.9} parent=5 // pred_check_branch
      %303 = sbr.rel (%p300) target = $region12
    $region11: #{run_train.9} parent=5 // pred_region
      %s304 = ssub.s32 %s18, 1
      // Predicated region
      $region13: #{run_train.9} parent=11 // pred_check
        %p305 = pneg %p65
      $region14: #{run_train.9} parent=11 // pred_check_branch
        %307 = sbr.rel (%p305) target = $region16
      $region15: #{run_train.9} parent=11 // pred_region
        _
      $region16: #{run_train.9} parent=11 // pred_fallthru
        _
      // Predicated region
      $region17: #{run_train.9} parent=11 // pred_check
        %p308 = pneg %p86
      $region18: #{run_train.9} parent=11 // pred_check_branch
        %310 = sbr.rel (%p308) target = $region20
      $region19: #{run_train.9} parent=11 // pred_region
        _
      $region20: #{run_train.9} parent=11 // pred_fallthru
        _
      // Predicated region
      $region21: #{run_train.9} parent=11 // pred_check
        %p311 = pneg %p107
      $region22: #{run_train.9} parent=11 // pred_check_branch
        %313 = sbr.rel (%p311) target = $region24
      $region23: #{run_train.9} parent=11 // pred_region
        _
      $region24: #{run_train.9} parent=11 // pred_fallthru
        _
      // Predicated region
      $region25: #{run_train.9} parent=11 // pred_check
        %p314 = pneg %p128
      $region26: #{run_train.9} parent=11 // pred_check_branch
        %316 = sbr.rel (%p314) target = $region28
      $region27: #{run_train.9} parent=11 // pred_region
        _
      $region28: #{run_train.9} parent=11 // pred_fallthru
        _
      // Predicated region
      $region29: #{run_train.9} parent=11 // pred_check
        %p317 = pneg %p149
      $region30: #{run_train.9} parent=11 // pred_check_branch
        %319 = sbr.rel (%p317) target = $region32
      $region31: #{run_train.9} parent=11 // pred_region
        _
      $region32: #{run_train.9} parent=11 // pred_fallthru
        _
      // Predicated region
      $region33: #{run_train.9} parent=11 // pred_check
        %p320 = pneg %p170
      $region34: #{run_train.9} parent=11 // pred_check_branch
        %322 = sbr.rel (%p320) target = $region36
      $region35: #{run_train.9} parent=11 // pred_region
        _
      $region36: #{run_train.9} parent=11 // pred_fallthru
        _
      // Predicated region
      $region37: #{run_train.9} parent=11 // pred_check
        %p323 = pneg %p191
      $region38: #{run_train.9} parent=11 // pred_check_branch
        %325 = sbr.rel (%p323) target = $region40
      $region39: #{run_train.9} parent=11 // pred_region
        _
      $region40: #{run_train.9} parent=11 // pred_fallthru
        _
      // Predicated region
      $region41: #{run_train.9} parent=11 // pred_check
        %p326 = pneg %p238
      $region42: #{run_train.9} parent=11 // pred_check_branch
        %328 = sbr.rel (%p326) target = $region44
      $region43: #{run_train.9} parent=11 // pred_region
        _
      $region44: #{run_train.9} parent=11 // pred_fallthru
        _
    $region12: #{run_train.9} parent=5 // pred_fallthru
      _
    %p329 = scmp.lt.s32.totalorder %s18, 2
    // Predicated region
    $region45: #{run_train.9} parent=5 // pred_check
      %p330 = pneg %p329
    $region46: #{run_train.9} parent=5 // pred_check_branch
      %332 = sbr.rel (%p330) target = $region48
    $region47: #{run_train.9} parent=5 // pred_region
      // Predicated region
      $region49: #{run_train.9} parent=47 // pred_check
        %p333 = pneg %p38
      $region50: #{run_train.9} parent=47 // pred_check_branch
        %335 = sbr.rel (%p333) target = $region52
      $region51: #{run_train.9} parent=47 // pred_region
        %p336 = scmp.lt.s32.totalorder %s18, 1
        %s337 = scalar_select %p336, %s18, 1
        %s338 = smul.addr %s337, 8
        %s339 = smul.addr %s338, 8
        %s340 = scalar_lea.vmem %s0, %s339
      $region52: #{run_train.9} parent=47 // pred_fallthru
        _
      // Predicated region
      $region53: #{run_train.9} parent=47 // pred_check
        %p341 = pneg %p211
      $region54: #{run_train.9} parent=47 // pred_check_branch
        %343 = sbr.rel (%p341) target = $region56
      $region55: #{run_train.9} parent=47 // pred_region
        %p344 = scmp.lt.s32.totalorder %s18, 1
        %s345 = scalar_select %p344, %s18, 1
        %s346 = smul.addr %s345, 8
        %s347 = smul.addr %s346, 8
        %s348 = scalar_lea.vmem %s8, %s347
      $region56: #{run_train.9} parent=47 // pred_fallthru
        _
    $region48: #{run_train.9} parent=5 // pred_fallthru
      _
    %p349 = scmp.le.s32.totalorder 1, %s18
    %p350 = scmp.lt.s32.totalorder %s18, 3
    %p351 = pnand %p349, %p350
    %p352 = pneg %p351
    // Predicated region
    $region57: #{run_train.9} parent=5 // pred_check
      _
    $region58: #{run_train.9} parent=5 // pred_check_branch
      %354 = sbr.rel (%p351) target = $region60
    $region59: #{run_train.9} parent=5 // pred_region
      %s355 = ssub.s32 %s18, 1
      %p356 = scmp.lt.s32.totalorder %s23, 1
      %s357 = scalar_select %p356, %s23, 1
      %s358 = smul.addr %s357, 8
      %s359 = smul.addr %s358, 8
      %s360 = scalar_lea.vmem %s0, %s359
      %p361 = pneg %p44
      %p362 = pneg %p41
      %p363 = pneg %p65
      %p364 = pneg %p62
      %p365 = pneg %p86
      %p366 = pneg %p83
      %p367 = pneg %p107
      %p368 = pneg %p104
      %p369 = pneg %p128
      %p370 = pneg %p125
      %p371 = pneg %p149
      %p372 = pneg %p146
      %p373 = pneg %p170
      %p374 = pneg %p167
      %p375 = pneg %p191
      %p376 = pneg %p188
      %p377 = scmp.lt.s32.totalorder %s23, 1
      %s378 = scalar_select %p377, %s23, 1
      %s379 = smul.addr %s378, 8
      %s380 = smul.addr %s379, 8
      %s381 = scalar_lea.vmem %s8, %s380
      %p382 = pneg %p217
      %p383 = pneg %p214
      %p384 = pneg %p238
      %p385 = pneg %p235
      %p386 = pneg %p264
      %p387 = pneg %p261
      %p388 = scmp.lt.s32.totalorder %s23, 1
      %s389 = scalar_select %p388, %s23, 1
      %s390 = smul.addr %s389, 8
      %s391 = scalar_lea.vmem %s10, %s390
      %p392 = pneg %p290
      %p393 = pneg %p287
      %p394 = scmp.lt.s32.totalorder %s23, 1
      %s395 = scalar_select %p394, %s23, 1
      %s396 = smul.addr %s395, 4
      %s397 = scalar_lea.vmem %s11, %s396
      %p398 = scmp.lt.s32.totalorder %s23, 1
      %s399 = scalar_select %p398, %s23, 1
      %s400 = smul.addr %s399, 8
      %s401 = smul.addr %s400, 8
      %s402 = scalar_lea.vmem %s0, %s401
      %p403 = scmp.lt.s32.totalorder %s23, 1
      %s404 = scalar_select %p403, %s23, 1
      %s405 = smul.addr %s404, 8
      %s406 = smul.addr %s405, 8
      %s407 = scalar_lea.vmem %s8, %s406
      %p408 = scmp.lt.s32.totalorder %s23, 1
      %s409 = scalar_select %p408, %s23, 1
      %s410 = smul.addr %s409, 8
      %s411 = scalar_lea.vmem %s10, %s410
      %p412 = scmp.lt.s32.totalorder %s23, 1
      %s413 = scalar_select %p412, %s23, 1
      %s414 = smul.addr %s413, 4
      %s415 = scalar_lea.vmem %s11, %s414
      %v416 = vld [vmem:[%s402] sm:$0xff]
      %v417 = vld [vmem:[%s402 + $0x8] sm:$0xff]
      %v418 = vld [vmem:[%s402 + $0x10] sm:$0xff]
      %v419 = vld [vmem:[%s402 + $0x18] sm:$0xff]
      %v420 = vld [vmem:[%s402 + $0x20] sm:$0xff]
      %v421 = vld [vmem:[%s402 + $0x28] sm:$0xff]
      %v422 = vld [vmem:[%s402 + $0x30] sm:$0xff]
      %v423 = vld [vmem:[%s402 + $0x38] sm:$0xff]
      %v424 = vld [vmem:[%s1] sm:$0xff]
      %v425 = vld [vmem:[%s1 + $0x8] sm:$0xff]
      %v426 = vld [vmem:[%s1 + $0x10] sm:$0xff]
      %v427 = vld [vmem:[%s1 + $0x18] sm:$0xff]
      %v428 = vld [vmem:[%s1 + $0x20] sm:$0xff]
      %v429 = vld [vmem:[%s1 + $0x28] sm:$0xff]
      %v430 = vld [vmem:[%s1 + $0x30] sm:$0xff]
      %v431 = vld [vmem:[%s1 + $0x38] sm:$0xff]
      %v432 = vld [vmem:[%s1 + $0x40] sm:$0xff]
      %v433 = vld [vmem:[%s1 + $0x48] sm:$0xff]
      %v434 = vld [vmem:[%s1 + $0x50] sm:$0xff]
      %v435 = vld [vmem:[%s1 + $0x58] sm:$0xff]
      %v436 = vld [vmem:[%s1 + $0x60] sm:$0xff]
      %v437 = vld [vmem:[%s1 + $0x68] sm:$0xf]
      %v438 = vld [vmem:[%s2] sm:$0x1]
      %v440 = vlaneseq
      %v441 = vshrl.u32 %v440, 7
      %v442 = vsub.s32 0, %v441
      %v443 = vrot.slane %v438, %v442
      %vm445 = vcmask 883712
      %v447 = vsel %vm445, %v416, 0
      %v450 = vsel %vm445, %v417, 0
      %v453 = vsel %vm445, %v418, 0
      %v456 = vsel %vm445, %v419, 0
      %v459 = vsel %vm445, %v420, 0
      %v462 = vsel %vm445, %v421, 0
      %v465 = vsel %vm445, %v422, 0
      %v468 = vsel %vm445, %v423, 0
      %vm470 = vcmask 1043456
      %v472 = vsel %vm470, %v437, 0
      %474 = vmatprep.subr.mxu0 0.0
      %475 = vmatpush1.msra.mxu0 0.0
      %476 = vmatprep.subr.mxu0 0.0
      %477 = vmatpush1.msra.mxu0 0.0
      %478 = vmatprep.subr.mxu0 0.0
      %479 = vmatpush1.msra.mxu0 %v472
      %480 = vmatprep.subr.mxu0 0.0
      %481 = vmatpush1.msra.mxu0 %v436
      %482 = vmatprep.subr.mxu0 0.0
      %483 = vmatpush1.msra.mxu0 %v435
      %484 = vmatprep.subr.mxu0 0.0
      %485 = vmatpush1.msra.mxu0 %v434
      %486 = vmatprep.subr.mxu0 0.0
      %487 = vmatpush1.msra.mxu0 %v433
      %488 = vmatprep.subr.mxu0 0.0
      %489 = vmatpush1.msra.mxu0 %v432
      %490 = vmatprep.subr.mxu0 0.0
      %491 = vmatpush1.msra.mxu0 %v431
      %492 = vmatprep.subr.mxu0 0.0
      %493 = vmatpush1.msra.mxu0 %v430
      %494 = vmatprep.subr.mxu0 0.0
      %495 = vmatpush1.msra.mxu0 %v429
      %496 = vmatprep.subr.mxu0 0.0
      %497 = vmatpush1.msra.mxu0 %v428
      %498 = vmatprep.subr.mxu0 0.0
      %499 = vmatpush1.msra.mxu0 %v427
      %500 = vmatprep.subr.mxu0 0.0
      %501 = vmatpush1.msra.mxu0 %v426
      %502 = vmatprep.subr.mxu0 0.0
      %503 = vmatpush1.msra.mxu0 %v425
      %504 = vmatprep.subr.mxu0 0.0
      %505 = vmatpush1.msra.mxu0 %v424
      %506 = vmatprep.subr.mxu0 0.0
      %507 = vmatpush2.msra.mxu0 0.0
      %508 = vmatprep.subr.mxu0 0.0
      %509 = vmatpush2.msra.mxu0 0.0
      %510 = vmatprep.subr.mxu0 0.0
      %511 = vmatpush2.msra.mxu0 0.0
      %512 = vmatprep.subr.mxu0 0.0
      %513 = vmatpush2.msra.mxu0 0.0
      %514 = vmatprep.subr.mxu0 0.0
      %515 = vmatpush2.msra.mxu0 0.0
      %516 = vmatprep.subr.mxu0 0.0
      %517 = vmatpush2.msra.mxu0 0.0
      %518 = vmatprep.subr.mxu0 0.0
      %519 = vmatpush2.msra.mxu0 0.0
      %520 = vmatprep.subr.mxu0 0.0
      %521 = vmatpush2.msra.mxu0 0.0
      %522 = vmatprep.subr.mxu0 0.0
      %523 = vmatpush2.msra.mxu0 0.0
      %524 = vmatprep.subr.mxu0 0.0
      %525 = vmatpush2.msra.mxu0 0.0
      %526 = vmatprep.subr.mxu0 0.0
      %527 = vmatpush2.msra.mxu0 0.0
      %528 = vmatprep.subr.mxu0 0.0
      %529 = vmatpush2.msra.mxu0 0.0
      %530 = vmatprep.subr.mxu0 0.0
      %531 = vmatpush2.msra.mxu0 0.0
      %532 = vmatprep.subr.mxu0 0.0
      %533 = vmatpush2.msra.mxu0 0.0
      %534 = vmatprep.subr.mxu0 0.0
      %535 = vmatpush2.msra.mxu0 0.0
      %536 = vmatprep.subr.mxu0 0.0
      %537 = vmatpush2.msra.mxu0 0.0
      %538 = vmatprep.mubr.f32.mxu0 0.0
      %539 = vmatmul.mubr.f32.gmra.mxu0 %v447
      %v540 = vpop.f32.mrf.mxu0
      %v541 = vadd.f32 %v443, %v540
      %v542 = vpop.f32.mrf.mxu0
      %543 = vmatprep.mubr.f32.mxu0 0.0
      %544 = vmatmul.mubr.f32.gmra.mxu0 %v450
      %v545 = vpop.f32.mrf.mxu0
      %v546 = vadd.f32 %v443, %v545
      %v547 = vpop.f32.mrf.mxu0
      %548 = vmatprep.mubr.f32.mxu0 0.0
      %549 = vmatmul.mubr.f32.gmra.mxu0 %v453
      %v550 = vpop.f32.mrf.mxu0
      %v551 = vadd.f32 %v443, %v550
      %v552 = vpop.f32.mrf.mxu0
      %553 = vmatprep.mubr.f32.mxu0 0.0
      %554 = vmatmul.mubr.f32.gmra.mxu0 %v456
      %v555 = vpop.f32.mrf.mxu0
      %v556 = vadd.f32 %v443, %v555
      %v557 = vpop.f32.mrf.mxu0
      %558 = vmatprep.mubr.f32.mxu0 0.0
      %559 = vmatmul.mubr.f32.gmra.mxu0 %v459
      %v560 = vpop.f32.mrf.mxu0
      %v561 = vadd.f32 %v443, %v560
      %v562 = vpop.f32.mrf.mxu0
      %563 = vmatprep.mubr.f32.mxu0 0.0
      %564 = vmatmul.mubr.f32.gmra.mxu0 %v462
      %v565 = vpop.f32.mrf.mxu0
      %v566 = vadd.f32 %v443, %v565
      %v567 = vpop.f32.mrf.mxu0
      %568 = vmatprep.mubr.f32.mxu0 0.0
      %569 = vmatmul.mubr.f32.gmra.mxu0 %v465
      %v570 = vpop.f32.mrf.mxu0
      %v571 = vadd.f32 %v443, %v570
      %v572 = vpop.f32.mrf.mxu0
      %573 = vmatprep.mubr.f32.mxu0 0.0
      %574 = vmatmul.mubr.f32.gmra.mxu0 %v468
      %v575 = vpop.f32.mrf.mxu0
      %v576 = vadd.f32 %v443, %v575
      %v577 = vpop.f32.mrf.mxu0
      %578 = vdwg.mxu0
      %vm579 = vcmp.gt.f32.partialorder %v541, 0.0
      %vm580 = vcmp.gt.f32.partialorder %v546, 0.0
      %vm581 = vcmp.gt.f32.partialorder %v551, 0.0
      %vm582 = vcmp.gt.f32.partialorder %v556, 0.0
      %vm583 = vcmp.gt.f32.partialorder %v561, 0.0
      %vm584 = vcmp.gt.f32.partialorder %v566, 0.0
      %vm585 = vcmp.gt.f32.partialorder %v571, 0.0
      %vm586 = vcmp.gt.f32.partialorder %v576, 0.0
      %v587 = vmul.f32 %v541, 0.01
      %v588 = vmul.f32 %v546, 0.01
      %v589 = vmul.f32 %v551, 0.01
      %v590 = vmul.f32 %v556, 0.01
      %v591 = vmul.f32 %v561, 0.01
      %v592 = vmul.f32 %v566, 0.01
      %v593 = vmul.f32 %v571, 0.01
      %v594 = vmul.f32 %v576, 0.01
      %v595 = vsel %vm579, %v541, %v587
      %v596 = vsel %vm580, %v546, %v588
      %v597 = vsel %vm581, %v551, %v589
      %v598 = vsel %vm582, %v556, %v590
      %v599 = vsel %vm583, %v561, %v591
      %v600 = vsel %vm584, %v566, %v592
      %v601 = vsel %vm585, %v571, %v593
      %v602 = vsel %vm586, %v576, %v594
      %v603 = vld [vmem:[%s3] sm:$0xff]
      %v604 = vld [vmem:[%s3 + $0x8] sm:$0xff]
      %v605 = vld [vmem:[%s3 + $0x10] sm:$0xff]
      %v606 = vld [vmem:[%s3 + $0x18] sm:$0xff]
      %v607 = vld [vmem:[%s3 + $0x20] sm:$0xff]
      %v608 = vld [vmem:[%s3 + $0x28] sm:$0xff]
      %v609 = vld [vmem:[%s3 + $0x30] sm:$0xff]
      %v610 = vld [vmem:[%s3 + $0x38] sm:$0xff]
      %v611 = vld [vmem:[%s3 + $0x40] sm:$0xff]
      %v612 = vld [vmem:[%s3 + $0x48] sm:$0xff]
      %v613 = vld [vmem:[%s3 + $0x50] sm:$0xff]
      %v614 = vld [vmem:[%s3 + $0x58] sm:$0xff]
      %v615 = vld [vmem:[%s3 + $0x60] sm:$0xff]
      %v616 = vld [vmem:[%s3 + $0x68] sm:$0xff]
      %v617 = vld [vmem:[%s3 + $0x70] sm:$0xff]
      %v618 = vld [vmem:[%s3 + $0x78] sm:$0xff]
      %v619 = vld [vmem:[%s3 + $0x80] sm:$0xff]
      %v620 = vld [vmem:[%s3 + $0x88] sm:$0xff]
      %v621 = vld [vmem:[%s3 + $0x90] sm:$0xff]
      %v622 = vld [vmem:[%s3 + $0x98] sm:$0xff]
      %v623 = vld [vmem:[%s3 + $0xa0] sm:$0xff]
      %v624 = vld [vmem:[%s3 + $0xa8] sm:$0xff]
      %v625 = vld [vmem:[%s3 + $0xb0] sm:$0xff]
      %v626 = vld [vmem:[%s3 + $0xb8] sm:$0xff]
      %v627 = vld [vmem:[%s3 + $0xc0] sm:$0xff]
      %v628 = vld [vmem:[%s3 + $0xc8] sm:$0xff]
      %v629 = vld [vmem:[%s3 + $0xd0] sm:$0xff]
      %vm630 = vcmask 523264
      %v632 = vsel %vm630, %v603, 0
      %v635 = vsel %vm630, %v604, 0
      %v638 = vsel %vm630, %v605, 0
      %v641 = vsel %vm630, %v606, 0
      %v644 = vsel %vm630, %v607, 0
      %v647 = vsel %vm630, %v608, 0
      %v650 = vsel %vm630, %v609, 0
      %v653 = vsel %vm630, %v610, 0
      %v656 = vsel %vm630, %v611, 0
      %v659 = vsel %vm630, %v612, 0
      %v662 = vsel %vm630, %v613, 0
      %v665 = vsel %vm630, %v614, 0
      %v668 = vsel %vm630, %v615, 0
      %v671 = vsel %vm630, %v616, 0
      %v674 = vsel %vm630, %v617, 0
      %v677 = vsel %vm630, %v618, 0
      %v680 = vsel %vm630, %v619, 0
      %v683 = vsel %vm630, %v620, 0
      %v686 = vsel %vm630, %v621, 0
      %v689 = vsel %vm630, %v622, 0
      %v692 = vsel %vm630, %v623, 0
      %v695 = vsel %vm630, %v624, 0
      %v698 = vsel %vm630, %v625, 0
      %v701 = vsel %vm630, %v626, 0
      %v704 = vsel %vm630, %v627, 0
      %v707 = vsel %vm630, %v628, 0
      %v710 = vsel %vm630, %v629, 0
      %712 = vmatprep.subr.mxu0 0.0
      %713 = vmatpush1.msra.mxu0 0.0
      %714 = vmatprep.subr.mxu0 0.0
      %715 = vmatpush1.msra.mxu0 0.0
      %716 = vmatprep.subr.mxu0 0.0
      %717 = vmatpush1.msra.mxu0 0.0
      %718 = vmatprep.subr.mxu0 0.0
      %719 = vmatpush1.msra.mxu0 0.0
      %720 = vmatprep.subr.mxu0 0.0
      %721 = vmatpush1.msra.mxu0 0.0
      %722 = vmatprep.subr.mxu0 0.0
      %723 = vmatpush1.msra.mxu0 0.0
      %724 = vmatprep.subr.mxu0 0.0
      %725 = vmatpush1.msra.mxu0 0.0
      %726 = vmatprep.subr.mxu0 0.0
      %727 = vmatpush1.msra.mxu0 0.0
      %728 = vmatprep.subr.mxu0 0.0
      %729 = vmatpush1.msra.mxu0 %v602
      %730 = vmatprep.subr.mxu0 0.0
      %731 = vmatpush1.msra.mxu0 %v601
      %732 = vmatprep.subr.mxu0 0.0
      %733 = vmatpush1.msra.mxu0 %v600
      %734 = vmatprep.subr.mxu0 0.0
      %735 = vmatpush1.msra.mxu0 %v599
      %736 = vmatprep.subr.mxu0 0.0
      %737 = vmatpush1.msra.mxu0 %v598
      %738 = vmatprep.subr.mxu0 0.0
      %739 = vmatpush1.msra.mxu0 %v597
      %740 = vmatprep.subr.mxu0 0.0
      %741 = vmatpush1.msra.mxu0 %v596
      %742 = vmatprep.subr.mxu0 0.0
      %743 = vmatpush1.msra.mxu0 %v595
      %744 = vmatprep.subr.mxu0 0.0
      %745 = vmatpush2.msra.mxu0 0.0
      %746 = vmatprep.subr.mxu0 0.0
      %747 = vmatpush2.msra.mxu0 0.0
      %748 = vmatprep.subr.mxu0 0.0
      %749 = vmatpush2.msra.mxu0 0.0
      %750 = vmatprep.subr.mxu0 0.0
      %751 = vmatpush2.msra.mxu0 0.0
      %752 = vmatprep.subr.mxu0 0.0
      %753 = vmatpush2.msra.mxu0 0.0
      %754 = vmatprep.subr.mxu0 0.0
      %755 = vmatpush2.msra.mxu0 0.0
      %756 = vmatprep.subr.mxu0 0.0
      %757 = vmatpush2.msra.mxu0 0.0
      %758 = vmatprep.subr.mxu0 0.0
      %759 = vmatpush2.msra.mxu0 0.0
      %760 = vmatprep.subr.mxu0 0.0
      %761 = vmatpush2.msra.mxu0 0.0
      %762 = vmatprep.subr.mxu0 0.0
      %763 = vmatpush2.msra.mxu0 0.0
      %764 = vmatprep.subr.mxu0 0.0
      %765 = vmatpush2.msra.mxu0 0.0
      %766 = vmatprep.subr.mxu0 0.0
      %767 = vmatpush2.msra.mxu0 0.0
      %768 = vmatprep.subr.mxu0 0.0
      %769 = vmatpush2.msra.mxu0 0.0
      %770 = vmatprep.subr.mxu0 0.0
      %771 = vmatpush2.msra.mxu0 0.0
      %772 = vmatprep.subr.mxu0 0.0
      %773 = vmatpush2.msra.mxu0 0.0
      %774 = vmatprep.subr.mxu0 0.0
      %775 = vmatpush2.msra.mxu0 0.0
      %776 = vmatprep.mubr.f32.mxu0 0.0
      %777 = vmatmul.mubr.f32.gmra.mxu0 %v632
      %v778 = vpop.f32.mrf.mxu0
      %v779 = vadd.f32 0.0, %v778
      %v780 = vpop.f32.mrf.mxu0
      %781 = vmatprep.mubr.f32.mxu0 0.0
      %782 = vmatmul.mubr.f32.gmra.mxu0 %v635
      %v783 = vpop.f32.mrf.mxu0
      %v784 = vadd.f32 0.0, %v783
      %v785 = vpop.f32.mrf.mxu0
      %786 = vmatprep.mubr.f32.mxu0 0.0
      %787 = vmatmul.mubr.f32.gmra.mxu0 %v638
      %v788 = vpop.f32.mrf.mxu0
      %v789 = vadd.f32 0.0, %v788
      %v790 = vpop.f32.mrf.mxu0
      %791 = vmatprep.mubr.f32.mxu0 0.0
      %792 = vmatmul.mubr.f32.gmra.mxu0 %v641
      %v793 = vpop.f32.mrf.mxu0
      %v794 = vadd.f32 0.0, %v793
      %v795 = vpop.f32.mrf.mxu0
      %796 = vmatprep.mubr.f32.mxu0 0.0
      %797 = vmatmul.mubr.f32.gmra.mxu0 %v644
      %v798 = vpop.f32.mrf.mxu0
      %v799 = vadd.f32 0.0, %v798
      %v800 = vpop.f32.mrf.mxu0
      %801 = vmatprep.mubr.f32.mxu0 0.0
      %802 = vmatmul.mubr.f32.gmra.mxu0 %v647
      %v803 = vpop.f32.mrf.mxu0
      %v804 = vadd.f32 0.0, %v803
      %v805 = vpop.f32.mrf.mxu0
      %806 = vmatprep.mubr.f32.mxu0 0.0
      %807 = vmatmul.mubr.f32.gmra.mxu0 %v650
      %v808 = vpop.f32.mrf.mxu0
      %v809 = vadd.f32 0.0, %v808
      %v810 = vpop.f32.mrf.mxu0
      %811 = vmatprep.mubr.f32.mxu0 0.0
      %812 = vmatmul.mubr.f32.gmra.mxu0 %v653
      %v813 = vpop.f32.mrf.mxu0
      %v814 = vadd.f32 0.0, %v813
      %v815 = vpop.f32.mrf.mxu0
      %816 = vmatprep.mubr.f32.mxu0 0.0
      %817 = vmatmul.mubr.f32.gmra.mxu0 %v656
      %v818 = vpop.f32.mrf.mxu0
      %v819 = vadd.f32 0.0, %v818
      %v820 = vpop.f32.mrf.mxu0
      %821 = vmatprep.mubr.f32.mxu0 0.0
      %822 = vmatmul.mubr.f32.gmra.mxu0 %v659
      %v823 = vpop.f32.mrf.mxu0
      %v824 = vadd.f32 0.0, %v823
      %v825 = vpop.f32.mrf.mxu0
      %826 = vmatprep.mubr.f32.mxu0 0.0
      %827 = vmatmul.mubr.f32.gmra.mxu0 %v662
      %v828 = vpop.f32.mrf.mxu0
      %v829 = vadd.f32 0.0, %v828
      %v830 = vpop.f32.mrf.mxu0
      %831 = vmatprep.mubr.f32.mxu0 0.0
      %832 = vmatmul.mubr.f32.gmra.mxu0 %v665
      %v833 = vpop.f32.mrf.mxu0
      %v834 = vadd.f32 0.0, %v833
      %v835 = vpop.f32.mrf.mxu0
      %836 = vmatprep.mubr.f32.mxu0 0.0
      %837 = vmatmul.mubr.f32.gmra.mxu0 %v668
      %v838 = vpop.f32.mrf.mxu0
      %v839 = vadd.f32 0.0, %v838
      %v840 = vpop.f32.mrf.mxu0
      %841 = vmatprep.mubr.f32.mxu0 0.0
      %842 = vmatmul.mubr.f32.gmra.mxu0 %v671
      %v843 = vpop.f32.mrf.mxu0
      %v844 = vadd.f32 0.0, %v843
      %v845 = vpop.f32.mrf.mxu0
      %846 = vmatprep.mubr.f32.mxu0 0.0
      %847 = vmatmul.mubr.f32.gmra.mxu0 %v674
      %v848 = vpop.f32.mrf.mxu0
      %v849 = vadd.f32 0.0, %v848
      %v850 = vpop.f32.mrf.mxu0
      %851 = vmatprep.mubr.f32.mxu0 0.0
      %852 = vmatmul.mubr.f32.gmra.mxu0 %v677
      %v853 = vpop.f32.mrf.mxu0
      %v854 = vadd.f32 0.0, %v853
      %v855 = vpop.f32.mrf.mxu0
      %856 = vmatprep.mubr.f32.mxu0 0.0
      %857 = vmatmul.mubr.f32.gmra.mxu0 %v680
      %v858 = vpop.f32.mrf.mxu0
      %v859 = vadd.f32 0.0, %v858
      %v860 = vpop.f32.mrf.mxu0
      %861 = vmatprep.mubr.f32.mxu0 0.0
      %862 = vmatmul.mubr.f32.gmra.mxu0 %v683
      %v863 = vpop.f32.mrf.mxu0
      %v864 = vadd.f32 0.0, %v863
      %v865 = vpop.f32.mrf.mxu0
      %866 = vmatprep.mubr.f32.mxu0 0.0
      %867 = vmatmul.mubr.f32.gmra.mxu0 %v686
      %v868 = vpop.f32.mrf.mxu0
      %v869 = vadd.f32 0.0, %v868
      %v870 = vpop.f32.mrf.mxu0
      %871 = vmatprep.mubr.f32.mxu0 0.0
      %872 = vmatmul.mubr.f32.gmra.mxu0 %v689
      %v873 = vpop.f32.mrf.mxu0
      %v874 = vadd.f32 0.0, %v873
      %v875 = vpop.f32.mrf.mxu0
      %876 = vmatprep.mubr.f32.mxu0 0.0
      %877 = vmatmul.mubr.f32.gmra.mxu0 %v692
      %v878 = vpop.f32.mrf.mxu0
      %v879 = vadd.f32 0.0, %v878
      %v880 = vpop.f32.mrf.mxu0
      %881 = vmatprep.mubr.f32.mxu0 0.0
      %882 = vmatmul.mubr.f32.gmra.mxu0 %v695
      %v883 = vpop.f32.mrf.mxu0
      %v884 = vadd.f32 0.0, %v883
      %v885 = vpop.f32.mrf.mxu0
      %886 = vmatprep.mubr.f32.mxu0 0.0
      %887 = vmatmul.mubr.f32.gmra.mxu0 %v698
      %v888 = vpop.f32.mrf.mxu0
      %v889 = vadd.f32 0.0, %v888
      %v890 = vpop.f32.mrf.mxu0
      %891 = vmatprep.mubr.f32.mxu0 0.0
      %892 = vmatmul.mubr.f32.gmra.mxu0 %v701
      %v893 = vpop.f32.mrf.mxu0
      %v894 = vadd.f32 0.0, %v893
      %v895 = vpop.f32.mrf.mxu0
      %896 = vmatprep.mubr.f32.mxu0 0.0
      %897 = vmatmul.mubr.f32.gmra.mxu0 %v704
      %v898 = vpop.f32.mrf.mxu0
      %v899 = vadd.f32 0.0, %v898
      %v900 = vpop.f32.mrf.mxu0
      %901 = vmatprep.mubr.f32.mxu0 0.0
      %902 = vmatmul.mubr.f32.gmra.mxu0 %v707
      %v903 = vpop.f32.mrf.mxu0
      %v904 = vadd.f32 0.0, %v903
      %v905 = vpop.f32.mrf.mxu0
      %906 = vmatprep.mubr.f32.mxu0 0.0
      %907 = vmatmul.mubr.f32.gmra.mxu0 %v710
      %v908 = vpop.f32.mrf.mxu0
      %v909 = vadd.f32 0.0, %v908
      %v910 = vpop.f32.mrf.mxu0
      %911 = vdwg.mxu0
      %v912 = vld [vmem:[%s4] sm:$0xff]
      %v913 = vld [vmem:[%s4 + $0x8] sm:$0xff]
      %s914 = scalar_lea.vmem %s4, 16
      %v915 = vld [vmem:[%s914] sm:$0xff]
      %v916 = vld [vmem:[%s914 + $0x8] sm:$0xff]
      %vm917 = vcmask 130048
      %v919 = vsel %vm917, %v784, 0
      %921 = vmatprep.subr.mxu0 0.0
      %922 = vmatpush1.msra.mxu0 0.0
      %923 = vmatprep.subr.mxu0 0.0
      %924 = vmatpush1.msra.mxu0 0.0
      %925 = vmatprep.subr.mxu0 0.0
      %926 = vmatpush1.msra.mxu0 0.0
      %927 = vmatprep.subr.mxu0 0.0
      %928 = vmatpush1.msra.mxu0 0.0
      %929 = vmatprep.subr.mxu0 0.0
      %930 = vmatpush1.msra.mxu0 0.0
      %931 = vmatprep.subr.mxu0 0.0
      %932 = vmatpush1.msra.mxu0 0.0
      %933 = vmatprep.subr.mxu0 0.0
      %934 = vmatpush1.msra.mxu0 0.0
      %935 = vmatprep.subr.mxu0 0.0
      %936 = vmatpush1.msra.mxu0 0.0
      %937 = vmatprep.subr.mxu0 0.0
      %938 = vmatpush1.msra.mxu0 0.0
      %939 = vmatprep.subr.mxu0 0.0
      %940 = vmatpush1.msra.mxu0 0.0
      %941 = vmatprep.subr.mxu0 0.0
      %942 = vmatpush1.msra.mxu0 0.0
      %943 = vmatprep.subr.mxu0 0.0
      %944 = vmatpush1.msra.mxu0 0.0
      %945 = vmatprep.subr.mxu0 0.0
      %946 = vmatpush1.msra.mxu0 0.0
      %947 = vmatprep.subr.mxu0 0.0
      %948 = vmatpush1.msra.mxu0 0.0
      %949 = vmatprep.subr.mxu0 0.0
      %950 = vmatpush1.msra.mxu0 %v916
      %951 = vmatprep.subr.mxu0 0.0
      %952 = vmatpush1.msra.mxu0 %v915
      %953 = vmatprep.subr.mxu0 0.0
      %954 = vmatpush2.msra.mxu0 0.0
      %955 = vmatprep.subr.mxu0 0.0
      %956 = vmatpush2.msra.mxu0 0.0
      %957 = vmatprep.subr.mxu0 0.0
      %958 = vmatpush2.msra.mxu0 0.0
      %959 = vmatprep.subr.mxu0 0.0
      %960 = vmatpush2.msra.mxu0 0.0
      %961 = vmatprep.subr.mxu0 0.0
      %962 = vmatpush2.msra.mxu0 0.0
      %963 = vmatprep.subr.mxu0 0.0
      %964 = vmatpush2.msra.mxu0 0.0
      %965 = vmatprep.subr.mxu0 0.0
      %966 = vmatpush2.msra.mxu0 0.0
      %967 = vmatprep.subr.mxu0 0.0
      %968 = vmatpush2.msra.mxu0 0.0
      %969 = vmatprep.subr.mxu0 0.0
      %970 = vmatpush2.msra.mxu0 0.0
      %971 = vmatprep.subr.mxu0 0.0
      %972 = vmatpush2.msra.mxu0 0.0
      %973 = vmatprep.subr.mxu0 0.0
      %974 = vmatpush2.msra.mxu0 0.0
      %975 = vmatprep.subr.mxu0 0.0
      %976 = vmatpush2.msra.mxu0 0.0
      %977 = vmatprep.subr.mxu0 0.0
      %978 = vmatpush2.msra.mxu0 0.0
      %979 = vmatprep.subr.mxu0 0.0
      %980 = vmatpush2.msra.mxu0 0.0
      %981 = vmatprep.subr.mxu0 0.0
      %982 = vmatpush2.msra.mxu0 0.0
      %983 = vmatprep.subr.mxu0 0.0
      %984 = vmatpush2.msra.mxu0 0.0
      %985 = vmatprep.mubr.f32.mxu0 0.0
      %986 = vmatmul.mubr.f32.gmra.mxu0 %v919
      %v987 = vpop.f32.mrf.mxu0
      %v988 = vadd.f32 0.0, %v987
      %v989 = vpop.f32.mrf.mxu0
      %990 = vdwg.mxu0
      %v992 = vsel %vm917, %v779, 0
      %994 = vmatprep.subr.mxu0 0.0
      %995 = vmatpush1.msra.mxu0 0.0
      %996 = vmatprep.subr.mxu0 0.0
      %997 = vmatpush1.msra.mxu0 0.0
      %998 = vmatprep.subr.mxu0 0.0
      %999 = vmatpush1.msra.mxu0 0.0
      %1000 = vmatprep.subr.mxu0 0.0
      %1001 = vmatpush1.msra.mxu0 0.0
      %1002 = vmatprep.subr.mxu0 0.0
      %1003 = vmatpush1.msra.mxu0 0.0
      %1004 = vmatprep.subr.mxu0 0.0
      %1005 = vmatpush1.msra.mxu0 0.0
      %1006 = vmatprep.subr.mxu0 0.0
      %1007 = vmatpush1.msra.mxu0 0.0
      %1008 = vmatprep.subr.mxu0 0.0
      %1009 = vmatpush1.msra.mxu0 0.0
      %1010 = vmatprep.subr.mxu0 0.0
      %1011 = vmatpush1.msra.mxu0 0.0
      %1012 = vmatprep.subr.mxu0 0.0
      %1013 = vmatpush1.msra.mxu0 0.0
      %1014 = vmatprep.subr.mxu0 0.0
      %1015 = vmatpush1.msra.mxu0 0.0
      %1016 = vmatprep.subr.mxu0 0.0
      %1017 = vmatpush1.msra.mxu0 0.0
      %1018 = vmatprep.subr.mxu0 0.0
      %1019 = vmatpush1.msra.mxu0 0.0
      %1020 = vmatprep.subr.mxu0 0.0
      %1021 = vmatpush1.msra.mxu0 0.0
      %1022 = vmatprep.subr.mxu0 0.0
      %1023 = vmatpush1.msra.mxu0 %v913
      %1024 = vmatprep.subr.mxu0 0.0
      %1025 = vmatpush1.msra.mxu0 %v912
      %1026 = vmatprep.subr.mxu0 0.0
      %1027 = vmatpush2.msra.mxu0 0.0
      %1028 = vmatprep.subr.mxu0 0.0
      %1029 = vmatpush2.msra.mxu0 0.0
      %1030 = vmatprep.subr.mxu0 0.0
      %1031 = vmatpush2.msra.mxu0 0.0
      %1032 = vmatprep.subr.mxu0 0.0
      %1033 = vmatpush2.msra.mxu0 0.0
      %1034 = vmatprep.subr.mxu0 0.0
      %1035 = vmatpush2.msra.mxu0 0.0
      %1036 = vmatprep.subr.mxu0 0.0
      %1037 = vmatpush2.msra.mxu0 0.0
      %1038 = vmatprep.subr.mxu0 0.0
      %1039 = vmatpush2.msra.mxu0 0.0
      %1040 = vmatprep.subr.mxu0 0.0
      %1041 = vmatpush2.msra.mxu0 0.0
      %1042 = vmatprep.subr.mxu0 0.0
      %1043 = vmatpush2.msra.mxu0 0.0
      %1044 = vmatprep.subr.mxu0 0.0
      %1045 = vmatpush2.msra.mxu0 0.0
      %1046 = vmatprep.subr.mxu0 0.0
      %1047 = vmatpush2.msra.mxu0 0.0
      %1048 = vmatprep.subr.mxu0 0.0
      %1049 = vmatpush2.msra.mxu0 0.0
      %1050 = vmatprep.subr.mxu0 0.0
      %1051 = vmatpush2.msra.mxu0 0.0
      %1052 = vmatprep.subr.mxu0 0.0
      %1053 = vmatpush2.msra.mxu0 0.0
      %1054 = vmatprep.subr.mxu0 0.0
      %1055 = vmatpush2.msra.mxu0 0.0
      %1056 = vmatprep.subr.mxu0 0.0
      %1057 = vmatpush2.msra.mxu0 0.0
      %1058 = vmatprep.mubr.f32.mxu0 0.0
      %1059 = vmatmul.mubr.f32.gmra.mxu0 %v992
      %v1060 = vpop.f32.mrf.mxu0
      %v1061 = vadd.f32 %v988, %v1060
      %v1062 = vpop.f32.mrf.mxu0
      %1063 = vdwg.mxu0
      %s1064 = scalar_lea.vmem %s4, 32
      %v1065 = vld [vmem:[%s1064] sm:$0xff]
      %v1066 = vld [vmem:[%s1064 + $0x8] sm:$0xff]
      %v1068 = vsel %vm917, %v789, 0
      %1070 = vmatprep.subr.mxu0 0.0
      %1071 = vmatpush1.msra.mxu0 0.0
      %1072 = vmatprep.subr.mxu0 0.0
      %1073 = vmatpush1.msra.mxu0 0.0
      %1074 = vmatprep.subr.mxu0 0.0
      %1075 = vmatpush1.msra.mxu0 0.0
      %1076 = vmatprep.subr.mxu0 0.0
      %1077 = vmatpush1.msra.mxu0 0.0
      %1078 = vmatprep.subr.mxu0 0.0
      %1079 = vmatpush1.msra.mxu0 0.0
      %1080 = vmatprep.subr.mxu0 0.0
      %1081 = vmatpush1.msra.mxu0 0.0
      %1082 = vmatprep.subr.mxu0 0.0
      %1083 = vmatpush1.msra.mxu0 0.0
      %1084 = vmatprep.subr.mxu0 0.0
      %1085 = vmatpush1.msra.mxu0 0.0
      %1086 = vmatprep.subr.mxu0 0.0
      %1087 = vmatpush1.msra.mxu0 0.0
      %1088 = vmatprep.subr.mxu0 0.0
      %1089 = vmatpush1.msra.mxu0 0.0
      %1090 = vmatprep.subr.mxu0 0.0
      %1091 = vmatpush1.msra.mxu0 0.0
      %1092 = vmatprep.subr.mxu0 0.0
      %1093 = vmatpush1.msra.mxu0 0.0
      %1094 = vmatprep.subr.mxu0 0.0
      %1095 = vmatpush1.msra.mxu0 0.0
      %1096 = vmatprep.subr.mxu0 0.0
      %1097 = vmatpush1.msra.mxu0 0.0
      %1098 = vmatprep.subr.mxu0 0.0
      %1099 = vmatpush1.msra.mxu0 %v1066
      %1100 = vmatprep.subr.mxu0 0.0
      %1101 = vmatpush1.msra.mxu0 %v1065
      %1102 = vmatprep.subr.mxu0 0.0
      %1103 = vmatpush2.msra.mxu0 0.0
      %1104 = vmatprep.subr.mxu0 0.0
      %1105 = vmatpush2.msra.mxu0 0.0
      %1106 = vmatprep.subr.mxu0 0.0
      %1107 = vmatpush2.msra.mxu0 0.0
      %1108 = vmatprep.subr.mxu0 0.0
      %1109 = vmatpush2.msra.mxu0 0.0
      %1110 = vmatprep.subr.mxu0 0.0
      %1111 = vmatpush2.msra.mxu0 0.0
      %1112 = vmatprep.subr.mxu0 0.0
      %1113 = vmatpush2.msra.mxu0 0.0
      %1114 = vmatprep.subr.mxu0 0.0
      %1115 = vmatpush2.msra.mxu0 0.0
      %1116 = vmatprep.subr.mxu0 0.0
      %1117 = vmatpush2.msra.mxu0 0.0
      %1118 = vmatprep.subr.mxu0 0.0
      %1119 = vmatpush2.msra.mxu0 0.0
      %1120 = vmatprep.subr.mxu0 0.0
      %1121 = vmatpush2.msra.mxu0 0.0
      %1122 = vmatprep.subr.mxu0 0.0
      %1123 = vmatpush2.msra.mxu0 0.0
      %1124 = vmatprep.subr.mxu0 0.0
      %1125 = vmatpush2.msra.mxu0 0.0
      %1126 = vmatprep.subr.mxu0 0.0
      %1127 = vmatpush2.msra.mxu0 0.0
      %1128 = vmatprep.subr.mxu0 0.0
      %1129 = vmatpush2.msra.mxu0 0.0
      %1130 = vmatprep.subr.mxu0 0.0
      %1131 = vmatpush2.msra.mxu0 0.0
      %1132 = vmatprep.subr.mxu0 0.0
      %1133 = vmatpush2.msra.mxu0 0.0
      %1134 = vmatprep.mubr.f32.mxu0 0.0
      %1135 = vmatmul.mubr.f32.gmra.mxu0 %v1068
      %v1136 = vpop.f32.mrf.mxu0
      %v1137 = vadd.f32 0.0, %v1136
      %v1138 = vpop.f32.mrf.mxu0
      %1139 = vdwg.mxu0
      %v1140 = vadd.f32 %v1061, %v1137
      %s1141 = scalar_lea.vmem %s4, 48
      %v1142 = vld [vmem:[%s1141] sm:$0xff]
      %v1143 = vld [vmem:[%s1141 + $0x8] sm:$0xff]
      %v1145 = vsel %vm917, %v794, 0
      %1147 = vmatprep.subr.mxu0 0.0
      %1148 = vmatpush1.msra.mxu0 0.0
      %1149 = vmatprep.subr.mxu0 0.0
      %1150 = vmatpush1.msra.mxu0 0.0
      %1151 = vmatprep.subr.mxu0 0.0
      %1152 = vmatpush1.msra.mxu0 0.0
      %1153 = vmatprep.subr.mxu0 0.0
      %1154 = vmatpush1.msra.mxu0 0.0
      %1155 = vmatprep.subr.mxu0 0.0
      %1156 = vmatpush1.msra.mxu0 0.0
      %1157 = vmatprep.subr.mxu0 0.0
      %1158 = vmatpush1.msra.mxu0 0.0
      %1159 = vmatprep.subr.mxu0 0.0
      %1160 = vmatpush1.msra.mxu0 0.0
      %1161 = vmatprep.subr.mxu0 0.0
      %1162 = vmatpush1.msra.mxu0 0.0
      %1163 = vmatprep.subr.mxu0 0.0
      %1164 = vmatpush1.msra.mxu0 0.0
      %1165 = vmatprep.subr.mxu0 0.0
      %1166 = vmatpush1.msra.mxu0 0.0
      %1167 = vmatprep.subr.mxu0 0.0
      %1168 = vmatpush1.msra.mxu0 0.0
      %1169 = vmatprep.subr.mxu0 0.0
      %1170 = vmatpush1.msra.mxu0 0.0
      %1171 = vmatprep.subr.mxu0 0.0
      %1172 = vmatpush1.msra.mxu0 0.0
      %1173 = vmatprep.subr.mxu0 0.0
      %1174 = vmatpush1.msra.mxu0 0.0
      %1175 = vmatprep.subr.mxu0 0.0
      %1176 = vmatpush1.msra.mxu0 %v1143
      %1177 = vmatprep.subr.mxu0 0.0
      %1178 = vmatpush1.msra.mxu0 %v1142
      %1179 = vmatprep.subr.mxu0 0.0
      %1180 = vmatpush2.msra.mxu0 0.0
      %1181 = vmatprep.subr.mxu0 0.0
      %1182 = vmatpush2.msra.mxu0 0.0
      %1183 = vmatprep.subr.mxu0 0.0
      %1184 = vmatpush2.msra.mxu0 0.0
      %1185 = vmatprep.subr.mxu0 0.0
      %1186 = vmatpush2.msra.mxu0 0.0
      %1187 = vmatprep.subr.mxu0 0.0
      %1188 = vmatpush2.msra.mxu0 0.0
      %1189 = vmatprep.subr.mxu0 0.0
      %1190 = vmatpush2.msra.mxu0 0.0
      %1191 = vmatprep.subr.mxu0 0.0
      %1192 = vmatpush2.msra.mxu0 0.0
      %1193 = vmatprep.subr.mxu0 0.0
      %1194 = vmatpush2.msra.mxu0 0.0
      %1195 = vmatprep.subr.mxu0 0.0
      %1196 = vmatpush2.msra.mxu0 0.0
      %1197 = vmatprep.subr.mxu0 0.0
      %1198 = vmatpush2.msra.mxu0 0.0
      %1199 = vmatprep.subr.mxu0 0.0
      %1200 = vmatpush2.msra.mxu0 0.0
      %1201 = vmatprep.subr.mxu0 0.0
      %1202 = vmatpush2.msra.mxu0 0.0
      %1203 = vmatprep.subr.mxu0 0.0
      %1204 = vmatpush2.msra.mxu0 0.0
      %1205 = vmatprep.subr.mxu0 0.0
      %1206 = vmatpush2.msra.mxu0 0.0
      %1207 = vmatprep.subr.mxu0 0.0
      %1208 = vmatpush2.msra.mxu0 0.0
      %1209 = vmatprep.subr.mxu0 0.0
      %1210 = vmatpush2.msra.mxu0 0.0
      %1211 = vmatprep.mubr.f32.mxu0 0.0
      %1212 = vmatmul.mubr.f32.gmra.mxu0 %v1145
      %v1213 = vpop.f32.mrf.mxu0
      %v1214 = vadd.f32 0.0, %v1213
      %v1215 = vpop.f32.mrf.mxu0
      %1216 = vdwg.mxu0
      %v1217 = vadd.f32 %v1140, %v1214
      %s1218 = scalar_lea.vmem %s4, 64
      %v1219 = vld [vmem:[%s1218] sm:$0xff]
      %v1220 = vld [vmem:[%s1218 + $0x8] sm:$0xff]
      %v1222 = vsel %vm917, %v799, 0
      %1224 = vmatprep.subr.mxu0 0.0
      %1225 = vmatpush1.msra.mxu0 0.0
      %1226 = vmatprep.subr.mxu0 0.0
      %1227 = vmatpush1.msra.mxu0 0.0
      %1228 = vmatprep.subr.mxu0 0.0
      %1229 = vmatpush1.msra.mxu0 0.0
      %1230 = vmatprep.subr.mxu0 0.0
      %1231 = vmatpush1.msra.mxu0 0.0
      %1232 = vmatprep.subr.mxu0 0.0
      %1233 = vmatpush1.msra.mxu0 0.0
      %1234 = vmatprep.subr.mxu0 0.0
      %1235 = vmatpush1.msra.mxu0 0.0
      %1236 = vmatprep.subr.mxu0 0.0
      %1237 = vmatpush1.msra.mxu0 0.0
      %1238 = vmatprep.subr.mxu0 0.0
      %1239 = vmatpush1.msra.mxu0 0.0
      %1240 = vmatprep.subr.mxu0 0.0
      %1241 = vmatpush1.msra.mxu0 0.0
      %1242 = vmatprep.subr.mxu0 0.0
      %1243 = vmatpush1.msra.mxu0 0.0
      %1244 = vmatprep.subr.mxu0 0.0
      %1245 = vmatpush1.msra.mxu0 0.0
      %1246 = vmatprep.subr.mxu0 0.0
      %1247 = vmatpush1.msra.mxu0 0.0
      %1248 = vmatprep.subr.mxu0 0.0
      %1249 = vmatpush1.msra.mxu0 0.0
      %1250 = vmatprep.subr.mxu0 0.0
      %1251 = vmatpush1.msra.mxu0 0.0
      %1252 = vmatprep.subr.mxu0 0.0
      %1253 = vmatpush1.msra.mxu0 %v1220
      %1254 = vmatprep.subr.mxu0 0.0
      %1255 = vmatpush1.msra.mxu0 %v1219
      %1256 = vmatprep.subr.mxu0 0.0
      %1257 = vmatpush2.msra.mxu0 0.0
      %1258 = vmatprep.subr.mxu0 0.0
      %1259 = vmatpush2.msra.mxu0 0.0
      %1260 = vmatprep.subr.mxu0 0.0
      %1261 = vmatpush2.msra.mxu0 0.0
      %1262 = vmatprep.subr.mxu0 0.0
      %1263 = vmatpush2.msra.mxu0 0.0
      %1264 = vmatprep.subr.mxu0 0.0
      %1265 = vmatpush2.msra.mxu0 0.0
      %1266 = vmatprep.subr.mxu0 0.0
      %1267 = vmatpush2.msra.mxu0 0.0
      %1268 = vmatprep.subr.mxu0 0.0
      %1269 = vmatpush2.msra.mxu0 0.0
      %1270 = vmatprep.subr.mxu0 0.0
      %1271 = vmatpush2.msra.mxu0 0.0
      %1272 = vmatprep.subr.mxu0 0.0
      %1273 = vmatpush2.msra.mxu0 0.0
      %1274 = vmatprep.subr.mxu0 0.0
      %1275 = vmatpush2.msra.mxu0 0.0
      %1276 = vmatprep.subr.mxu0 0.0
      %1277 = vmatpush2.msra.mxu0 0.0
      %1278 = vmatprep.subr.mxu0 0.0
      %1279 = vmatpush2.msra.mxu0 0.0
      %1280 = vmatprep.subr.mxu0 0.0
      %1281 = vmatpush2.msra.mxu0 0.0
      %1282 = vmatprep.subr.mxu0 0.0
      %1283 = vmatpush2.msra.mxu0 0.0
      %1284 = vmatprep.subr.mxu0 0.0
      %1285 = vmatpush2.msra.mxu0 0.0
      %1286 = vmatprep.subr.mxu0 0.0
      %1287 = vmatpush2.msra.mxu0 0.0
      %1288 = vmatprep.mubr.f32.mxu0 0.0
      %1289 = vmatmul.mubr.f32.gmra.mxu0 %v1222
      %v1290 = vpop.f32.mrf.mxu0
      %v1291 = vadd.f32 0.0, %v1290
      %v1292 = vpop.f32.mrf.mxu0
      %1293 = vdwg.mxu0
      %v1294 = vadd.f32 %v1217, %v1291
      %s1295 = scalar_lea.vmem %s4, 80
      %v1296 = vld [vmem:[%s1295] sm:$0xff]
      %v1297 = vld [vmem:[%s1295 + $0x8] sm:$0xff]
      %v1299 = vsel %vm917, %v804, 0
      %1301 = vmatprep.subr.mxu0 0.0
      %1302 = vmatpush1.msra.mxu0 0.0
      %1303 = vmatprep.subr.mxu0 0.0
      %1304 = vmatpush1.msra.mxu0 0.0
      %1305 = vmatprep.subr.mxu0 0.0
      %1306 = vmatpush1.msra.mxu0 0.0
      %1307 = vmatprep.subr.mxu0 0.0
      %1308 = vmatpush1.msra.mxu0 0.0
      %1309 = vmatprep.subr.mxu0 0.0
      %1310 = vmatpush1.msra.mxu0 0.0
      %1311 = vmatprep.subr.mxu0 0.0
      %1312 = vmatpush1.msra.mxu0 0.0
      %1313 = vmatprep.subr.mxu0 0.0
      %1314 = vmatpush1.msra.mxu0 0.0
      %1315 = vmatprep.subr.mxu0 0.0
      %1316 = vmatpush1.msra.mxu0 0.0
      %1317 = vmatprep.subr.mxu0 0.0
      %1318 = vmatpush1.msra.mxu0 0.0
      %1319 = vmatprep.subr.mxu0 0.0
      %1320 = vmatpush1.msra.mxu0 0.0
      %1321 = vmatprep.subr.mxu0 0.0
      %1322 = vmatpush1.msra.mxu0 0.0
      %1323 = vmatprep.subr.mxu0 0.0
      %1324 = vmatpush1.msra.mxu0 0.0
      %1325 = vmatprep.subr.mxu0 0.0
      %1326 = vmatpush1.msra.mxu0 0.0
      %1327 = vmatprep.subr.mxu0 0.0
      %1328 = vmatpush1.msra.mxu0 0.0
      %1329 = vmatprep.subr.mxu0 0.0
      %1330 = vmatpush1.msra.mxu0 %v1297
      %1331 = vmatprep.subr.mxu0 0.0
      %1332 = vmatpush1.msra.mxu0 %v1296
      %1333 = vmatprep.subr.mxu0 0.0
      %1334 = vmatpush2.msra.mxu0 0.0
      %1335 = vmatprep.subr.mxu0 0.0
      %1336 = vmatpush2.msra.mxu0 0.0
      %1337 = vmatprep.subr.mxu0 0.0
      %1338 = vmatpush2.msra.mxu0 0.0
      %1339 = vmatprep.subr.mxu0 0.0
      %1340 = vmatpush2.msra.mxu0 0.0
      %1341 = vmatprep.subr.mxu0 0.0
      %1342 = vmatpush2.msra.mxu0 0.0
      %1343 = vmatprep.subr.mxu0 0.0
      %1344 = vmatpush2.msra.mxu0 0.0
      %1345 = vmatprep.subr.mxu0 0.0
      %1346 = vmatpush2.msra.mxu0 0.0
      %1347 = vmatprep.subr.mxu0 0.0
      %1348 = vmatpush2.msra.mxu0 0.0
      %1349 = vmatprep.subr.mxu0 0.0
      %1350 = vmatpush2.msra.mxu0 0.0
      %1351 = vmatprep.subr.mxu0 0.0
      %1352 = vmatpush2.msra.mxu0 0.0
      %1353 = vmatprep.subr.mxu0 0.0
      %1354 = vmatpush2.msra.mxu0 0.0
      %1355 = vmatprep.subr.mxu0 0.0
      %1356 = vmatpush2.msra.mxu0 0.0
      %1357 = vmatprep.subr.mxu0 0.0
      %1358 = vmatpush2.msra.mxu0 0.0
      %1359 = vmatprep.subr.mxu0 0.0
      %1360 = vmatpush2.msra.mxu0 0.0
      %1361 = vmatprep.subr.mxu0 0.0
      %1362 = vmatpush2.msra.mxu0 0.0
      %1363 = vmatprep.subr.mxu0 0.0
      %1364 = vmatpush2.msra.mxu0 0.0
      %1365 = vmatprep.mubr.f32.mxu0 0.0
      %1366 = vmatmul.mubr.f32.gmra.mxu0 %v1299
      %v1367 = vpop.f32.mrf.mxu0
      %v1368 = vadd.f32 0.0, %v1367
      %v1369 = vpop.f32.mrf.mxu0
      %1370 = vdwg.mxu0
      %v1371 = vadd.f32 %v1294, %v1368
      %s1372 = scalar_lea.vmem %s4, 96
      %v1373 = vld [vmem:[%s1372] sm:$0xff]
      %v1374 = vld [vmem:[%s1372 + $0x8] sm:$0xff]
      %v1376 = vsel %vm917, %v809, 0
      %1378 = vmatprep.subr.mxu0 0.0
      %1379 = vmatpush1.msra.mxu0 0.0
      %1380 = vmatprep.subr.mxu0 0.0
      %1381 = vmatpush1.msra.mxu0 0.0
      %1382 = vmatprep.subr.mxu0 0.0
      %1383 = vmatpush1.msra.mxu0 0.0
      %1384 = vmatprep.subr.mxu0 0.0
      %1385 = vmatpush1.msra.mxu0 0.0
      %1386 = vmatprep.subr.mxu0 0.0
      %1387 = vmatpush1.msra.mxu0 0.0
      %1388 = vmatprep.subr.mxu0 0.0
      %1389 = vmatpush1.msra.mxu0 0.0
      %1390 = vmatprep.subr.mxu0 0.0
      %1391 = vmatpush1.msra.mxu0 0.0
      %1392 = vmatprep.subr.mxu0 0.0
      %1393 = vmatpush1.msra.mxu0 0.0
      %1394 = vmatprep.subr.mxu0 0.0
      %1395 = vmatpush1.msra.mxu0 0.0
      %1396 = vmatprep.subr.mxu0 0.0
      %1397 = vmatpush1.msra.mxu0 0.0
      %1398 = vmatprep.subr.mxu0 0.0
      %1399 = vmatpush1.msra.mxu0 0.0
      %1400 = vmatprep.subr.mxu0 0.0
      %1401 = vmatpush1.msra.mxu0 0.0
      %1402 = vmatprep.subr.mxu0 0.0
      %1403 = vmatpush1.msra.mxu0 0.0
      %1404 = vmatprep.subr.mxu0 0.0
      %1405 = vmatpush1.msra.mxu0 0.0
      %1406 = vmatprep.subr.mxu0 0.0
      %1407 = vmatpush1.msra.mxu0 %v1374
      %1408 = vmatprep.subr.mxu0 0.0
      %1409 = vmatpush1.msra.mxu0 %v1373
      %1410 = vmatprep.subr.mxu0 0.0
      %1411 = vmatpush2.msra.mxu0 0.0
      %1412 = vmatprep.subr.mxu0 0.0
      %1413 = vmatpush2.msra.mxu0 0.0
      %1414 = vmatprep.subr.mxu0 0.0
      %1415 = vmatpush2.msra.mxu0 0.0
      %1416 = vmatprep.subr.mxu0 0.0
      %1417 = vmatpush2.msra.mxu0 0.0
      %1418 = vmatprep.subr.mxu0 0.0
      %1419 = vmatpush2.msra.mxu0 0.0
      %1420 = vmatprep.subr.mxu0 0.0
      %1421 = vmatpush2.msra.mxu0 0.0
      %1422 = vmatprep.subr.mxu0 0.0
      %1423 = vmatpush2.msra.mxu0 0.0
      %1424 = vmatprep.subr.mxu0 0.0
      %1425 = vmatpush2.msra.mxu0 0.0
      %1426 = vmatprep.subr.mxu0 0.0
      %1427 = vmatpush2.msra.mxu0 0.0
      %1428 = vmatprep.subr.mxu0 0.0
      %1429 = vmatpush2.msra.mxu0 0.0
      %1430 = vmatprep.subr.mxu0 0.0
      %1431 = vmatpush2.msra.mxu0 0.0
      %1432 = vmatprep.subr.mxu0 0.0
      %1433 = vmatpush2.msra.mxu0 0.0
      %1434 = vmatprep.subr.mxu0 0.0
      %1435 = vmatpush2.msra.mxu0 0.0
      %1436 = vmatprep.subr.mxu0 0.0
      %1437 = vmatpush2.msra.mxu0 0.0
      %1438 = vmatprep.subr.mxu0 0.0
      %1439 = vmatpush2.msra.mxu0 0.0
      %1440 = vmatprep.subr.mxu0 0.0
      %1441 = vmatpush2.msra.mxu0 0.0
      %1442 = vmatprep.mubr.f32.mxu0 0.0
      %1443 = vmatmul.mubr.f32.gmra.mxu0 %v1376
      %v1444 = vpop.f32.mrf.mxu0
      %v1445 = vadd.f32 0.0, %v1444
      %v1446 = vpop.f32.mrf.mxu0
      %1447 = vdwg.mxu0
      %v1448 = vadd.f32 %v1371, %v1445
      %s1449 = scalar_lea.vmem %s4, 112
      %v1450 = vld [vmem:[%s1449] sm:$0xff]
      %v1451 = vld [vmem:[%s1449 + $0x8] sm:$0xff]
      %v1453 = vsel %vm917, %v814, 0
      %1455 = vmatprep.subr.mxu0 0.0
      %1456 = vmatpush1.msra.mxu0 0.0
      %1457 = vmatprep.subr.mxu0 0.0
      %1458 = vmatpush1.msra.mxu0 0.0
      %1459 = vmatprep.subr.mxu0 0.0
      %1460 = vmatpush1.msra.mxu0 0.0
      %1461 = vmatprep.subr.mxu0 0.0
      %1462 = vmatpush1.msra.mxu0 0.0
      %1463 = vmatprep.subr.mxu0 0.0
      %1464 = vmatpush1.msra.mxu0 0.0
      %1465 = vmatprep.subr.mxu0 0.0
      %1466 = vmatpush1.msra.mxu0 0.0
      %1467 = vmatprep.subr.mxu0 0.0
      %1468 = vmatpush1.msra.mxu0 0.0
      %1469 = vmatprep.subr.mxu0 0.0
      %1470 = vmatpush1.msra.mxu0 0.0
      %1471 = vmatprep.subr.mxu0 0.0
      %1472 = vmatpush1.msra.mxu0 0.0
      %1473 = vmatprep.subr.mxu0 0.0
      %1474 = vmatpush1.msra.mxu0 0.0
      %1475 = vmatprep.subr.mxu0 0.0
      %1476 = vmatpush1.msra.mxu0 0.0
      %1477 = vmatprep.subr.mxu0 0.0
      %1478 = vmatpush1.msra.mxu0 0.0
      %1479 = vmatprep.subr.mxu0 0.0
      %1480 = vmatpush1.msra.mxu0 0.0
      %1481 = vmatprep.subr.mxu0 0.0
      %1482 = vmatpush1.msra.mxu0 0.0
      %1483 = vmatprep.subr.mxu0 0.0
      %1484 = vmatpush1.msra.mxu0 %v1451
      %1485 = vmatprep.subr.mxu0 0.0
      %1486 = vmatpush1.msra.mxu0 %v1450
      %1487 = vmatprep.subr.mxu0 0.0
      %1488 = vmatpush2.msra.mxu0 0.0
      %1489 = vmatprep.subr.mxu0 0.0
      %1490 = vmatpush2.msra.mxu0 0.0
      %1491 = vmatprep.subr.mxu0 0.0
      %1492 = vmatpush2.msra.mxu0 0.0
      %1493 = vmatprep.subr.mxu0 0.0
      %1494 = vmatpush2.msra.mxu0 0.0
      %1495 = vmatprep.subr.mxu0 0.0
      %1496 = vmatpush2.msra.mxu0 0.0
      %1497 = vmatprep.subr.mxu0 0.0
      %1498 = vmatpush2.msra.mxu0 0.0
      %1499 = vmatprep.subr.mxu0 0.0
      %1500 = vmatpush2.msra.mxu0 0.0
      %1501 = vmatprep.subr.mxu0 0.0
      %1502 = vmatpush2.msra.mxu0 0.0
      %1503 = vmatprep.subr.mxu0 0.0
      %1504 = vmatpush2.msra.mxu0 0.0
      %1505 = vmatprep.subr.mxu0 0.0
      %1506 = vmatpush2.msra.mxu0 0.0
      %1507 = vmatprep.subr.mxu0 0.0
      %1508 = vmatpush2.msra.mxu0 0.0
      %1509 = vmatprep.subr.mxu0 0.0
      %1510 = vmatpush2.msra.mxu0 0.0
      %1511 = vmatprep.subr.mxu0 0.0
      %1512 = vmatpush2.msra.mxu0 0.0
      %1513 = vmatprep.subr.mxu0 0.0
      %1514 = vmatpush2.msra.mxu0 0.0
      %1515 = vmatprep.subr.mxu0 0.0
      %1516 = vmatpush2.msra.mxu0 0.0
      %1517 = vmatprep.subr.mxu0 0.0
      %1518 = vmatpush2.msra.mxu0 0.0
      %1519 = vmatprep.mubr.f32.mxu0 0.0
      %1520 = vmatmul.mubr.f32.gmra.mxu0 %v1453
      %v1521 = vpop.f32.mrf.mxu0
      %v1522 = vadd.f32 0.0, %v1521
      %v1523 = vpop.f32.mrf.mxu0
      %1524 = vdwg.mxu0
      %v1525 = vadd.f32 %v1448, %v1522
      %s1526 = scalar_lea.vmem %s4, 128
      %v1527 = vld [vmem:[%s1526] sm:$0xff]
      %v1528 = vld [vmem:[%s1526 + $0x8] sm:$0xff]
      %v1530 = vsel %vm917, %v819, 0
      %1532 = vmatprep.subr.mxu0 0.0
      %1533 = vmatpush1.msra.mxu0 0.0
      %1534 = vmatprep.subr.mxu0 0.0
      %1535 = vmatpush1.msra.mxu0 0.0
      %1536 = vmatprep.subr.mxu0 0.0
      %1537 = vmatpush1.msra.mxu0 0.0
      %1538 = vmatprep.subr.mxu0 0.0
      %1539 = vmatpush1.msra.mxu0 0.0
      %1540 = vmatprep.subr.mxu0 0.0
      %1541 = vmatpush1.msra.mxu0 0.0
      %1542 = vmatprep.subr.mxu0 0.0
      %1543 = vmatpush1.msra.mxu0 0.0
      %1544 = vmatprep.subr.mxu0 0.0
      %1545 = vmatpush1.msra.mxu0 0.0
      %1546 = vmatprep.subr.mxu0 0.0
      %1547 = vmatpush1.msra.mxu0 0.0
      %1548 = vmatprep.subr.mxu0 0.0
      %1549 = vmatpush1.msra.mxu0 0.0
      %1550 = vmatprep.subr.mxu0 0.0
      %1551 = vmatpush1.msra.mxu0 0.0
      %1552 = vmatprep.subr.mxu0 0.0
      %1553 = vmatpush1.msra.mxu0 0.0
      %1554 = vmatprep.subr.mxu0 0.0
      %1555 = vmatpush1.msra.mxu0 0.0
      %1556 = vmatprep.subr.mxu0 0.0
      %1557 = vmatpush1.msra.mxu0 0.0
      %1558 = vmatprep.subr.mxu0 0.0
      %1559 = vmatpush1.msra.mxu0 0.0
      %1560 = vmatprep.subr.mxu0 0.0
      %1561 = vmatpush1.msra.mxu0 %v1528
      %1562 = vmatprep.subr.mxu0 0.0
      %1563 = vmatpush1.msra.mxu0 %v1527
      %1564 = vmatprep.subr.mxu0 0.0
      %1565 = vmatpush2.msra.mxu0 0.0
      %1566 = vmatprep.subr.mxu0 0.0
      %1567 = vmatpush2.msra.mxu0 0.0
      %1568 = vmatprep.subr.mxu0 0.0
      %1569 = vmatpush2.msra.mxu0 0.0
      %1570 = vmatprep.subr.mxu0 0.0
      %1571 = vmatpush2.msra.mxu0 0.0
      %1572 = vmatprep.subr.mxu0 0.0
      %1573 = vmatpush2.msra.mxu0 0.0
      %1574 = vmatprep.subr.mxu0 0.0
      %1575 = vmatpush2.msra.mxu0 0.0
      %1576 = vmatprep.subr.mxu0 0.0
      %1577 = vmatpush2.msra.mxu0 0.0
      %1578 = vmatprep.subr.mxu0 0.0
      %1579 = vmatpush2.msra.mxu0 0.0
      %1580 = vmatprep.subr.mxu0 0.0
      %1581 = vmatpush2.msra.mxu0 0.0
      %1582 = vmatprep.subr.mxu0 0.0
      %1583 = vmatpush2.msra.mxu0 0.0
      %1584 = vmatprep.subr.mxu0 0.0
      %1585 = vmatpush2.msra.mxu0 0.0
      %1586 = vmatprep.subr.mxu0 0.0
      %1587 = vmatpush2.msra.mxu0 0.0
      %1588 = vmatprep.subr.mxu0 0.0
      %1589 = vmatpush2.msra.mxu0 0.0
      %1590 = vmatprep.subr.mxu0 0.0
      %1591 = vmatpush2.msra.mxu0 0.0
      %1592 = vmatprep.subr.mxu0 0.0
      %1593 = vmatpush2.msra.mxu0 0.0
      %1594 = vmatprep.subr.mxu0 0.0
      %1595 = vmatpush2.msra.mxu0 0.0
      %1596 = vmatprep.mubr.f32.mxu0 0.0
      %1597 = vmatmul.mubr.f32.gmra.mxu0 %v1530
      %v1598 = vpop.f32.mrf.mxu0
      %v1599 = vadd.f32 0.0, %v1598
      %v1600 = vpop.f32.mrf.mxu0
      %1601 = vdwg.mxu0
      %v1602 = vadd.f32 %v1525, %v1599
      %s1603 = scalar_lea.vmem %s4, 144
      %v1604 = vld [vmem:[%s1603] sm:$0xff]
      %v1605 = vld [vmem:[%s1603 + $0x8] sm:$0xff]
      %v1607 = vsel %vm917, %v824, 0
      %1609 = vmatprep.subr.mxu0 0.0
      %1610 = vmatpush1.msra.mxu0 0.0
      %1611 = vmatprep.subr.mxu0 0.0
      %1612 = vmatpush1.msra.mxu0 0.0
      %1613 = vmatprep.subr.mxu0 0.0
      %1614 = vmatpush1.msra.mxu0 0.0
      %1615 = vmatprep.subr.mxu0 0.0
      %1616 = vmatpush1.msra.mxu0 0.0
      %1617 = vmatprep.subr.mxu0 0.0
      %1618 = vmatpush1.msra.mxu0 0.0
      %1619 = vmatprep.subr.mxu0 0.0
      %1620 = vmatpush1.msra.mxu0 0.0
      %1621 = vmatprep.subr.mxu0 0.0
      %1622 = vmatpush1.msra.mxu0 0.0
      %1623 = vmatprep.subr.mxu0 0.0
      %1624 = vmatpush1.msra.mxu0 0.0
      %1625 = vmatprep.subr.mxu0 0.0
      %1626 = vmatpush1.msra.mxu0 0.0
      %1627 = vmatprep.subr.mxu0 0.0
      %1628 = vmatpush1.msra.mxu0 0.0
      %1629 = vmatprep.subr.mxu0 0.0
      %1630 = vmatpush1.msra.mxu0 0.0
      %1631 = vmatprep.subr.mxu0 0.0
      %1632 = vmatpush1.msra.mxu0 0.0
      %1633 = vmatprep.subr.mxu0 0.0
      %1634 = vmatpush1.msra.mxu0 0.0
      %1635 = vmatprep.subr.mxu0 0.0
      %1636 = vmatpush1.msra.mxu0 0.0
      %1637 = vmatprep.subr.mxu0 0.0
      %1638 = vmatpush1.msra.mxu0 %v1605
      %1639 = vmatprep.subr.mxu0 0.0
      %1640 = vmatpush1.msra.mxu0 %v1604
      %1641 = vmatprep.subr.mxu0 0.0
      %1642 = vmatpush2.msra.mxu0 0.0
      %1643 = vmatprep.subr.mxu0 0.0
      %1644 = vmatpush2.msra.mxu0 0.0
      %1645 = vmatprep.subr.mxu0 0.0
      %1646 = vmatpush2.msra.mxu0 0.0
      %1647 = vmatprep.subr.mxu0 0.0
      %1648 = vmatpush2.msra.mxu0 0.0
      %1649 = vmatprep.subr.mxu0 0.0
      %1650 = vmatpush2.msra.mxu0 0.0
      %1651 = vmatprep.subr.mxu0 0.0
      %1652 = vmatpush2.msra.mxu0 0.0
      %1653 = vmatprep.subr.mxu0 0.0
      %1654 = vmatpush2.msra.mxu0 0.0
      %1655 = vmatprep.subr.mxu0 0.0
      %1656 = vmatpush2.msra.mxu0 0.0
      %1657 = vmatprep.subr.mxu0 0.0
      %1658 = vmatpush2.msra.mxu0 0.0
      %1659 = vmatprep.subr.mxu0 0.0
      %1660 = vmatpush2.msra.mxu0 0.0
      %1661 = vmatprep.subr.mxu0 0.0
      %1662 = vmatpush2.msra.mxu0 0.0
      %1663 = vmatprep.subr.mxu0 0.0
      %1664 = vmatpush2.msra.mxu0 0.0
      %1665 = vmatprep.subr.mxu0 0.0
      %1666 = vmatpush2.msra.mxu0 0.0
      %1667 = vmatprep.subr.mxu0 0.0
      %1668 = vmatpush2.msra.mxu0 0.0
      %1669 = vmatprep.subr.mxu0 0.0
      %1670 = vmatpush2.msra.mxu0 0.0
      %1671 = vmatprep.subr.mxu0 0.0
      %1672 = vmatpush2.msra.mxu0 0.0
      %1673 = vmatprep.mubr.f32.mxu0 0.0
      %1674 = vmatmul.mubr.f32.gmra.mxu0 %v1607
      %v1675 = vpop.f32.mrf.mxu0
      %v1676 = vadd.f32 0.0, %v1675
      %v1677 = vpop.f32.mrf.mxu0
      %1678 = vdwg.mxu0
      %v1679 = vadd.f32 %v1602, %v1676
      %s1680 = scalar_lea.vmem %s4, 160
      %v1681 = vld [vmem:[%s1680] sm:$0xff]
      %v1682 = vld [vmem:[%s1680 + $0x8] sm:$0xff]
      %v1684 = vsel %vm917, %v829, 0
      %1686 = vmatprep.subr.mxu0 0.0
      %1687 = vmatpush1.msra.mxu0 0.0
      %1688 = vmatprep.subr.mxu0 0.0
      %1689 = vmatpush1.msra.mxu0 0.0
      %1690 = vmatprep.subr.mxu0 0.0
      %1691 = vmatpush1.msra.mxu0 0.0
      %1692 = vmatprep.subr.mxu0 0.0
      %1693 = vmatpush1.msra.mxu0 0.0
      %1694 = vmatprep.subr.mxu0 0.0
      %1695 = vmatpush1.msra.mxu0 0.0
      %1696 = vmatprep.subr.mxu0 0.0
      %1697 = vmatpush1.msra.mxu0 0.0
      %1698 = vmatprep.subr.mxu0 0.0
      %1699 = vmatpush1.msra.mxu0 0.0
      %1700 = vmatprep.subr.mxu0 0.0
      %1701 = vmatpush1.msra.mxu0 0.0
      %1702 = vmatprep.subr.mxu0 0.0
      %1703 = vmatpush1.msra.mxu0 0.0
      %1704 = vmatprep.subr.mxu0 0.0
      %1705 = vmatpush1.msra.mxu0 0.0
      %1706 = vmatprep.subr.mxu0 0.0
      %1707 = vmatpush1.msra.mxu0 0.0
      %1708 = vmatprep.subr.mxu0 0.0
      %1709 = vmatpush1.msra.mxu0 0.0
      %1710 = vmatprep.subr.mxu0 0.0
      %1711 = vmatpush1.msra.mxu0 0.0
      %1712 = vmatprep.subr.mxu0 0.0
      %1713 = vmatpush1.msra.mxu0 0.0
      %1714 = vmatprep.subr.mxu0 0.0
      %1715 = vmatpush1.msra.mxu0 %v1682
      %1716 = vmatprep.subr.mxu0 0.0
      %1717 = vmatpush1.msra.mxu0 %v1681
      %1718 = vmatprep.subr.mxu0 0.0
      %1719 = vmatpush2.msra.mxu0 0.0
      %1720 = vmatprep.subr.mxu0 0.0
      %1721 = vmatpush2.msra.mxu0 0.0
      %1722 = vmatprep.subr.mxu0 0.0
      %1723 = vmatpush2.msra.mxu0 0.0
      %1724 = vmatprep.subr.mxu0 0.0
      %1725 = vmatpush2.msra.mxu0 0.0
      %1726 = vmatprep.subr.mxu0 0.0
      %1727 = vmatpush2.msra.mxu0 0.0
      %1728 = vmatprep.subr.mxu0 0.0
      %1729 = vmatpush2.msra.mxu0 0.0
      %1730 = vmatprep.subr.mxu0 0.0
      %1731 = vmatpush2.msra.mxu0 0.0
      %1732 = vmatprep.subr.mxu0 0.0
      %1733 = vmatpush2.msra.mxu0 0.0
      %1734 = vmatprep.subr.mxu0 0.0
      %1735 = vmatpush2.msra.mxu0 0.0
      %1736 = vmatprep.subr.mxu0 0.0
      %1737 = vmatpush2.msra.mxu0 0.0
      %1738 = vmatprep.subr.mxu0 0.0
      %1739 = vmatpush2.msra.mxu0 0.0
      %1740 = vmatprep.subr.mxu0 0.0
      %1741 = vmatpush2.msra.mxu0 0.0
      %1742 = vmatprep.subr.mxu0 0.0
      %1743 = vmatpush2.msra.mxu0 0.0
      %1744 = vmatprep.subr.mxu0 0.0
      %1745 = vmatpush2.msra.mxu0 0.0
      %1746 = vmatprep.subr.mxu0 0.0
      %1747 = vmatpush2.msra.mxu0 0.0
      %1748 = vmatprep.subr.mxu0 0.0
      %1749 = vmatpush2.msra.mxu0 0.0
      %1750 = vmatprep.mubr.f32.mxu0 0.0
      %1751 = vmatmul.mubr.f32.gmra.mxu0 %v1684
      %v1752 = vpop.f32.mrf.mxu0
      %v1753 = vadd.f32 0.0, %v1752
      %v1754 = vpop.f32.mrf.mxu0
      %1755 = vdwg.mxu0
      %v1756 = vadd.f32 %v1679, %v1753
      %s1757 = scalar_lea.vmem %s4, 176
      %v1758 = vld [vmem:[%s1757] sm:$0xff]
      %v1759 = vld [vmem:[%s1757 + $0x8] sm:$0xff]
      %v1761 = vsel %vm917, %v834, 0
      %1763 = vmatprep.subr.mxu0 0.0
      %1764 = vmatpush1.msra.mxu0 0.0
      %1765 = vmatprep.subr.mxu0 0.0
      %1766 = vmatpush1.msra.mxu0 0.0
      %1767 = vmatprep.subr.mxu0 0.0
      %1768 = vmatpush1.msra.mxu0 0.0
      %1769 = vmatprep.subr.mxu0 0.0
      %1770 = vmatpush1.msra.mxu0 0.0
      %1771 = vmatprep.subr.mxu0 0.0
      %1772 = vmatpush1.msra.mxu0 0.0
      %1773 = vmatprep.subr.mxu0 0.0
      %1774 = vmatpush1.msra.mxu0 0.0
      %1775 = vmatprep.subr.mxu0 0.0
      %1776 = vmatpush1.msra.mxu0 0.0
      %1777 = vmatprep.subr.mxu0 0.0
      %1778 = vmatpush1.msra.mxu0 0.0
      %1779 = vmatprep.subr.mxu0 0.0
      %1780 = vmatpush1.msra.mxu0 0.0
      %1781 = vmatprep.subr.mxu0 0.0
      %1782 = vmatpush1.msra.mxu0 0.0
      %1783 = vmatprep.subr.mxu0 0.0
      %1784 = vmatpush1.msra.mxu0 0.0
      %1785 = vmatprep.subr.mxu0 0.0
      %1786 = vmatpush1.msra.mxu0 0.0
      %1787 = vmatprep.subr.mxu0 0.0
      %1788 = vmatpush1.msra.mxu0 0.0
      %1789 = vmatprep.subr.mxu0 0.0
      %1790 = vmatpush1.msra.mxu0 0.0
      %1791 = vmatprep.subr.mxu0 0.0
      %1792 = vmatpush1.msra.mxu0 %v1759
      %1793 = vmatprep.subr.mxu0 0.0
      %1794 = vmatpush1.msra.mxu0 %v1758
      %1795 = vmatprep.subr.mxu0 0.0
      %1796 = vmatpush2.msra.mxu0 0.0
      %1797 = vmatprep.subr.mxu0 0.0
      %1798 = vmatpush2.msra.mxu0 0.0
      %1799 = vmatprep.subr.mxu0 0.0
      %1800 = vmatpush2.msra.mxu0 0.0
      %1801 = vmatprep.subr.mxu0 0.0
      %1802 = vmatpush2.msra.mxu0 0.0
      %1803 = vmatprep.subr.mxu0 0.0
      %1804 = vmatpush2.msra.mxu0 0.0
      %1805 = vmatprep.subr.mxu0 0.0
      %1806 = vmatpush2.msra.mxu0 0.0
      %1807 = vmatprep.subr.mxu0 0.0
      %1808 = vmatpush2.msra.mxu0 0.0
      %1809 = vmatprep.subr.mxu0 0.0
      %1810 = vmatpush2.msra.mxu0 0.0
      %1811 = vmatprep.subr.mxu0 0.0
      %1812 = vmatpush2.msra.mxu0 0.0
      %1813 = vmatprep.subr.mxu0 0.0
      %1814 = vmatpush2.msra.mxu0 0.0
      %1815 = vmatprep.subr.mxu0 0.0
      %1816 = vmatpush2.msra.mxu0 0.0
      %1817 = vmatprep.subr.mxu0 0.0
      %1818 = vmatpush2.msra.mxu0 0.0
      %1819 = vmatprep.subr.mxu0 0.0
      %1820 = vmatpush2.msra.mxu0 0.0
      %1821 = vmatprep.subr.mxu0 0.0
      %1822 = vmatpush2.msra.mxu0 0.0
      %1823 = vmatprep.subr.mxu0 0.0
      %1824 = vmatpush2.msra.mxu0 0.0
      %1825 = vmatprep.subr.mxu0 0.0
      %1826 = vmatpush2.msra.mxu0 0.0
      %1827 = vmatprep.mubr.f32.mxu0 0.0
      %1828 = vmatmul.mubr.f32.gmra.mxu0 %v1761
      %v1829 = vpop.f32.mrf.mxu0
      %v1830 = vadd.f32 0.0, %v1829
      %v1831 = vpop.f32.mrf.mxu0
      %1832 = vdwg.mxu0
      %v1833 = vadd.f32 %v1756, %v1830
      %s1834 = scalar_lea.vmem %s4, 192
      %v1835 = vld [vmem:[%s1834] sm:$0xff]
      %v1836 = vld [vmem:[%s1834 + $0x8] sm:$0xff]
      %v1838 = vsel %vm917, %v839, 0
      %1840 = vmatprep.subr.mxu0 0.0
      %1841 = vmatpush1.msra.mxu0 0.0
      %1842 = vmatprep.subr.mxu0 0.0
      %1843 = vmatpush1.msra.mxu0 0.0
      %1844 = vmatprep.subr.mxu0 0.0
      %1845 = vmatpush1.msra.mxu0 0.0
      %1846 = vmatprep.subr.mxu0 0.0
      %1847 = vmatpush1.msra.mxu0 0.0
      %1848 = vmatprep.subr.mxu0 0.0
      %1849 = vmatpush1.msra.mxu0 0.0
      %1850 = vmatprep.subr.mxu0 0.0
      %1851 = vmatpush1.msra.mxu0 0.0
      %1852 = vmatprep.subr.mxu0 0.0
      %1853 = vmatpush1.msra.mxu0 0.0
      %1854 = vmatprep.subr.mxu0 0.0
      %1855 = vmatpush1.msra.mxu0 0.0
      %1856 = vmatprep.subr.mxu0 0.0
      %1857 = vmatpush1.msra.mxu0 0.0
      %1858 = vmatprep.subr.mxu0 0.0
      %1859 = vmatpush1.msra.mxu0 0.0
      %1860 = vmatprep.subr.mxu0 0.0
      %1861 = vmatpush1.msra.mxu0 0.0
      %1862 = vmatprep.subr.mxu0 0.0
      %1863 = vmatpush1.msra.mxu0 0.0
      %1864 = vmatprep.subr.mxu0 0.0
      %1865 = vmatpush1.msra.mxu0 0.0
      %1866 = vmatprep.subr.mxu0 0.0
      %1867 = vmatpush1.msra.mxu0 0.0
      %1868 = vmatprep.subr.mxu0 0.0
      %1869 = vmatpush1.msra.mxu0 %v1836
      %1870 = vmatprep.subr.mxu0 0.0
      %1871 = vmatpush1.msra.mxu0 %v1835
      %1872 = vmatprep.subr.mxu0 0.0
      %1873 = vmatpush2.msra.mxu0 0.0
      %1874 = vmatprep.subr.mxu0 0.0
      %1875 = vmatpush2.msra.mxu0 0.0
      %1876 = vmatprep.subr.mxu0 0.0
      %1877 = vmatpush2.msra.mxu0 0.0
      %1878 = vmatprep.subr.mxu0 0.0
      %1879 = vmatpush2.msra.mxu0 0.0
      %1880 = vmatprep.subr.mxu0 0.0
      %1881 = vmatpush2.msra.mxu0 0.0
      %1882 = vmatprep.subr.mxu0 0.0
      %1883 = vmatpush2.msra.mxu0 0.0
      %1884 = vmatprep.subr.mxu0 0.0
      %1885 = vmatpush2.msra.mxu0 0.0
      %1886 = vmatprep.subr.mxu0 0.0
      %1887 = vmatpush2.msra.mxu0 0.0
      %1888 = vmatprep.subr.mxu0 0.0
      %1889 = vmatpush2.msra.mxu0 0.0
      %1890 = vmatprep.subr.mxu0 0.0
      %1891 = vmatpush2.msra.mxu0 0.0
      %1892 = vmatprep.subr.mxu0 0.0
      %1893 = vmatpush2.msra.mxu0 0.0
      %1894 = vmatprep.subr.mxu0 0.0
      %1895 = vmatpush2.msra.mxu0 0.0
      %1896 = vmatprep.subr.mxu0 0.0
      %1897 = vmatpush2.msra.mxu0 0.0
      %1898 = vmatprep.subr.mxu0 0.0
      %1899 = vmatpush2.msra.mxu0 0.0
      %1900 = vmatprep.subr.mxu0 0.0
      %1901 = vmatpush2.msra.mxu0 0.0
      %1902 = vmatprep.subr.mxu0 0.0
      %1903 = vmatpush2.msra.mxu0 0.0
      %1904 = vmatprep.mubr.f32.mxu0 0.0
      %1905 = vmatmul.mubr.f32.gmra.mxu0 %v1838
      %v1906 = vpop.f32.mrf.mxu0
      %v1907 = vadd.f32 0.0, %v1906
      %v1908 = vpop.f32.mrf.mxu0
      %1909 = vdwg.mxu0
      %v1910 = vadd.f32 %v1833, %v1907
      %s1911 = scalar_lea.vmem %s4, 208
      %v1912 = vld [vmem:[%s1911] sm:$0xff]
      %v1913 = vld [vmem:[%s1911 + $0x8] sm:$0xff]
      %v1915 = vsel %vm917, %v844, 0
      %1917 = vmatprep.subr.mxu0 0.0
      %1918 = vmatpush1.msra.mxu0 0.0
      %1919 = vmatprep.subr.mxu0 0.0
      %1920 = vmatpush1.msra.mxu0 0.0
      %1921 = vmatprep.subr.mxu0 0.0
      %1922 = vmatpush1.msra.mxu0 0.0
      %1923 = vmatprep.subr.mxu0 0.0
      %1924 = vmatpush1.msra.mxu0 0.0
      %1925 = vmatprep.subr.mxu0 0.0
      %1926 = vmatpush1.msra.mxu0 0.0
      %1927 = vmatprep.subr.mxu0 0.0
      %1928 = vmatpush1.msra.mxu0 0.0
      %1929 = vmatprep.subr.mxu0 0.0
      %1930 = vmatpush1.msra.mxu0 0.0
      %1931 = vmatprep.subr.mxu0 0.0
      %1932 = vmatpush1.msra.mxu0 0.0
      %1933 = vmatprep.subr.mxu0 0.0
      %1934 = vmatpush1.msra.mxu0 0.0
      %1935 = vmatprep.subr.mxu0 0.0
      %1936 = vmatpush1.msra.mxu0 0.0
      %1937 = vmatprep.subr.mxu0 0.0
      %1938 = vmatpush1.msra.mxu0 0.0
      %1939 = vmatprep.subr.mxu0 0.0
      %1940 = vmatpush1.msra.mxu0 0.0
      %1941 = vmatprep.subr.mxu0 0.0
      %1942 = vmatpush1.msra.mxu0 0.0
      %1943 = vmatprep.subr.mxu0 0.0
      %1944 = vmatpush1.msra.mxu0 0.0
      %1945 = vmatprep.subr.mxu0 0.0
      %1946 = vmatpush1.msra.mxu0 %v1913
      %1947 = vmatprep.subr.mxu0 0.0
      %1948 = vmatpush1.msra.mxu0 %v1912
      %1949 = vmatprep.subr.mxu0 0.0
      %1950 = vmatpush2.msra.mxu0 0.0
      %1951 = vmatprep.subr.mxu0 0.0
      %1952 = vmatpush2.msra.mxu0 0.0
      %1953 = vmatprep.subr.mxu0 0.0
      %1954 = vmatpush2.msra.mxu0 0.0
      %1955 = vmatprep.subr.mxu0 0.0
      %1956 = vmatpush2.msra.mxu0 0.0
      %1957 = vmatprep.subr.mxu0 0.0
      %1958 = vmatpush2.msra.mxu0 0.0
      %1959 = vmatprep.subr.mxu0 0.0
      %1960 = vmatpush2.msra.mxu0 0.0
      %1961 = vmatprep.subr.mxu0 0.0
      %1962 = vmatpush2.msra.mxu0 0.0
      %1963 = vmatprep.subr.mxu0 0.0
      %1964 = vmatpush2.msra.mxu0 0.0
      %1965 = vmatprep.subr.mxu0 0.0
      %1966 = vmatpush2.msra.mxu0 0.0
      %1967 = vmatprep.subr.mxu0 0.0
      %1968 = vmatpush2.msra.mxu0 0.0
      %1969 = vmatprep.subr.mxu0 0.0
      %1970 = vmatpush2.msra.mxu0 0.0
      %1971 = vmatprep.subr.mxu0 0.0
      %1972 = vmatpush2.msra.mxu0 0.0
      %1973 = vmatprep.subr.mxu0 0.0
      %1974 = vmatpush2.msra.mxu0 0.0
      %1975 = vmatprep.subr.mxu0 0.0
      %1976 = vmatpush2.msra.mxu0 0.0
      %1977 = vmatprep.subr.mxu0 0.0
      %1978 = vmatpush2.msra.mxu0 0.0
      %1979 = vmatprep.subr.mxu0 0.0
      %1980 = vmatpush2.msra.mxu0 0.0
      %1981 = vmatprep.mubr.f32.mxu0 0.0
      %1982 = vmatmul.mubr.f32.gmra.mxu0 %v1915
      %v1983 = vpop.f32.mrf.mxu0
      %v1984 = vadd.f32 0.0, %v1983
      %v1985 = vpop.f32.mrf.mxu0
      %1986 = vdwg.mxu0
      %v1987 = vadd.f32 %v1910, %v1984
      %s1988 = scalar_lea.vmem %s4, 224
      %v1989 = vld [vmem:[%s1988] sm:$0xff]
      %v1990 = vld [vmem:[%s1988 + $0x8] sm:$0xff]
      %v1992 = vsel %vm917, %v849, 0
      %1994 = vmatprep.subr.mxu0 0.0
      %1995 = vmatpush1.msra.mxu0 0.0
      %1996 = vmatprep.subr.mxu0 0.0
      %1997 = vmatpush1.msra.mxu0 0.0
      %1998 = vmatprep.subr.mxu0 0.0
      %1999 = vmatpush1.msra.mxu0 0.0
      %2000 = vmatprep.subr.mxu0 0.0
      %2001 = vmatpush1.msra.mxu0 0.0
      %2002 = vmatprep.subr.mxu0 0.0
      %2003 = vmatpush1.msra.mxu0 0.0
      %2004 = vmatprep.subr.mxu0 0.0
      %2005 = vmatpush1.msra.mxu0 0.0
      %2006 = vmatprep.subr.mxu0 0.0
      %2007 = vmatpush1.msra.mxu0 0.0
      %2008 = vmatprep.subr.mxu0 0.0
      %2009 = vmatpush1.msra.mxu0 0.0
      %2010 = vmatprep.subr.mxu0 0.0
      %2011 = vmatpush1.msra.mxu0 0.0
      %2012 = vmatprep.subr.mxu0 0.0
      %2013 = vmatpush1.msra.mxu0 0.0
      %2014 = vmatprep.subr.mxu0 0.0
      %2015 = vmatpush1.msra.mxu0 0.0
      %2016 = vmatprep.subr.mxu0 0.0
      %2017 = vmatpush1.msra.mxu0 0.0
      %2018 = vmatprep.subr.mxu0 0.0
      %2019 = vmatpush1.msra.mxu0 0.0
      %2020 = vmatprep.subr.mxu0 0.0
      %2021 = vmatpush1.msra.mxu0 0.0
      %2022 = vmatprep.subr.mxu0 0.0
      %2023 = vmatpush1.msra.mxu0 %v1990
      %2024 = vmatprep.subr.mxu0 0.0
      %2025 = vmatpush1.msra.mxu0 %v1989
      %2026 = vmatprep.subr.mxu0 0.0
      %2027 = vmatpush2.msra.mxu0 0.0
      %2028 = vmatprep.subr.mxu0 0.0
      %2029 = vmatpush2.msra.mxu0 0.0
      %2030 = vmatprep.subr.mxu0 0.0
      %2031 = vmatpush2.msra.mxu0 0.0
      %2032 = vmatprep.subr.mxu0 0.0
      %2033 = vmatpush2.msra.mxu0 0.0
      %2034 = vmatprep.subr.mxu0 0.0
      %2035 = vmatpush2.msra.mxu0 0.0
      %2036 = vmatprep.subr.mxu0 0.0
      %2037 = vmatpush2.msra.mxu0 0.0
      %2038 = vmatprep.subr.mxu0 0.0
      %2039 = vmatpush2.msra.mxu0 0.0
      %2040 = vmatprep.subr.mxu0 0.0
      %2041 = vmatpush2.msra.mxu0 0.0
      %2042 = vmatprep.subr.mxu0 0.0
      %2043 = vmatpush2.msra.mxu0 0.0
      %2044 = vmatprep.subr.mxu0 0.0
      %2045 = vmatpush2.msra.mxu0 0.0
      %2046 = vmatprep.subr.mxu0 0.0
      %2047 = vmatpush2.msra.mxu0 0.0
      %2048 = vmatprep.subr.mxu0 0.0
      %2049 = vmatpush2.msra.mxu0 0.0
      %2050 = vmatprep.subr.mxu0 0.0
      %2051 = vmatpush2.msra.mxu0 0.0
      %2052 = vmatprep.subr.mxu0 0.0
      %2053 = vmatpush2.msra.mxu0 0.0
      %2054 = vmatprep.subr.mxu0 0.0
      %2055 = vmatpush2.msra.mxu0 0.0
      %2056 = vmatprep.subr.mxu0 0.0
      %2057 = vmatpush2.msra.mxu0 0.0
      %2058 = vmatprep.mubr.f32.mxu0 0.0
      %2059 = vmatmul.mubr.f32.gmra.mxu0 %v1992
      %v2060 = vpop.f32.mrf.mxu0
      %v2061 = vadd.f32 0.0, %v2060
      %v2062 = vpop.f32.mrf.mxu0
      %2063 = vdwg.mxu0
      %v2064 = vadd.f32 %v1987, %v2061
      %s2065 = scalar_lea.vmem %s4, 240
      %v2066 = vld [vmem:[%s2065] sm:$0xff]
      %v2067 = vld [vmem:[%s2065 + $0x8] sm:$0xff]
      %v2069 = vsel %vm917, %v854, 0
      %2071 = vmatprep.subr.mxu0 0.0
      %2072 = vmatpush1.msra.mxu0 0.0
      %2073 = vmatprep.subr.mxu0 0.0
      %2074 = vmatpush1.msra.mxu0 0.0
      %2075 = vmatprep.subr.mxu0 0.0
      %2076 = vmatpush1.msra.mxu0 0.0
      %2077 = vmatprep.subr.mxu0 0.0
      %2078 = vmatpush1.msra.mxu0 0.0
      %2079 = vmatprep.subr.mxu0 0.0
      %2080 = vmatpush1.msra.mxu0 0.0
      %2081 = vmatprep.subr.mxu0 0.0
      %2082 = vmatpush1.msra.mxu0 0.0
      %2083 = vmatprep.subr.mxu0 0.0
      %2084 = vmatpush1.msra.mxu0 0.0
      %2085 = vmatprep.subr.mxu0 0.0
      %2086 = vmatpush1.msra.mxu0 0.0
      %2087 = vmatprep.subr.mxu0 0.0
      %2088 = vmatpush1.msra.mxu0 0.0
      %2089 = vmatprep.subr.mxu0 0.0
      %2090 = vmatpush1.msra.mxu0 0.0
      %2091 = vmatprep.subr.mxu0 0.0
      %2092 = vmatpush1.msra.mxu0 0.0
      %2093 = vmatprep.subr.mxu0 0.0
      %2094 = vmatpush1.msra.mxu0 0.0
      %2095 = vmatprep.subr.mxu0 0.0
      %2096 = vmatpush1.msra.mxu0 0.0
      %2097 = vmatprep.subr.mxu0 0.0
      %2098 = vmatpush1.msra.mxu0 0.0
      %2099 = vmatprep.subr.mxu0 0.0
      %2100 = vmatpush1.msra.mxu0 %v2067
      %2101 = vmatprep.subr.mxu0 0.0
      %2102 = vmatpush1.msra.mxu0 %v2066
      %2103 = vmatprep.subr.mxu0 0.0
      %2104 = vmatpush2.msra.mxu0 0.0
      %2105 = vmatprep.subr.mxu0 0.0
      %2106 = vmatpush2.msra.mxu0 0.0
      %2107 = vmatprep.subr.mxu0 0.0
      %2108 = vmatpush2.msra.mxu0 0.0
      %2109 = vmatprep.subr.mxu0 0.0
      %2110 = vmatpush2.msra.mxu0 0.0
      %2111 = vmatprep.subr.mxu0 0.0
      %2112 = vmatpush2.msra.mxu0 0.0
      %2113 = vmatprep.subr.mxu0 0.0
      %2114 = vmatpush2.msra.mxu0 0.0
      %2115 = vmatprep.subr.mxu0 0.0
      %2116 = vmatpush2.msra.mxu0 0.0
      %2117 = vmatprep.subr.mxu0 0.0
      %2118 = vmatpush2.msra.mxu0 0.0
      %2119 = vmatprep.subr.mxu0 0.0
      %2120 = vmatpush2.msra.mxu0 0.0
      %2121 = vmatprep.subr.mxu0 0.0
      %2122 = vmatpush2.msra.mxu0 0.0
      %2123 = vmatprep.subr.mxu0 0.0
      %2124 = vmatpush2.msra.mxu0 0.0
      %2125 = vmatprep.subr.mxu0 0.0
      %2126 = vmatpush2.msra.mxu0 0.0
      %2127 = vmatprep.subr.mxu0 0.0
      %2128 = vmatpush2.msra.mxu0 0.0
      %2129 = vmatprep.subr.mxu0 0.0
      %2130 = vmatpush2.msra.mxu0 0.0
      %2131 = vmatprep.subr.mxu0 0.0
      %2132 = vmatpush2.msra.mxu0 0.0
      %2133 = vmatprep.subr.mxu0 0.0
      %2134 = vmatpush2.msra.mxu0 0.0
      %2135 = vmatprep.mubr.f32.mxu0 0.0
      %2136 = vmatmul.mubr.f32.gmra.mxu0 %v2069
      %v2137 = vpop.f32.mrf.mxu0
      %v2138 = vadd.f32 0.0, %v2137
      %v2139 = vpop.f32.mrf.mxu0
      %2140 = vdwg.mxu0
      %v2141 = vadd.f32 %v2064, %v2138
      %s2142 = scalar_lea.vmem %s4, 256
      %v2143 = vld [vmem:[%s2142] sm:$0xff]
      %v2144 = vld [vmem:[%s2142 + $0x8] sm:$0xff]
      %v2146 = vsel %vm917, %v859, 0
      %2148 = vmatprep.subr.mxu0 0.0
      %2149 = vmatpush1.msra.mxu0 0.0
      %2150 = vmatprep.subr.mxu0 0.0
      %2151 = vmatpush1.msra.mxu0 0.0
      %2152 = vmatprep.subr.mxu0 0.0
      %2153 = vmatpush1.msra.mxu0 0.0
      %2154 = vmatprep.subr.mxu0 0.0
      %2155 = vmatpush1.msra.mxu0 0.0
      %2156 = vmatprep.subr.mxu0 0.0
      %2157 = vmatpush1.msra.mxu0 0.0
      %2158 = vmatprep.subr.mxu0 0.0
      %2159 = vmatpush1.msra.mxu0 0.0
      %2160 = vmatprep.subr.mxu0 0.0
      %2161 = vmatpush1.msra.mxu0 0.0
      %2162 = vmatprep.subr.mxu0 0.0
      %2163 = vmatpush1.msra.mxu0 0.0
      %2164 = vmatprep.subr.mxu0 0.0
      %2165 = vmatpush1.msra.mxu0 0.0
      %2166 = vmatprep.subr.mxu0 0.0
      %2167 = vmatpush1.msra.mxu0 0.0
      %2168 = vmatprep.subr.mxu0 0.0
      %2169 = vmatpush1.msra.mxu0 0.0
      %2170 = vmatprep.subr.mxu0 0.0
      %2171 = vmatpush1.msra.mxu0 0.0
      %2172 = vmatprep.subr.mxu0 0.0
      %2173 = vmatpush1.msra.mxu0 0.0
      %2174 = vmatprep.subr.mxu0 0.0
      %2175 = vmatpush1.msra.mxu0 0.0
      %2176 = vmatprep.subr.mxu0 0.0
      %2177 = vmatpush1.msra.mxu0 %v2144
      %2178 = vmatprep.subr.mxu0 0.0
      %2179 = vmatpush1.msra.mxu0 %v2143
      %2180 = vmatprep.subr.mxu0 0.0
      %2181 = vmatpush2.msra.mxu0 0.0
      %2182 = vmatprep.subr.mxu0 0.0
      %2183 = vmatpush2.msra.mxu0 0.0
      %2184 = vmatprep.subr.mxu0 0.0
      %2185 = vmatpush2.msra.mxu0 0.0
      %2186 = vmatprep.subr.mxu0 0.0
      %2187 = vmatpush2.msra.mxu0 0.0
      %2188 = vmatprep.subr.mxu0 0.0
      %2189 = vmatpush2.msra.mxu0 0.0
      %2190 = vmatprep.subr.mxu0 0.0
      %2191 = vmatpush2.msra.mxu0 0.0
      %2192 = vmatprep.subr.mxu0 0.0
      %2193 = vmatpush2.msra.mxu0 0.0
      %2194 = vmatprep.subr.mxu0 0.0
      %2195 = vmatpush2.msra.mxu0 0.0
      %2196 = vmatprep.subr.mxu0 0.0
      %2197 = vmatpush2.msra.mxu0 0.0
      %2198 = vmatprep.subr.mxu0 0.0
      %2199 = vmatpush2.msra.mxu0 0.0
      %2200 = vmatprep.subr.mxu0 0.0
      %2201 = vmatpush2.msra.mxu0 0.0
      %2202 = vmatprep.subr.mxu0 0.0
      %2203 = vmatpush2.msra.mxu0 0.0
      %2204 = vmatprep.subr.mxu0 0.0
      %2205 = vmatpush2.msra.mxu0 0.0
      %2206 = vmatprep.subr.mxu0 0.0
      %2207 = vmatpush2.msra.mxu0 0.0
      %2208 = vmatprep.subr.mxu0 0.0
      %2209 = vmatpush2.msra.mxu0 0.0
      %2210 = vmatprep.subr.mxu0 0.0
      %2211 = vmatpush2.msra.mxu0 0.0
      %2212 = vmatprep.mubr.f32.mxu0 0.0
      %2213 = vmatmul.mubr.f32.gmra.mxu0 %v2146
      %v2214 = vpop.f32.mrf.mxu0
      %v2215 = vadd.f32 0.0, %v2214
      %v2216 = vpop.f32.mrf.mxu0
      %2217 = vdwg.mxu0
      %v2218 = vadd.f32 %v2141, %v2215
      %s2219 = scalar_lea.vmem %s4, 272
      %v2220 = vld [vmem:[%s2219] sm:$0xff]
      %v2221 = vld [vmem:[%s2219 + $0x8] sm:$0xff]
      %v2223 = vsel %vm917, %v864, 0
      %2225 = vmatprep.subr.mxu0 0.0
      %2226 = vmatpush1.msra.mxu0 0.0
      %2227 = vmatprep.subr.mxu0 0.0
      %2228 = vmatpush1.msra.mxu0 0.0
      %2229 = vmatprep.subr.mxu0 0.0
      %2230 = vmatpush1.msra.mxu0 0.0
      %2231 = vmatprep.subr.mxu0 0.0
      %2232 = vmatpush1.msra.mxu0 0.0
      %2233 = vmatprep.subr.mxu0 0.0
      %2234 = vmatpush1.msra.mxu0 0.0
      %2235 = vmatprep.subr.mxu0 0.0
      %2236 = vmatpush1.msra.mxu0 0.0
      %2237 = vmatprep.subr.mxu0 0.0
      %2238 = vmatpush1.msra.mxu0 0.0
      %2239 = vmatprep.subr.mxu0 0.0
      %2240 = vmatpush1.msra.mxu0 0.0
      %2241 = vmatprep.subr.mxu0 0.0
      %2242 = vmatpush1.msra.mxu0 0.0
      %2243 = vmatprep.subr.mxu0 0.0
      %2244 = vmatpush1.msra.mxu0 0.0
      %2245 = vmatprep.subr.mxu0 0.0
      %2246 = vmatpush1.msra.mxu0 0.0
      %2247 = vmatprep.subr.mxu0 0.0
      %2248 = vmatpush1.msra.mxu0 0.0
      %2249 = vmatprep.subr.mxu0 0.0
      %2250 = vmatpush1.msra.mxu0 0.0
      %2251 = vmatprep.subr.mxu0 0.0
      %2252 = vmatpush1.msra.mxu0 0.0
      %2253 = vmatprep.subr.mxu0 0.0
      %2254 = vmatpush1.msra.mxu0 %v2221
      %2255 = vmatprep.subr.mxu0 0.0
      %2256 = vmatpush1.msra.mxu0 %v2220
      %2257 = vmatprep.subr.mxu0 0.0
      %2258 = vmatpush2.msra.mxu0 0.0
      %2259 = vmatprep.subr.mxu0 0.0
      %2260 = vmatpush2.msra.mxu0 0.0
      %2261 = vmatprep.subr.mxu0 0.0
      %2262 = vmatpush2.msra.mxu0 0.0
      %2263 = vmatprep.subr.mxu0 0.0
      %2264 = vmatpush2.msra.mxu0 0.0
      %2265 = vmatprep.subr.mxu0 0.0
      %2266 = vmatpush2.msra.mxu0 0.0
      %2267 = vmatprep.subr.mxu0 0.0
      %2268 = vmatpush2.msra.mxu0 0.0
      %2269 = vmatprep.subr.mxu0 0.0
      %2270 = vmatpush2.msra.mxu0 0.0
      %2271 = vmatprep.subr.mxu0 0.0
      %2272 = vmatpush2.msra.mxu0 0.0
      %2273 = vmatprep.subr.mxu0 0.0
      %2274 = vmatpush2.msra.mxu0 0.0
      %2275 = vmatprep.subr.mxu0 0.0
      %2276 = vmatpush2.msra.mxu0 0.0
      %2277 = vmatprep.subr.mxu0 0.0
      %2278 = vmatpush2.msra.mxu0 0.0
      %2279 = vmatprep.subr.mxu0 0.0
      %2280 = vmatpush2.msra.mxu0 0.0
      %2281 = vmatprep.subr.mxu0 0.0
      %2282 = vmatpush2.msra.mxu0 0.0
      %2283 = vmatprep.subr.mxu0 0.0
      %2284 = vmatpush2.msra.mxu0 0.0
      %2285 = vmatprep.subr.mxu0 0.0
      %2286 = vmatpush2.msra.mxu0 0.0
      %2287 = vmatprep.subr.mxu0 0.0
      %2288 = vmatpush2.msra.mxu0 0.0
      %2289 = vmatprep.mubr.f32.mxu0 0.0
      %2290 = vmatmul.mubr.f32.gmra.mxu0 %v2223
      %v2291 = vpop.f32.mrf.mxu0
      %v2292 = vadd.f32 0.0, %v2291
      %v2293 = vpop.f32.mrf.mxu0
      %2294 = vdwg.mxu0
      %v2295 = vadd.f32 %v2218, %v2292
      %s2296 = scalar_lea.vmem %s4, 288
      %v2297 = vld [vmem:[%s2296] sm:$0xff]
      %v2298 = vld [vmem:[%s2296 + $0x8] sm:$0xff]
      %v2300 = vsel %vm917, %v869, 0
      %2302 = vmatprep.subr.mxu0 0.0
      %2303 = vmatpush1.msra.mxu0 0.0
      %2304 = vmatprep.subr.mxu0 0.0
      %2305 = vmatpush1.msra.mxu0 0.0
      %2306 = vmatprep.subr.mxu0 0.0
      %2307 = vmatpush1.msra.mxu0 0.0
      %2308 = vmatprep.subr.mxu0 0.0
      %2309 = vmatpush1.msra.mxu0 0.0
      %2310 = vmatprep.subr.mxu0 0.0
      %2311 = vmatpush1.msra.mxu0 0.0
      %2312 = vmatprep.subr.mxu0 0.0
      %2313 = vmatpush1.msra.mxu0 0.0
      %2314 = vmatprep.subr.mxu0 0.0
      %2315 = vmatpush1.msra.mxu0 0.0
      %2316 = vmatprep.subr.mxu0 0.0
      %2317 = vmatpush1.msra.mxu0 0.0
      %2318 = vmatprep.subr.mxu0 0.0
      %2319 = vmatpush1.msra.mxu0 0.0
      %2320 = vmatprep.subr.mxu0 0.0
      %2321 = vmatpush1.msra.mxu0 0.0
      %2322 = vmatprep.subr.mxu0 0.0
      %2323 = vmatpush1.msra.mxu0 0.0
      %2324 = vmatprep.subr.mxu0 0.0
      %2325 = vmatpush1.msra.mxu0 0.0
      %2326 = vmatprep.subr.mxu0 0.0
      %2327 = vmatpush1.msra.mxu0 0.0
      %2328 = vmatprep.subr.mxu0 0.0
      %2329 = vmatpush1.msra.mxu0 0.0
      %2330 = vmatprep.subr.mxu0 0.0
      %2331 = vmatpush1.msra.mxu0 %v2298
      %2332 = vmatprep.subr.mxu0 0.0
      %2333 = vmatpush1.msra.mxu0 %v2297
      %2334 = vmatprep.subr.mxu0 0.0
      %2335 = vmatpush2.msra.mxu0 0.0
      %2336 = vmatprep.subr.mxu0 0.0
      %2337 = vmatpush2.msra.mxu0 0.0
      %2338 = vmatprep.subr.mxu0 0.0
      %2339 = vmatpush2.msra.mxu0 0.0
      %2340 = vmatprep.subr.mxu0 0.0
      %2341 = vmatpush2.msra.mxu0 0.0
      %2342 = vmatprep.subr.mxu0 0.0
      %2343 = vmatpush2.msra.mxu0 0.0
      %2344 = vmatprep.subr.mxu0 0.0
      %2345 = vmatpush2.msra.mxu0 0.0
      %2346 = vmatprep.subr.mxu0 0.0
      %2347 = vmatpush2.msra.mxu0 0.0
      %2348 = vmatprep.subr.mxu0 0.0
      %2349 = vmatpush2.msra.mxu0 0.0
      %2350 = vmatprep.subr.mxu0 0.0
      %2351 = vmatpush2.msra.mxu0 0.0
      %2352 = vmatprep.subr.mxu0 0.0
      %2353 = vmatpush2.msra.mxu0 0.0
      %2354 = vmatprep.subr.mxu0 0.0
      %2355 = vmatpush2.msra.mxu0 0.0
      %2356 = vmatprep.subr.mxu0 0.0
      %2357 = vmatpush2.msra.mxu0 0.0
      %2358 = vmatprep.subr.mxu0 0.0
      %2359 = vmatpush2.msra.mxu0 0.0
      %2360 = vmatprep.subr.mxu0 0.0
      %2361 = vmatpush2.msra.mxu0 0.0
      %2362 = vmatprep.subr.mxu0 0.0
      %2363 = vmatpush2.msra.mxu0 0.0
      %2364 = vmatprep.subr.mxu0 0.0
      %2365 = vmatpush2.msra.mxu0 0.0
      %2366 = vmatprep.mubr.f32.mxu0 0.0
      %2367 = vmatmul.mubr.f32.gmra.mxu0 %v2300
      %v2368 = vpop.f32.mrf.mxu0
      %v2369 = vadd.f32 0.0, %v2368
      %v2370 = vpop.f32.mrf.mxu0
      %2371 = vdwg.mxu0
      %v2372 = vadd.f32 %v2295, %v2369
      %s2373 = scalar_lea.vmem %s4, 304
      %v2374 = vld [vmem:[%s2373] sm:$0xff]
      %v2375 = vld [vmem:[%s2373 + $0x8] sm:$0xff]
      %v2377 = vsel %vm917, %v874, 0
      %2379 = vmatprep.subr.mxu0 0.0
      %2380 = vmatpush1.msra.mxu0 0.0
      %2381 = vmatprep.subr.mxu0 0.0
      %2382 = vmatpush1.msra.mxu0 0.0
      %2383 = vmatprep.subr.mxu0 0.0
      %2384 = vmatpush1.msra.mxu0 0.0
      %2385 = vmatprep.subr.mxu0 0.0
      %2386 = vmatpush1.msra.mxu0 0.0
      %2387 = vmatprep.subr.mxu0 0.0
      %2388 = vmatpush1.msra.mxu0 0.0
      %2389 = vmatprep.subr.mxu0 0.0
      %2390 = vmatpush1.msra.mxu0 0.0
      %2391 = vmatprep.subr.mxu0 0.0
      %2392 = vmatpush1.msra.mxu0 0.0
      %2393 = vmatprep.subr.mxu0 0.0
      %2394 = vmatpush1.msra.mxu0 0.0
      %2395 = vmatprep.subr.mxu0 0.0
      %2396 = vmatpush1.msra.mxu0 0.0
      %2397 = vmatprep.subr.mxu0 0.0
      %2398 = vmatpush1.msra.mxu0 0.0
      %2399 = vmatprep.subr.mxu0 0.0
      %2400 = vmatpush1.msra.mxu0 0.0
      %2401 = vmatprep.subr.mxu0 0.0
      %2402 = vmatpush1.msra.mxu0 0.0
      %2403 = vmatprep.subr.mxu0 0.0
      %2404 = vmatpush1.msra.mxu0 0.0
      %2405 = vmatprep.subr.mxu0 0.0
      %2406 = vmatpush1.msra.mxu0 0.0
      %2407 = vmatprep.subr.mxu0 0.0
      %2408 = vmatpush1.msra.mxu0 %v2375
      %2409 = vmatprep.subr.mxu0 0.0
      %2410 = vmatpush1.msra.mxu0 %v2374
      %2411 = vmatprep.subr.mxu0 0.0
      %2412 = vmatpush2.msra.mxu0 0.0
      %2413 = vmatprep.subr.mxu0 0.0
      %2414 = vmatpush2.msra.mxu0 0.0
      %2415 = vmatprep.subr.mxu0 0.0
      %2416 = vmatpush2.msra.mxu0 0.0
      %2417 = vmatprep.subr.mxu0 0.0
      %2418 = vmatpush2.msra.mxu0 0.0
      %2419 = vmatprep.subr.mxu0 0.0
      %2420 = vmatpush2.msra.mxu0 0.0
      %2421 = vmatprep.subr.mxu0 0.0
      %2422 = vmatpush2.msra.mxu0 0.0
      %2423 = vmatprep.subr.mxu0 0.0
      %2424 = vmatpush2.msra.mxu0 0.0
      %2425 = vmatprep.subr.mxu0 0.0
      %2426 = vmatpush2.msra.mxu0 0.0
      %2427 = vmatprep.subr.mxu0 0.0
      %2428 = vmatpush2.msra.mxu0 0.0
      %2429 = vmatprep.subr.mxu0 0.0
      %2430 = vmatpush2.msra.mxu0 0.0
      %2431 = vmatprep.subr.mxu0 0.0
      %2432 = vmatpush2.msra.mxu0 0.0
      %2433 = vmatprep.subr.mxu0 0.0
      %2434 = vmatpush2.msra.mxu0 0.0
      %2435 = vmatprep.subr.mxu0 0.0
      %2436 = vmatpush2.msra.mxu0 0.0
      %2437 = vmatprep.subr.mxu0 0.0
      %2438 = vmatpush2.msra.mxu0 0.0
      %2439 = vmatprep.subr.mxu0 0.0
      %2440 = vmatpush2.msra.mxu0 0.0
      %2441 = vmatprep.subr.mxu0 0.0
      %2442 = vmatpush2.msra.mxu0 0.0
      %2443 = vmatprep.mubr.f32.mxu0 0.0
      %2444 = vmatmul.mubr.f32.gmra.mxu0 %v2377
      %v2445 = vpop.f32.mrf.mxu0
      %v2446 = vadd.f32 0.0, %v2445
      %v2447 = vpop.f32.mrf.mxu0
      %2448 = vdwg.mxu0
      %v2449 = vadd.f32 %v2372, %v2446
      %s2450 = scalar_lea.vmem %s4, 320
      %v2451 = vld [vmem:[%s2450] sm:$0xff]
      %v2452 = vld [vmem:[%s2450 + $0x8] sm:$0xff]
      %v2454 = vsel %vm917, %v879, 0
      %2456 = vmatprep.subr.mxu0 0.0
      %2457 = vmatpush1.msra.mxu0 0.0
      %2458 = vmatprep.subr.mxu0 0.0
      %2459 = vmatpush1.msra.mxu0 0.0
      %2460 = vmatprep.subr.mxu0 0.0
      %2461 = vmatpush1.msra.mxu0 0.0
      %2462 = vmatprep.subr.mxu0 0.0
      %2463 = vmatpush1.msra.mxu0 0.0
      %2464 = vmatprep.subr.mxu0 0.0
      %2465 = vmatpush1.msra.mxu0 0.0
      %2466 = vmatprep.subr.mxu0 0.0
      %2467 = vmatpush1.msra.mxu0 0.0
      %2468 = vmatprep.subr.mxu0 0.0
      %2469 = vmatpush1.msra.mxu0 0.0
      %2470 = vmatprep.subr.mxu0 0.0
      %2471 = vmatpush1.msra.mxu0 0.0
      %2472 = vmatprep.subr.mxu0 0.0
      %2473 = vmatpush1.msra.mxu0 0.0
      %2474 = vmatprep.subr.mxu0 0.0
      %2475 = vmatpush1.msra.mxu0 0.0
      %2476 = vmatprep.subr.mxu0 0.0
      %2477 = vmatpush1.msra.mxu0 0.0
      %2478 = vmatprep.subr.mxu0 0.0
      %2479 = vmatpush1.msra.mxu0 0.0
      %2480 = vmatprep.subr.mxu0 0.0
      %2481 = vmatpush1.msra.mxu0 0.0
      %2482 = vmatprep.subr.mxu0 0.0
      %2483 = vmatpush1.msra.mxu0 0.0
      %2484 = vmatprep.subr.mxu0 0.0
      %2485 = vmatpush1.msra.mxu0 %v2452
      %2486 = vmatprep.subr.mxu0 0.0
      %2487 = vmatpush1.msra.mxu0 %v2451
      %2488 = vmatprep.subr.mxu0 0.0
      %2489 = vmatpush2.msra.mxu0 0.0
      %2490 = vmatprep.subr.mxu0 0.0
      %2491 = vmatpush2.msra.mxu0 0.0
      %2492 = vmatprep.subr.mxu0 0.0
      %2493 = vmatpush2.msra.mxu0 0.0
      %2494 = vmatprep.subr.mxu0 0.0
      %2495 = vmatpush2.msra.mxu0 0.0
      %2496 = vmatprep.subr.mxu0 0.0
      %2497 = vmatpush2.msra.mxu0 0.0
      %2498 = vmatprep.subr.mxu0 0.0
      %2499 = vmatpush2.msra.mxu0 0.0
      %2500 = vmatprep.subr.mxu0 0.0
      %2501 = vmatpush2.msra.mxu0 0.0
      %2502 = vmatprep.subr.mxu0 0.0
      %2503 = vmatpush2.msra.mxu0 0.0
      %2504 = vmatprep.subr.mxu0 0.0
      %2505 = vmatpush2.msra.mxu0 0.0
      %2506 = vmatprep.subr.mxu0 0.0
      %2507 = vmatpush2.msra.mxu0 0.0
      %2508 = vmatprep.subr.mxu0 0.0
      %2509 = vmatpush2.msra.mxu0 0.0
      %2510 = vmatprep.subr.mxu0 0.0
      %2511 = vmatpush2.msra.mxu0 0.0
      %2512 = vmatprep.subr.mxu0 0.0
      %2513 = vmatpush2.msra.mxu0 0.0
      %2514 = vmatprep.subr.mxu0 0.0
      %2515 = vmatpush2.msra.mxu0 0.0
      %2516 = vmatprep.subr.mxu0 0.0
      %2517 = vmatpush2.msra.mxu0 0.0
      %2518 = vmatprep.subr.mxu0 0.0
      %2519 = vmatpush2.msra.mxu0 0.0
      %2520 = vmatprep.mubr.f32.mxu0 0.0
      %2521 = vmatmul.mubr.f32.gmra.mxu0 %v2454
      %v2522 = vpop.f32.mrf.mxu0
      %v2523 = vadd.f32 0.0, %v2522
      %v2524 = vpop.f32.mrf.mxu0
      %2525 = vdwg.mxu0
      %v2526 = vadd.f32 %v2449, %v2523
      %s2527 = scalar_lea.vmem %s4, 336
      %v2528 = vld [vmem:[%s2527] sm:$0xff]
      %v2529 = vld [vmem:[%s2527 + $0x8] sm:$0xff]
      %v2531 = vsel %vm917, %v884, 0
      %2533 = vmatprep.subr.mxu0 0.0
      %2534 = vmatpush1.msra.mxu0 0.0
      %2535 = vmatprep.subr.mxu0 0.0
      %2536 = vmatpush1.msra.mxu0 0.0
      %2537 = vmatprep.subr.mxu0 0.0
      %2538 = vmatpush1.msra.mxu0 0.0
      %2539 = vmatprep.subr.mxu0 0.0
      %2540 = vmatpush1.msra.mxu0 0.0
      %2541 = vmatprep.subr.mxu0 0.0
      %2542 = vmatpush1.msra.mxu0 0.0
      %2543 = vmatprep.subr.mxu0 0.0
      %2544 = vmatpush1.msra.mxu0 0.0
      %2545 = vmatprep.subr.mxu0 0.0
      %2546 = vmatpush1.msra.mxu0 0.0
      %2547 = vmatprep.subr.mxu0 0.0
      %2548 = vmatpush1.msra.mxu0 0.0
      %2549 = vmatprep.subr.mxu0 0.0
      %2550 = vmatpush1.msra.mxu0 0.0
      %2551 = vmatprep.subr.mxu0 0.0
      %2552 = vmatpush1.msra.mxu0 0.0
      %2553 = vmatprep.subr.mxu0 0.0
      %2554 = vmatpush1.msra.mxu0 0.0
      %2555 = vmatprep.subr.mxu0 0.0
      %2556 = vmatpush1.msra.mxu0 0.0
      %2557 = vmatprep.subr.mxu0 0.0
      %2558 = vmatpush1.msra.mxu0 0.0
      %2559 = vmatprep.subr.mxu0 0.0
      %2560 = vmatpush1.msra.mxu0 0.0
      %2561 = vmatprep.subr.mxu0 0.0
      %2562 = vmatpush1.msra.mxu0 %v2529
      %2563 = vmatprep.subr.mxu0 0.0
      %2564 = vmatpush1.msra.mxu0 %v2528
      %2565 = vmatprep.subr.mxu0 0.0
      %2566 = vmatpush2.msra.mxu0 0.0
      %2567 = vmatprep.subr.mxu0 0.0
      %2568 = vmatpush2.msra.mxu0 0.0
      %2569 = vmatprep.subr.mxu0 0.0
      %2570 = vmatpush2.msra.mxu0 0.0
      %2571 = vmatprep.subr.mxu0 0.0
      %2572 = vmatpush2.msra.mxu0 0.0
      %2573 = vmatprep.subr.mxu0 0.0
      %2574 = vmatpush2.msra.mxu0 0.0
      %2575 = vmatprep.subr.mxu0 0.0
      %2576 = vmatpush2.msra.mxu0 0.0
      %2577 = vmatprep.subr.mxu0 0.0
      %2578 = vmatpush2.msra.mxu0 0.0
      %2579 = vmatprep.subr.mxu0 0.0
      %2580 = vmatpush2.msra.mxu0 0.0
      %2581 = vmatprep.subr.mxu0 0.0
      %2582 = vmatpush2.msra.mxu0 0.0
      %2583 = vmatprep.subr.mxu0 0.0
      %2584 = vmatpush2.msra.mxu0 0.0
      %2585 = vmatprep.subr.mxu0 0.0
      %2586 = vmatpush2.msra.mxu0 0.0
      %2587 = vmatprep.subr.mxu0 0.0
      %2588 = vmatpush2.msra.mxu0 0.0
      %2589 = vmatprep.subr.mxu0 0.0
      %2590 = vmatpush2.msra.mxu0 0.0
      %2591 = vmatprep.subr.mxu0 0.0
      %2592 = vmatpush2.msra.mxu0 0.0
      %2593 = vmatprep.subr.mxu0 0.0
      %2594 = vmatpush2.msra.mxu0 0.0
      %2595 = vmatprep.subr.mxu0 0.0
      %2596 = vmatpush2.msra.mxu0 0.0
      %2597 = vmatprep.mubr.f32.mxu0 0.0
      %2598 = vmatmul.mubr.f32.gmra.mxu0 %v2531
      %v2599 = vpop.f32.mrf.mxu0
      %v2600 = vadd.f32 0.0, %v2599
      %v2601 = vpop.f32.mrf.mxu0
      %2602 = vdwg.mxu0
      %v2603 = vadd.f32 %v2526, %v2600
      %s2604 = scalar_lea.vmem %s4, 352
      %v2605 = vld [vmem:[%s2604] sm:$0xff]
      %v2606 = vld [vmem:[%s2604 + $0x8] sm:$0xff]
      %v2608 = vsel %vm917, %v889, 0
      %2610 = vmatprep.subr.mxu0 0.0
      %2611 = vmatpush1.msra.mxu0 0.0
      %2612 = vmatprep.subr.mxu0 0.0
      %2613 = vmatpush1.msra.mxu0 0.0
      %2614 = vmatprep.subr.mxu0 0.0
      %2615 = vmatpush1.msra.mxu0 0.0
      %2616 = vmatprep.subr.mxu0 0.0
      %2617 = vmatpush1.msra.mxu0 0.0
      %2618 = vmatprep.subr.mxu0 0.0
      %2619 = vmatpush1.msra.mxu0 0.0
      %2620 = vmatprep.subr.mxu0 0.0
      %2621 = vmatpush1.msra.mxu0 0.0
      %2622 = vmatprep.subr.mxu0 0.0
      %2623 = vmatpush1.msra.mxu0 0.0
      %2624 = vmatprep.subr.mxu0 0.0
      %2625 = vmatpush1.msra.mxu0 0.0
      %2626 = vmatprep.subr.mxu0 0.0
      %2627 = vmatpush1.msra.mxu0 0.0
      %2628 = vmatprep.subr.mxu0 0.0
      %2629 = vmatpush1.msra.mxu0 0.0
      %2630 = vmatprep.subr.mxu0 0.0
      %2631 = vmatpush1.msra.mxu0 0.0
      %2632 = vmatprep.subr.mxu0 0.0
      %2633 = vmatpush1.msra.mxu0 0.0
      %2634 = vmatprep.subr.mxu0 0.0
      %2635 = vmatpush1.msra.mxu0 0.0
      %2636 = vmatprep.subr.mxu0 0.0
      %2637 = vmatpush1.msra.mxu0 0.0
      %2638 = vmatprep.subr.mxu0 0.0
      %2639 = vmatpush1.msra.mxu0 %v2606
      %2640 = vmatprep.subr.mxu0 0.0
      %2641 = vmatpush1.msra.mxu0 %v2605
      %2642 = vmatprep.subr.mxu0 0.0
      %2643 = vmatpush2.msra.mxu0 0.0
      %2644 = vmatprep.subr.mxu0 0.0
      %2645 = vmatpush2.msra.mxu0 0.0
      %2646 = vmatprep.subr.mxu0 0.0
      %2647 = vmatpush2.msra.mxu0 0.0
      %2648 = vmatprep.subr.mxu0 0.0
      %2649 = vmatpush2.msra.mxu0 0.0
      %2650 = vmatprep.subr.mxu0 0.0
      %2651 = vmatpush2.msra.mxu0 0.0
      %2652 = vmatprep.subr.mxu0 0.0
      %2653 = vmatpush2.msra.mxu0 0.0
      %2654 = vmatprep.subr.mxu0 0.0
      %2655 = vmatpush2.msra.mxu0 0.0
      %2656 = vmatprep.subr.mxu0 0.0
      %2657 = vmatpush2.msra.mxu0 0.0
      %2658 = vmatprep.subr.mxu0 0.0
      %2659 = vmatpush2.msra.mxu0 0.0
      %2660 = vmatprep.subr.mxu0 0.0
      %2661 = vmatpush2.msra.mxu0 0.0
      %2662 = vmatprep.subr.mxu0 0.0
      %2663 = vmatpush2.msra.mxu0 0.0
      %2664 = vmatprep.subr.mxu0 0.0
      %2665 = vmatpush2.msra.mxu0 0.0
      %2666 = vmatprep.subr.mxu0 0.0
      %2667 = vmatpush2.msra.mxu0 0.0
      %2668 = vmatprep.subr.mxu0 0.0
      %2669 = vmatpush2.msra.mxu0 0.0
      %2670 = vmatprep.subr.mxu0 0.0
      %2671 = vmatpush2.msra.mxu0 0.0
      %2672 = vmatprep.subr.mxu0 0.0
      %2673 = vmatpush2.msra.mxu0 0.0
      %2674 = vmatprep.mubr.f32.mxu0 0.0
      %2675 = vmatmul.mubr.f32.gmra.mxu0 %v2608
      %v2676 = vpop.f32.mrf.mxu0
      %v2677 = vadd.f32 0.0, %v2676
      %v2678 = vpop.f32.mrf.mxu0
      %2679 = vdwg.mxu0
      %v2680 = vadd.f32 %v2603, %v2677
      %s2681 = scalar_lea.vmem %s4, 368
      %v2682 = vld [vmem:[%s2681] sm:$0xff]
      %v2683 = vld [vmem:[%s2681 + $0x8] sm:$0xff]
      %v2685 = vsel %vm917, %v894, 0
      %2687 = vmatprep.subr.mxu0 0.0
      %2688 = vmatpush1.msra.mxu0 0.0
      %2689 = vmatprep.subr.mxu0 0.0
      %2690 = vmatpush1.msra.mxu0 0.0
      %2691 = vmatprep.subr.mxu0 0.0
      %2692 = vmatpush1.msra.mxu0 0.0
      %2693 = vmatprep.subr.mxu0 0.0
      %2694 = vmatpush1.msra.mxu0 0.0
      %2695 = vmatprep.subr.mxu0 0.0
      %2696 = vmatpush1.msra.mxu0 0.0
      %2697 = vmatprep.subr.mxu0 0.0
      %2698 = vmatpush1.msra.mxu0 0.0
      %2699 = vmatprep.subr.mxu0 0.0
      %2700 = vmatpush1.msra.mxu0 0.0
      %2701 = vmatprep.subr.mxu0 0.0
      %2702 = vmatpush1.msra.mxu0 0.0
      %2703 = vmatprep.subr.mxu0 0.0
      %2704 = vmatpush1.msra.mxu0 0.0
      %2705 = vmatprep.subr.mxu0 0.0
      %2706 = vmatpush1.msra.mxu0 0.0
      %2707 = vmatprep.subr.mxu0 0.0
      %2708 = vmatpush1.msra.mxu0 0.0
      %2709 = vmatprep.subr.mxu0 0.0
      %2710 = vmatpush1.msra.mxu0 0.0
      %2711 = vmatprep.subr.mxu0 0.0
      %2712 = vmatpush1.msra.mxu0 0.0
      %2713 = vmatprep.subr.mxu0 0.0
      %2714 = vmatpush1.msra.mxu0 0.0
      %2715 = vmatprep.subr.mxu0 0.0
      %2716 = vmatpush1.msra.mxu0 %v2683
      %2717 = vmatprep.subr.mxu0 0.0
      %2718 = vmatpush1.msra.mxu0 %v2682
      %2719 = vmatprep.subr.mxu0 0.0
      %2720 = vmatpush2.msra.mxu0 0.0
      %2721 = vmatprep.subr.mxu0 0.0
      %2722 = vmatpush2.msra.mxu0 0.0
      %2723 = vmatprep.subr.mxu0 0.0
      %2724 = vmatpush2.msra.mxu0 0.0
      %2725 = vmatprep.subr.mxu0 0.0
      %2726 = vmatpush2.msra.mxu0 0.0
      %2727 = vmatprep.subr.mxu0 0.0
      %2728 = vmatpush2.msra.mxu0 0.0
      %2729 = vmatprep.subr.mxu0 0.0
      %2730 = vmatpush2.msra.mxu0 0.0
      %2731 = vmatprep.subr.mxu0 0.0
      %2732 = vmatpush2.msra.mxu0 0.0
      %2733 = vmatprep.subr.mxu0 0.0
      %2734 = vmatpush2.msra.mxu0 0.0
      %2735 = vmatprep.subr.mxu0 0.0
      %2736 = vmatpush2.msra.mxu0 0.0
      %2737 = vmatprep.subr.mxu0 0.0
      %2738 = vmatpush2.msra.mxu0 0.0
      %2739 = vmatprep.subr.mxu0 0.0
      %2740 = vmatpush2.msra.mxu0 0.0
      %2741 = vmatprep.subr.mxu0 0.0
      %2742 = vmatpush2.msra.mxu0 0.0
      %2743 = vmatprep.subr.mxu0 0.0
      %2744 = vmatpush2.msra.mxu0 0.0
      %2745 = vmatprep.subr.mxu0 0.0
      %2746 = vmatpush2.msra.mxu0 0.0
      %2747 = vmatprep.subr.mxu0 0.0
      %2748 = vmatpush2.msra.mxu0 0.0
      %2749 = vmatprep.subr.mxu0 0.0
      %2750 = vmatpush2.msra.mxu0 0.0
      %2751 = vmatprep.mubr.f32.mxu0 0.0
      %2752 = vmatmul.mubr.f32.gmra.mxu0 %v2685
      %v2753 = vpop.f32.mrf.mxu0
      %v2754 = vadd.f32 0.0, %v2753
      %v2755 = vpop.f32.mrf.mxu0
      %2756 = vdwg.mxu0
      %v2757 = vadd.f32 %v2680, %v2754
      %s2758 = scalar_lea.vmem %s4, 384
      %v2759 = vld [vmem:[%s2758] sm:$0xff]
      %v2760 = vld [vmem:[%s2758 + $0x8] sm:$0xff]
      %v2762 = vsel %vm917, %v899, 0
      %2764 = vmatprep.subr.mxu0 0.0
      %2765 = vmatpush1.msra.mxu0 0.0
      %2766 = vmatprep.subr.mxu0 0.0
      %2767 = vmatpush1.msra.mxu0 0.0
      %2768 = vmatprep.subr.mxu0 0.0
      %2769 = vmatpush1.msra.mxu0 0.0
      %2770 = vmatprep.subr.mxu0 0.0
      %2771 = vmatpush1.msra.mxu0 0.0
      %2772 = vmatprep.subr.mxu0 0.0
      %2773 = vmatpush1.msra.mxu0 0.0
      %2774 = vmatprep.subr.mxu0 0.0
      %2775 = vmatpush1.msra.mxu0 0.0
      %2776 = vmatprep.subr.mxu0 0.0
      %2777 = vmatpush1.msra.mxu0 0.0
      %2778 = vmatprep.subr.mxu0 0.0
      %2779 = vmatpush1.msra.mxu0 0.0
      %2780 = vmatprep.subr.mxu0 0.0
      %2781 = vmatpush1.msra.mxu0 0.0
      %2782 = vmatprep.subr.mxu0 0.0
      %2783 = vmatpush1.msra.mxu0 0.0
      %2784 = vmatprep.subr.mxu0 0.0
      %2785 = vmatpush1.msra.mxu0 0.0
      %2786 = vmatprep.subr.mxu0 0.0
      %2787 = vmatpush1.msra.mxu0 0.0
      %2788 = vmatprep.subr.mxu0 0.0
      %2789 = vmatpush1.msra.mxu0 0.0
      %2790 = vmatprep.subr.mxu0 0.0
      %2791 = vmatpush1.msra.mxu0 0.0
      %2792 = vmatprep.subr.mxu0 0.0
      %2793 = vmatpush1.msra.mxu0 %v2760
      %2794 = vmatprep.subr.mxu0 0.0
      %2795 = vmatpush1.msra.mxu0 %v2759
      %2796 = vmatprep.subr.mxu0 0.0
      %2797 = vmatpush2.msra.mxu0 0.0
      %2798 = vmatprep.subr.mxu0 0.0
      %2799 = vmatpush2.msra.mxu0 0.0
      %2800 = vmatprep.subr.mxu0 0.0
      %2801 = vmatpush2.msra.mxu0 0.0
      %2802 = vmatprep.subr.mxu0 0.0
      %2803 = vmatpush2.msra.mxu0 0.0
      %2804 = vmatprep.subr.mxu0 0.0
      %2805 = vmatpush2.msra.mxu0 0.0
      %2806 = vmatprep.subr.mxu0 0.0
      %2807 = vmatpush2.msra.mxu0 0.0
      %2808 = vmatprep.subr.mxu0 0.0
      %2809 = vmatpush2.msra.mxu0 0.0
      %2810 = vmatprep.subr.mxu0 0.0
      %2811 = vmatpush2.msra.mxu0 0.0
      %2812 = vmatprep.subr.mxu0 0.0
      %2813 = vmatpush2.msra.mxu0 0.0
      %2814 = vmatprep.subr.mxu0 0.0
      %2815 = vmatpush2.msra.mxu0 0.0
      %2816 = vmatprep.subr.mxu0 0.0
      %2817 = vmatpush2.msra.mxu0 0.0
      %2818 = vmatprep.subr.mxu0 0.0
      %2819 = vmatpush2.msra.mxu0 0.0
      %2820 = vmatprep.subr.mxu0 0.0
      %2821 = vmatpush2.msra.mxu0 0.0
      %2822 = vmatprep.subr.mxu0 0.0
      %2823 = vmatpush2.msra.mxu0 0.0
      %2824 = vmatprep.subr.mxu0 0.0
      %2825 = vmatpush2.msra.mxu0 0.0
      %2826 = vmatprep.subr.mxu0 0.0
      %2827 = vmatpush2.msra.mxu0 0.0
      %2828 = vmatprep.mubr.f32.mxu0 0.0
      %2829 = vmatmul.mubr.f32.gmra.mxu0 %v2762
      %v2830 = vpop.f32.mrf.mxu0
      %v2831 = vadd.f32 0.0, %v2830
      %v2832 = vpop.f32.mrf.mxu0
      %2833 = vdwg.mxu0
      %v2834 = vadd.f32 %v2757, %v2831
      %s2835 = scalar_lea.vmem %s4, 400
      %v2836 = vld [vmem:[%s2835] sm:$0xff]
      %v2837 = vld [vmem:[%s2835 + $0x8] sm:$0xff]
      %v2839 = vsel %vm917, %v904, 0
      %2841 = vmatprep.subr.mxu0 0.0
      %2842 = vmatpush1.msra.mxu0 0.0
      %2843 = vmatprep.subr.mxu0 0.0
      %2844 = vmatpush1.msra.mxu0 0.0
      %2845 = vmatprep.subr.mxu0 0.0
      %2846 = vmatpush1.msra.mxu0 0.0
      %2847 = vmatprep.subr.mxu0 0.0
      %2848 = vmatpush1.msra.mxu0 0.0
      %2849 = vmatprep.subr.mxu0 0.0
      %2850 = vmatpush1.msra.mxu0 0.0
      %2851 = vmatprep.subr.mxu0 0.0
      %2852 = vmatpush1.msra.mxu0 0.0
      %2853 = vmatprep.subr.mxu0 0.0
      %2854 = vmatpush1.msra.mxu0 0.0
      %2855 = vmatprep.subr.mxu0 0.0
      %2856 = vmatpush1.msra.mxu0 0.0
      %2857 = vmatprep.subr.mxu0 0.0
      %2858 = vmatpush1.msra.mxu0 0.0
      %2859 = vmatprep.subr.mxu0 0.0
      %2860 = vmatpush1.msra.mxu0 0.0
      %2861 = vmatprep.subr.mxu0 0.0
      %2862 = vmatpush1.msra.mxu0 0.0
      %2863 = vmatprep.subr.mxu0 0.0
      %2864 = vmatpush1.msra.mxu0 0.0
      %2865 = vmatprep.subr.mxu0 0.0
      %2866 = vmatpush1.msra.mxu0 0.0
      %2867 = vmatprep.subr.mxu0 0.0
      %2868 = vmatpush1.msra.mxu0 0.0
      %2869 = vmatprep.subr.mxu0 0.0
      %2870 = vmatpush1.msra.mxu0 %v2837
      %2871 = vmatprep.subr.mxu0 0.0
      %2872 = vmatpush1.msra.mxu0 %v2836
      %2873 = vmatprep.subr.mxu0 0.0
      %2874 = vmatpush2.msra.mxu0 0.0
      %2875 = vmatprep.subr.mxu0 0.0
      %2876 = vmatpush2.msra.mxu0 0.0
      %2877 = vmatprep.subr.mxu0 0.0
      %2878 = vmatpush2.msra.mxu0 0.0
      %2879 = vmatprep.subr.mxu0 0.0
      %2880 = vmatpush2.msra.mxu0 0.0
      %2881 = vmatprep.subr.mxu0 0.0
      %2882 = vmatpush2.msra.mxu0 0.0
      %2883 = vmatprep.subr.mxu0 0.0
      %2884 = vmatpush2.msra.mxu0 0.0
      %2885 = vmatprep.subr.mxu0 0.0
      %2886 = vmatpush2.msra.mxu0 0.0
      %2887 = vmatprep.subr.mxu0 0.0
      %2888 = vmatpush2.msra.mxu0 0.0
      %2889 = vmatprep.subr.mxu0 0.0
      %2890 = vmatpush2.msra.mxu0 0.0
      %2891 = vmatprep.subr.mxu0 0.0
      %2892 = vmatpush2.msra.mxu0 0.0
      %2893 = vmatprep.subr.mxu0 0.0
      %2894 = vmatpush2.msra.mxu0 0.0
      %2895 = vmatprep.subr.mxu0 0.0
      %2896 = vmatpush2.msra.mxu0 0.0
      %2897 = vmatprep.subr.mxu0 0.0
      %2898 = vmatpush2.msra.mxu0 0.0
      %2899 = vmatprep.subr.mxu0 0.0
      %2900 = vmatpush2.msra.mxu0 0.0
      %2901 = vmatprep.subr.mxu0 0.0
      %2902 = vmatpush2.msra.mxu0 0.0
      %2903 = vmatprep.subr.mxu0 0.0
      %2904 = vmatpush2.msra.mxu0 0.0
      %2905 = vmatprep.mubr.f32.mxu0 0.0
      %2906 = vmatmul.mubr.f32.gmra.mxu0 %v2839
      %v2907 = vpop.f32.mrf.mxu0
      %v2908 = vadd.f32 0.0, %v2907
      %v2909 = vpop.f32.mrf.mxu0
      %2910 = vdwg.mxu0
      %v2911 = vadd.f32 %v2834, %v2908
      %s2912 = scalar_lea.vmem %s4, 416
      %v2913 = vld [vmem:[%s2912] sm:$0xff]
      %v2914 = vld [vmem:[%s2912 + $0x8] sm:$0xff]
      %v2916 = vsel %vm917, %v909, 0
      %2918 = vmatprep.subr.mxu0 0.0
      %2919 = vmatpush1.msra.mxu0 0.0
      %2920 = vmatprep.subr.mxu0 0.0
      %2921 = vmatpush1.msra.mxu0 0.0
      %2922 = vmatprep.subr.mxu0 0.0
      %2923 = vmatpush1.msra.mxu0 0.0
      %2924 = vmatprep.subr.mxu0 0.0
      %2925 = vmatpush1.msra.mxu0 0.0
      %2926 = vmatprep.subr.mxu0 0.0
      %2927 = vmatpush1.msra.mxu0 0.0
      %2928 = vmatprep.subr.mxu0 0.0
      %2929 = vmatpush1.msra.mxu0 0.0
      %2930 = vmatprep.subr.mxu0 0.0
      %2931 = vmatpush1.msra.mxu0 0.0
      %2932 = vmatprep.subr.mxu0 0.0
      %2933 = vmatpush1.msra.mxu0 0.0
      %2934 = vmatprep.subr.mxu0 0.0
      %2935 = vmatpush1.msra.mxu0 0.0
      %2936 = vmatprep.subr.mxu0 0.0
      %2937 = vmatpush1.msra.mxu0 0.0
      %2938 = vmatprep.subr.mxu0 0.0
      %2939 = vmatpush1.msra.mxu0 0.0
      %2940 = vmatprep.subr.mxu0 0.0
      %2941 = vmatpush1.msra.mxu0 0.0
      %2942 = vmatprep.subr.mxu0 0.0
      %2943 = vmatpush1.msra.mxu0 0.0
      %2944 = vmatprep.subr.mxu0 0.0
      %2945 = vmatpush1.msra.mxu0 0.0
      %2946 = vmatprep.subr.mxu0 0.0
      %2947 = vmatpush1.msra.mxu0 %v2914
      %2948 = vmatprep.subr.mxu0 0.0
      %2949 = vmatpush1.msra.mxu0 %v2913
      %2950 = vmatprep.subr.mxu0 0.0
      %2951 = vmatpush2.msra.mxu0 0.0
      %2952 = vmatprep.subr.mxu0 0.0
      %2953 = vmatpush2.msra.mxu0 0.0
      %2954 = vmatprep.subr.mxu0 0.0
      %2955 = vmatpush2.msra.mxu0 0.0
      %2956 = vmatprep.subr.mxu0 0.0
      %2957 = vmatpush2.msra.mxu0 0.0
      %2958 = vmatprep.subr.mxu0 0.0
      %2959 = vmatpush2.msra.mxu0 0.0
      %2960 = vmatprep.subr.mxu0 0.0
      %2961 = vmatpush2.msra.mxu0 0.0
      %2962 = vmatprep.subr.mxu0 0.0
      %2963 = vmatpush2.msra.mxu0 0.0
      %2964 = vmatprep.subr.mxu0 0.0
      %2965 = vmatpush2.msra.mxu0 0.0
      %2966 = vmatprep.subr.mxu0 0.0
      %2967 = vmatpush2.msra.mxu0 0.0
      %2968 = vmatprep.subr.mxu0 0.0
      %2969 = vmatpush2.msra.mxu0 0.0
      %2970 = vmatprep.subr.mxu0 0.0
      %2971 = vmatpush2.msra.mxu0 0.0
      %2972 = vmatprep.subr.mxu0 0.0
      %2973 = vmatpush2.msra.mxu0 0.0
      %2974 = vmatprep.subr.mxu0 0.0
      %2975 = vmatpush2.msra.mxu0 0.0
      %2976 = vmatprep.subr.mxu0 0.0
      %2977 = vmatpush2.msra.mxu0 0.0
      %2978 = vmatprep.subr.mxu0 0.0
      %2979 = vmatpush2.msra.mxu0 0.0
      %2980 = vmatprep.subr.mxu0 0.0
      %2981 = vmatpush2.msra.mxu0 0.0
      %2982 = vmatprep.mubr.f32.mxu0 0.0
      %2983 = vmatmul.mubr.f32.gmra.mxu0 %v2916
      %v2984 = vpop.f32.mrf.mxu0
      %v2985 = vadd.f32 0.0, %v2984
      %v2986 = vpop.f32.mrf.mxu0
      %2987 = vdwg.mxu0
      %v2988 = vadd.f32 %v2911, %v2985
      %v2989 = vld [vmem:[%s5] sm:$0x1]
      %v2991 = vlaneseq
      %v2992 = vshrl.u32 %v2991, 7
      %v2993 = vsub.s32 0, %v2992
      %v2994 = vrot.slane %v2989, %v2993
      %v2996 = vadd.f32 %v2988, %v2994
      %vm2997 = vcmp.gt.f32.partialorder %v2996, 0.0
      %v2998 = vmul.f32 %v2996, 0.01
      %v2999 = vsel %vm2997, %v2996, %v2998
      %v3000 = vld [vmem:[%s6] sm:$0xff]
      %v3001 = vld [vmem:[%s6 + $0x8] sm:$0xff]
      %v3002 = vld [vmem:[%s7] sm:$0x1]
      %v3004 = vlaneseq
      %v3005 = vshrl.u32 %v3004, 7
      %v3006 = vsub.s32 0, %v3005
      %v3007 = vrot.slane %v3002, %v3006
      %v3010 = vsel %vm917, %v2999, 0
      %3012 = vmatprep.subr.mxu0 0.0
      %3013 = vmatpush1.msra.mxu0 0.0
      %3014 = vmatprep.subr.mxu0 0.0
      %3015 = vmatpush1.msra.mxu0 0.0
      %3016 = vmatprep.subr.mxu0 0.0
      %3017 = vmatpush1.msra.mxu0 0.0
      %3018 = vmatprep.subr.mxu0 0.0
      %3019 = vmatpush1.msra.mxu0 0.0
      %3020 = vmatprep.subr.mxu0 0.0
      %3021 = vmatpush1.msra.mxu0 0.0
      %3022 = vmatprep.subr.mxu0 0.0
      %3023 = vmatpush1.msra.mxu0 0.0
      %3024 = vmatprep.subr.mxu0 0.0
      %3025 = vmatpush1.msra.mxu0 0.0
      %3026 = vmatprep.subr.mxu0 0.0
      %3027 = vmatpush1.msra.mxu0 0.0
      %3028 = vmatprep.subr.mxu0 0.0
      %3029 = vmatpush1.msra.mxu0 0.0
      %3030 = vmatprep.subr.mxu0 0.0
      %3031 = vmatpush1.msra.mxu0 0.0
      %3032 = vmatprep.subr.mxu0 0.0
      %3033 = vmatpush1.msra.mxu0 0.0
      %3034 = vmatprep.subr.mxu0 0.0
      %3035 = vmatpush1.msra.mxu0 0.0
      %3036 = vmatprep.subr.mxu0 0.0
      %3037 = vmatpush1.msra.mxu0 0.0
      %3038 = vmatprep.subr.mxu0 0.0
      %3039 = vmatpush1.msra.mxu0 0.0
      %3040 = vmatprep.subr.mxu0 0.0
      %3041 = vmatpush1.msra.mxu0 %v3001
      %3042 = vmatprep.subr.mxu0 0.0
      %3043 = vmatpush1.msra.mxu0 %v3000
      %3044 = vmatprep.subr.mxu0 0.0
      %3045 = vmatpush2.msra.mxu0 0.0
      %3046 = vmatprep.subr.mxu0 0.0
      %3047 = vmatpush2.msra.mxu0 0.0
      %3048 = vmatprep.subr.mxu0 0.0
      %3049 = vmatpush2.msra.mxu0 0.0
      %3050 = vmatprep.subr.mxu0 0.0
      %3051 = vmatpush2.msra.mxu0 0.0
      %3052 = vmatprep.subr.mxu0 0.0
      %3053 = vmatpush2.msra.mxu0 0.0
      %3054 = vmatprep.subr.mxu0 0.0
      %3055 = vmatpush2.msra.mxu0 0.0
      %3056 = vmatprep.subr.mxu0 0.0
      %3057 = vmatpush2.msra.mxu0 0.0
      %3058 = vmatprep.subr.mxu0 0.0
      %3059 = vmatpush2.msra.mxu0 0.0
      %3060 = vmatprep.subr.mxu0 0.0
      %3061 = vmatpush2.msra.mxu0 0.0
      %3062 = vmatprep.subr.mxu0 0.0
      %3063 = vmatpush2.msra.mxu0 0.0
      %3064 = vmatprep.subr.mxu0 0.0
      %3065 = vmatpush2.msra.mxu0 0.0
      %3066 = vmatprep.subr.mxu0 0.0
      %3067 = vmatpush2.msra.mxu0 0.0
      %3068 = vmatprep.subr.mxu0 0.0
      %3069 = vmatpush2.msra.mxu0 0.0
      %3070 = vmatprep.subr.mxu0 0.0
      %3071 = vmatpush2.msra.mxu0 0.0
      %3072 = vmatprep.subr.mxu0 0.0
      %3073 = vmatpush2.msra.mxu0 0.0
      %3074 = vmatprep.subr.mxu0 0.0
      %3075 = vmatpush2.msra.mxu0 0.0
      %3076 = vmatprep.mubr.f32.mxu0 0.0
      %3077 = vmatmul.mubr.f32.gmra.mxu0 %v3010
      %v3078 = vpop.f32.mrf.mxu0
      %v3079 = vadd.f32 %v3007, %v3078
      %v3080 = vpop.f32.mrf.mxu0
      %3081 = vdwg.mxu0
      %v3082 = vmul.f32 %v3079, %v3079
      %vm3083 = vcmask 64512
      %v3084 = vsel %vm3083, %v3082, 0.0
      %3085 = vadd.xlane.f32.xlu0 %v3084
      %v3086 = vpop.xlane.xlu0 %3085
      %v3087 = vrsqrt.pop %v3086
      %v3088 = vmul.f32 %v3086, %v3087
      %vm3089 = vcmp.eq.f32.partialorder %v3086, inf
      %v3090 = vsel %vm3089, %v3086, %v3088
      %vm3091 = vcmp.eq.f32.partialorder %v3086, 0.0
      %v3092 = vand.u32 %v3086, 2147483648
      %v3093 = vsel %vm3091, %v3092, %v3090
      %v3094 = vadd.f32 %v3093, 1e-06
      %v3095 = vrcp.pop %v3094
      %v3096 = vmul.f32 %v3079, %v3095
      %3097 = vst.msk [vmem:[%s411] sm:$0xff] %vm3083, %v3096
      %v3098 = vld [vmem:[%s407] sm:$0xff]
      %s3099 = scalar_lea.vmem %s407, 8
      %v3100 = vld [vmem:[%s3099] sm:$0xff]
      %v3102 = vrot.slane %v3096, 1
      %v3103 = vsel %vm3083, %v3102, 0
      %3105 = vmatprep.subr.mxu0 0.0
      %3106 = vmatpush1.msra.mxu0 0.0
      %3107 = vmatprep.subr.mxu0 0.0
      %3108 = vmatpush1.msra.mxu0 0.0
      %3109 = vmatprep.subr.mxu0 0.0
      %3110 = vmatpush1.msra.mxu0 0.0
      %3111 = vmatprep.subr.mxu0 0.0
      %3112 = vmatpush1.msra.mxu0 0.0
      %3113 = vmatprep.subr.mxu0 0.0
      %3114 = vmatpush1.msra.mxu0 0.0
      %3115 = vmatprep.subr.mxu0 0.0
      %3116 = vmatpush1.msra.mxu0 0.0
      %3117 = vmatprep.subr.mxu0 0.0
      %3118 = vmatpush1.msra.mxu0 0.0
      %3119 = vmatprep.subr.mxu0 0.0
      %3120 = vmatpush1.msra.mxu0 0.0
      %3121 = vmatprep.subr.mxu0 0.0
      %3122 = vmatpush1.msra.mxu0 0.0
      %3123 = vmatprep.subr.mxu0 0.0
      %3124 = vmatpush1.msra.mxu0 0.0
      %3125 = vmatprep.subr.mxu0 0.0
      %3126 = vmatpush1.msra.mxu0 0.0
      %3127 = vmatprep.subr.mxu0 0.0
      %3128 = vmatpush1.msra.mxu0 0.0
      %3129 = vmatprep.subr.mxu0 0.0
      %3130 = vmatpush1.msra.mxu0 0.0
      %3131 = vmatprep.subr.mxu0 0.0
      %3132 = vmatpush1.msra.mxu0 0.0
      %3133 = vmatprep.subr.mxu0 0.0
      %3134 = vmatpush1.msra.mxu0 0.0
      %3135 = vmatprep.subr.mxu0 0.0
      %3136 = vmatpush1.msra.mxu0 %v3100
      %3137 = vmatprep.subr.mxu0 0.0
      %3138 = vmatpush2.msra.mxu0 0.0
      %3139 = vmatprep.subr.mxu0 0.0
      %3140 = vmatpush2.msra.mxu0 0.0
      %3141 = vmatprep.subr.mxu0 0.0
      %3142 = vmatpush2.msra.mxu0 0.0
      %3143 = vmatprep.subr.mxu0 0.0
      %3144 = vmatpush2.msra.mxu0 0.0
      %3145 = vmatprep.subr.mxu0 0.0
      %3146 = vmatpush2.msra.mxu0 0.0
      %3147 = vmatprep.subr.mxu0 0.0
      %3148 = vmatpush2.msra.mxu0 0.0
      %3149 = vmatprep.subr.mxu0 0.0
      %3150 = vmatpush2.msra.mxu0 0.0
      %3151 = vmatprep.subr.mxu0 0.0
      %3152 = vmatpush2.msra.mxu0 0.0
      %3153 = vmatprep.subr.mxu0 0.0
      %3154 = vmatpush2.msra.mxu0 0.0
      %3155 = vmatprep.subr.mxu0 0.0
      %3156 = vmatpush2.msra.mxu0 0.0
      %3157 = vmatprep.subr.mxu0 0.0
      %3158 = vmatpush2.msra.mxu0 0.0
      %3159 = vmatprep.subr.mxu0 0.0
      %3160 = vmatpush2.msra.mxu0 0.0
      %3161 = vmatprep.subr.mxu0 0.0
      %3162 = vmatpush2.msra.mxu0 0.0
      %3163 = vmatprep.subr.mxu0 0.0
      %3164 = vmatpush2.msra.mxu0 0.0
      %3165 = vmatprep.subr.mxu0 0.0
      %3166 = vmatpush2.msra.mxu0 0.0
      %3167 = vmatprep.subr.mxu0 0.0
      %3168 = vmatpush2.msra.mxu0 0.0
      %3169 = vmatprep.mubr.f32.mxu0 0.0
      %3170 = vmatmul.mubr.f32.gmra.mxu0 %v3103
      %v3171 = vpop.f32.mrf.mxu0
      %v3172 = vadd.f32 0.0, %v3171
      %v3173 = vpop.f32.mrf.mxu0
      %3174 = vdwg.mxu0
      %v3175 = vsel %vm3083, %v3096, 0
      %3177 = vmatprep.subr.mxu0 0.0
      %3178 = vmatpush1.msra.mxu0 0.0
      %3179 = vmatprep.subr.mxu0 0.0
      %3180 = vmatpush1.msra.mxu0 0.0
      %3181 = vmatprep.subr.mxu0 0.0
      %3182 = vmatpush1.msra.mxu0 0.0
      %3183 = vmatprep.subr.mxu0 0.0
      %3184 = vmatpush1.msra.mxu0 0.0
      %3185 = vmatprep.subr.mxu0 0.0
      %3186 = vmatpush1.msra.mxu0 0.0
      %3187 = vmatprep.subr.mxu0 0.0
      %3188 = vmatpush1.msra.mxu0 0.0
      %3189 = vmatprep.subr.mxu0 0.0
      %3190 = vmatpush1.msra.mxu0 0.0
      %3191 = vmatprep.subr.mxu0 0.0
      %3192 = vmatpush1.msra.mxu0 0.0
      %3193 = vmatprep.subr.mxu0 0.0
      %3194 = vmatpush1.msra.mxu0 0.0
      %3195 = vmatprep.subr.mxu0 0.0
      %3196 = vmatpush1.msra.mxu0 0.0
      %3197 = vmatprep.subr.mxu0 0.0
      %3198 = vmatpush1.msra.mxu0 0.0
      %3199 = vmatprep.subr.mxu0 0.0
      %3200 = vmatpush1.msra.mxu0 0.0
      %3201 = vmatprep.subr.mxu0 0.0
      %3202 = vmatpush1.msra.mxu0 0.0
      %3203 = vmatprep.subr.mxu0 0.0
      %3204 = vmatpush1.msra.mxu0 0.0
      %3205 = vmatprep.subr.mxu0 0.0
      %3206 = vmatpush1.msra.mxu0 0.0
      %3207 = vmatprep.subr.mxu0 0.0
      %3208 = vmatpush1.msra.mxu0 %v3098
      %3209 = vmatprep.subr.mxu0 0.0
      %3210 = vmatpush2.msra.mxu0 0.0
      %3211 = vmatprep.subr.mxu0 0.0
      %3212 = vmatpush2.msra.mxu0 0.0
      %3213 = vmatprep.subr.mxu0 0.0
      %3214 = vmatpush2.msra.mxu0 0.0
      %3215 = vmatprep.subr.mxu0 0.0
      %3216 = vmatpush2.msra.mxu0 0.0
      %3217 = vmatprep.subr.mxu0 0.0
      %3218 = vmatpush2.msra.mxu0 0.0
      %3219 = vmatprep.subr.mxu0 0.0
      %3220 = vmatpush2.msra.mxu0 0.0
      %3221 = vmatprep.subr.mxu0 0.0
      %3222 = vmatpush2.msra.mxu0 0.0
      %3223 = vmatprep.subr.mxu0 0.0
      %3224 = vmatpush2.msra.mxu0 0.0
      %3225 = vmatprep.subr.mxu0 0.0
      %3226 = vmatpush2.msra.mxu0 0.0
      %3227 = vmatprep.subr.mxu0 0.0
      %3228 = vmatpush2.msra.mxu0 0.0
      %3229 = vmatprep.subr.mxu0 0.0
      %3230 = vmatpush2.msra.mxu0 0.0
      %3231 = vmatprep.subr.mxu0 0.0
      %3232 = vmatpush2.msra.mxu0 0.0
      %3233 = vmatprep.subr.mxu0 0.0
      %3234 = vmatpush2.msra.mxu0 0.0
      %3235 = vmatprep.subr.mxu0 0.0
      %3236 = vmatpush2.msra.mxu0 0.0
      %3237 = vmatprep.subr.mxu0 0.0
      %3238 = vmatpush2.msra.mxu0 0.0
      %3239 = vmatprep.subr.mxu0 0.0
      %3240 = vmatpush2.msra.mxu0 0.0
      %3241 = vmatprep.mubr.f32.mxu0 0.0
      %3242 = vmatmul.mubr.f32.gmra.mxu0 %v3175
      %v3243 = vpop.f32.mrf.mxu0
      %v3244 = vadd.f32 %v3172, %v3243
      %v3245 = vpop.f32.mrf.mxu0
      %3246 = vdwg.mxu0
      %s3247 = scalar_lea.vmem %s407, 16
      %v3248 = vld [vmem:[%s3247] sm:$0xff]
      %v3249 = vrot.slane %v3096, 2
      %v3250 = vsel %vm3083, %v3249, 0
      %3252 = vmatprep.subr.mxu0 0.0
      %3253 = vmatpush1.msra.mxu0 0.0
      %3254 = vmatprep.subr.mxu0 0.0
      %3255 = vmatpush1.msra.mxu0 0.0
      %3256 = vmatprep.subr.mxu0 0.0
      %3257 = vmatpush1.msra.mxu0 0.0
      %3258 = vmatprep.subr.mxu0 0.0
      %3259 = vmatpush1.msra.mxu0 0.0
      %3260 = vmatprep.subr.mxu0 0.0
      %3261 = vmatpush1.msra.mxu0 0.0
      %3262 = vmatprep.subr.mxu0 0.0
      %3263 = vmatpush1.msra.mxu0 0.0
      %3264 = vmatprep.subr.mxu0 0.0
      %3265 = vmatpush1.msra.mxu0 0.0
      %3266 = vmatprep.subr.mxu0 0.0
      %3267 = vmatpush1.msra.mxu0 0.0
      %3268 = vmatprep.subr.mxu0 0.0
      %3269 = vmatpush1.msra.mxu0 0.0
      %3270 = vmatprep.subr.mxu0 0.0
      %3271 = vmatpush1.msra.mxu0 0.0
      %3272 = vmatprep.subr.mxu0 0.0
      %3273 = vmatpush1.msra.mxu0 0.0
      %3274 = vmatprep.subr.mxu0 0.0
      %3275 = vmatpush1.msra.mxu0 0.0
      %3276 = vmatprep.subr.mxu0 0.0
      %3277 = vmatpush1.msra.mxu0 0.0
      %3278 = vmatprep.subr.mxu0 0.0
      %3279 = vmatpush1.msra.mxu0 0.0
      %3280 = vmatprep.subr.mxu0 0.0
      %3281 = vmatpush1.msra.mxu0 0.0
      %3282 = vmatprep.subr.mxu0 0.0
      %3283 = vmatpush1.msra.mxu0 %v3248
      %3284 = vmatprep.subr.mxu0 0.0
      %3285 = vmatpush2.msra.mxu0 0.0
      %3286 = vmatprep.subr.mxu0 0.0
      %3287 = vmatpush2.msra.mxu0 0.0
      %3288 = vmatprep.subr.mxu0 0.0
      %3289 = vmatpush2.msra.mxu0 0.0
      %3290 = vmatprep.subr.mxu0 0.0
      %3291 = vmatpush2.msra.mxu0 0.0
      %3292 = vmatprep.subr.mxu0 0.0
      %3293 = vmatpush2.msra.mxu0 0.0
      %3294 = vmatprep.subr.mxu0 0.0
      %3295 = vmatpush2.msra.mxu0 0.0
      %3296 = vmatprep.subr.mxu0 0.0
      %3297 = vmatpush2.msra.mxu0 0.0
      %3298 = vmatprep.subr.mxu0 0.0
      %3299 = vmatpush2.msra.mxu0 0.0
      %3300 = vmatprep.subr.mxu0 0.0
      %3301 = vmatpush2.msra.mxu0 0.0
      %3302 = vmatprep.subr.mxu0 0.0
      %3303 = vmatpush2.msra.mxu0 0.0
      %3304 = vmatprep.subr.mxu0 0.0
      %3305 = vmatpush2.msra.mxu0 0.0
      %3306 = vmatprep.subr.mxu0 0.0
      %3307 = vmatpush2.msra.mxu0 0.0
      %3308 = vmatprep.subr.mxu0 0.0
      %3309 = vmatpush2.msra.mxu0 0.0
      %3310 = vmatprep.subr.mxu0 0.0
      %3311 = vmatpush2.msra.mxu0 0.0
      %3312 = vmatprep.subr.mxu0 0.0
      %3313 = vmatpush2.msra.mxu0 0.0
      %3314 = vmatprep.subr.mxu0 0.0
      %3315 = vmatpush2.msra.mxu0 0.0
      %3316 = vmatprep.mubr.f32.mxu0 0.0
      %3317 = vmatmul.mubr.f32.gmra.mxu0 %v3250
      %v3318 = vpop.f32.mrf.mxu0
      %v3319 = vadd.f32 0.0, %v3318
      %v3320 = vpop.f32.mrf.mxu0
      %3321 = vdwg.mxu0
      %v3322 = vadd.f32 %v3244, %v3319
      %s3323 = scalar_lea.vmem %s407, 24
      %v3324 = vld [vmem:[%s3323] sm:$0xff]
      %v3325 = vrot.slane %v3096, 3
      %v3326 = vsel %vm3083, %v3325, 0
      %3328 = vmatprep.subr.mxu0 0.0
      %3329 = vmatpush1.msra.mxu0 0.0
      %3330 = vmatprep.subr.mxu0 0.0
      %3331 = vmatpush1.msra.mxu0 0.0
      %3332 = vmatprep.subr.mxu0 0.0
      %3333 = vmatpush1.msra.mxu0 0.0
      %3334 = vmatprep.subr.mxu0 0.0
      %3335 = vmatpush1.msra.mxu0 0.0
      %3336 = vmatprep.subr.mxu0 0.0
      %3337 = vmatpush1.msra.mxu0 0.0
      %3338 = vmatprep.subr.mxu0 0.0
      %3339 = vmatpush1.msra.mxu0 0.0
      %3340 = vmatprep.subr.mxu0 0.0
      %3341 = vmatpush1.msra.mxu0 0.0
      %3342 = vmatprep.subr.mxu0 0.0
      %3343 = vmatpush1.msra.mxu0 0.0
      %3344 = vmatprep.subr.mxu0 0.0
      %3345 = vmatpush1.msra.mxu0 0.0
      %3346 = vmatprep.subr.mxu0 0.0
      %3347 = vmatpush1.msra.mxu0 0.0
      %3348 = vmatprep.subr.mxu0 0.0
      %3349 = vmatpush1.msra.mxu0 0.0
      %3350 = vmatprep.subr.mxu0 0.0
      %3351 = vmatpush1.msra.mxu0 0.0
      %3352 = vmatprep.subr.mxu0 0.0
      %3353 = vmatpush1.msra.mxu0 0.0
      %3354 = vmatprep.subr.mxu0 0.0
      %3355 = vmatpush1.msra.mxu0 0.0
      %3356 = vmatprep.subr.mxu0 0.0
      %3357 = vmatpush1.msra.mxu0 0.0
      %3358 = vmatprep.subr.mxu0 0.0
      %3359 = vmatpush1.msra.mxu0 %v3324
      %3360 = vmatprep.subr.mxu0 0.0
      %3361 = vmatpush2.msra.mxu0 0.0
      %3362 = vmatprep.subr.mxu0 0.0
      %3363 = vmatpush2.msra.mxu0 0.0
      %3364 = vmatprep.subr.mxu0 0.0
      %3365 = vmatpush2.msra.mxu0 0.0
      %3366 = vmatprep.subr.mxu0 0.0
      %3367 = vmatpush2.msra.mxu0 0.0
      %3368 = vmatprep.subr.mxu0 0.0
      %3369 = vmatpush2.msra.mxu0 0.0
      %3370 = vmatprep.subr.mxu0 0.0
      %3371 = vmatpush2.msra.mxu0 0.0
      %3372 = vmatprep.subr.mxu0 0.0
      %3373 = vmatpush2.msra.mxu0 0.0
      %3374 = vmatprep.subr.mxu0 0.0
      %3375 = vmatpush2.msra.mxu0 0.0
      %3376 = vmatprep.subr.mxu0 0.0
      %3377 = vmatpush2.msra.mxu0 0.0
      %3378 = vmatprep.subr.mxu0 0.0
      %3379 = vmatpush2.msra.mxu0 0.0
      %3380 = vmatprep.subr.mxu0 0.0
      %3381 = vmatpush2.msra.mxu0 0.0
      %3382 = vmatprep.subr.mxu0 0.0
      %3383 = vmatpush2.msra.mxu0 0.0
      %3384 = vmatprep.subr.mxu0 0.0
      %3385 = vmatpush2.msra.mxu0 0.0
      %3386 = vmatprep.subr.mxu0 0.0
      %3387 = vmatpush2.msra.mxu0 0.0
      %3388 = vmatprep.subr.mxu0 0.0
      %3389 = vmatpush2.msra.mxu0 0.0
      %3390 = vmatprep.subr.mxu0 0.0
      %3391 = vmatpush2.msra.mxu0 0.0
      %3392 = vmatprep.mubr.f32.mxu0 0.0
      %3393 = vmatmul.mubr.f32.gmra.mxu0 %v3326
      %v3394 = vpop.f32.mrf.mxu0
      %v3395 = vadd.f32 0.0, %v3394
      %v3396 = vpop.f32.mrf.mxu0
      %3397 = vdwg.mxu0
      %v3398 = vadd.f32 %v3322, %v3395
      %s3399 = scalar_lea.vmem %s407, 32
      %v3400 = vld [vmem:[%s3399] sm:$0xff]
      %v3401 = vrot.slane %v3096, 4
      %v3402 = vsel %vm3083, %v3401, 0
      %3404 = vmatprep.subr.mxu0 0.0
      %3405 = vmatpush1.msra.mxu0 0.0
      %3406 = vmatprep.subr.mxu0 0.0
      %3407 = vmatpush1.msra.mxu0 0.0
      %3408 = vmatprep.subr.mxu0 0.0
      %3409 = vmatpush1.msra.mxu0 0.0
      %3410 = vmatprep.subr.mxu0 0.0
      %3411 = vmatpush1.msra.mxu0 0.0
      %3412 = vmatprep.subr.mxu0 0.0
      %3413 = vmatpush1.msra.mxu0 0.0
      %3414 = vmatprep.subr.mxu0 0.0
      %3415 = vmatpush1.msra.mxu0 0.0
      %3416 = vmatprep.subr.mxu0 0.0
      %3417 = vmatpush1.msra.mxu0 0.0
      %3418 = vmatprep.subr.mxu0 0.0
      %3419 = vmatpush1.msra.mxu0 0.0
      %3420 = vmatprep.subr.mxu0 0.0
      %3421 = vmatpush1.msra.mxu0 0.0
      %3422 = vmatprep.subr.mxu0 0.0
      %3423 = vmatpush1.msra.mxu0 0.0
      %3424 = vmatprep.subr.mxu0 0.0
      %3425 = vmatpush1.msra.mxu0 0.0
      %3426 = vmatprep.subr.mxu0 0.0
      %3427 = vmatpush1.msra.mxu0 0.0
      %3428 = vmatprep.subr.mxu0 0.0
      %3429 = vmatpush1.msra.mxu0 0.0
      %3430 = vmatprep.subr.mxu0 0.0
      %3431 = vmatpush1.msra.mxu0 0.0
      %3432 = vmatprep.subr.mxu0 0.0
      %3433 = vmatpush1.msra.mxu0 0.0
      %3434 = vmatprep.subr.mxu0 0.0
      %3435 = vmatpush1.msra.mxu0 %v3400
      %3436 = vmatprep.subr.mxu0 0.0
      %3437 = vmatpush2.msra.mxu0 0.0
      %3438 = vmatprep.subr.mxu0 0.0
      %3439 = vmatpush2.msra.mxu0 0.0
      %3440 = vmatprep.subr.mxu0 0.0
      %3441 = vmatpush2.msra.mxu0 0.0
      %3442 = vmatprep.subr.mxu0 0.0
      %3443 = vmatpush2.msra.mxu0 0.0
      %3444 = vmatprep.subr.mxu0 0.0
      %3445 = vmatpush2.msra.mxu0 0.0
      %3446 = vmatprep.subr.mxu0 0.0
      %3447 = vmatpush2.msra.mxu0 0.0
      %3448 = vmatprep.subr.mxu0 0.0
      %3449 = vmatpush2.msra.mxu0 0.0
      %3450 = vmatprep.subr.mxu0 0.0
      %3451 = vmatpush2.msra.mxu0 0.0
      %3452 = vmatprep.subr.mxu0 0.0
      %3453 = vmatpush2.msra.mxu0 0.0
      %3454 = vmatprep.subr.mxu0 0.0
      %3455 = vmatpush2.msra.mxu0 0.0
      %3456 = vmatprep.subr.mxu0 0.0
      %3457 = vmatpush2.msra.mxu0 0.0
      %3458 = vmatprep.subr.mxu0 0.0
      %3459 = vmatpush2.msra.mxu0 0.0
      %3460 = vmatprep.subr.mxu0 0.0
      %3461 = vmatpush2.msra.mxu0 0.0
      %3462 = vmatprep.subr.mxu0 0.0
      %3463 = vmatpush2.msra.mxu0 0.0
      %3464 = vmatprep.subr.mxu0 0.0
      %3465 = vmatpush2.msra.mxu0 0.0
      %3466 = vmatprep.subr.mxu0 0.0
      %3467 = vmatpush2.msra.mxu0 0.0
      %3468 = vmatprep.mubr.f32.mxu0 0.0
      %3469 = vmatmul.mubr.f32.gmra.mxu0 %v3402
      %v3470 = vpop.f32.mrf.mxu0
      %v3471 = vadd.f32 0.0, %v3470
      %v3472 = vpop.f32.mrf.mxu0
      %3473 = vdwg.mxu0
      %v3474 = vadd.f32 %v3398, %v3471
      %s3475 = scalar_lea.vmem %s407, 40
      %v3476 = vld [vmem:[%s3475] sm:$0xff]
      %v3477 = vrot.slane %v3096, 5
      %v3478 = vsel %vm3083, %v3477, 0
      %3480 = vmatprep.subr.mxu0 0.0
      %3481 = vmatpush1.msra.mxu0 0.0
      %3482 = vmatprep.subr.mxu0 0.0
      %3483 = vmatpush1.msra.mxu0 0.0
      %3484 = vmatprep.subr.mxu0 0.0
      %3485 = vmatpush1.msra.mxu0 0.0
      %3486 = vmatprep.subr.mxu0 0.0
      %3487 = vmatpush1.msra.mxu0 0.0
      %3488 = vmatprep.subr.mxu0 0.0
      %3489 = vmatpush1.msra.mxu0 0.0
      %3490 = vmatprep.subr.mxu0 0.0
      %3491 = vmatpush1.msra.mxu0 0.0
      %3492 = vmatprep.subr.mxu0 0.0
      %3493 = vmatpush1.msra.mxu0 0.0
      %3494 = vmatprep.subr.mxu0 0.0
      %3495 = vmatpush1.msra.mxu0 0.0
      %3496 = vmatprep.subr.mxu0 0.0
      %3497 = vmatpush1.msra.mxu0 0.0
      %3498 = vmatprep.subr.mxu0 0.0
      %3499 = vmatpush1.msra.mxu0 0.0
      %3500 = vmatprep.subr.mxu0 0.0
      %3501 = vmatpush1.msra.mxu0 0.0
      %3502 = vmatprep.subr.mxu0 0.0
      %3503 = vmatpush1.msra.mxu0 0.0
      %3504 = vmatprep.subr.mxu0 0.0
      %3505 = vmatpush1.msra.mxu0 0.0
      %3506 = vmatprep.subr.mxu0 0.0
      %3507 = vmatpush1.msra.mxu0 0.0
      %3508 = vmatprep.subr.mxu0 0.0
      %3509 = vmatpush1.msra.mxu0 0.0
      %3510 = vmatprep.subr.mxu0 0.0
      %3511 = vmatpush1.msra.mxu0 %v3476
      %3512 = vmatprep.subr.mxu0 0.0
      %3513 = vmatpush2.msra.mxu0 0.0
      %3514 = vmatprep.subr.mxu0 0.0
      %3515 = vmatpush2.msra.mxu0 0.0
      %3516 = vmatprep.subr.mxu0 0.0
      %3517 = vmatpush2.msra.mxu0 0.0
      %3518 = vmatprep.subr.mxu0 0.0
      %3519 = vmatpush2.msra.mxu0 0.0
      %3520 = vmatprep.subr.mxu0 0.0
      %3521 = vmatpush2.msra.mxu0 0.0
      %3522 = vmatprep.subr.mxu0 0.0
      %3523 = vmatpush2.msra.mxu0 0.0
      %3524 = vmatprep.subr.mxu0 0.0
      %3525 = vmatpush2.msra.mxu0 0.0
      %3526 = vmatprep.subr.mxu0 0.0
      %3527 = vmatpush2.msra.mxu0 0.0
      %3528 = vmatprep.subr.mxu0 0.0
      %3529 = vmatpush2.msra.mxu0 0.0
      %3530 = vmatprep.subr.mxu0 0.0
      %3531 = vmatpush2.msra.mxu0 0.0
      %3532 = vmatprep.subr.mxu0 0.0
      %3533 = vmatpush2.msra.mxu0 0.0
      %3534 = vmatprep.subr.mxu0 0.0
      %3535 = vmatpush2.msra.mxu0 0.0
      %3536 = vmatprep.subr.mxu0 0.0
      %3537 = vmatpush2.msra.mxu0 0.0
      %3538 = vmatprep.subr.mxu0 0.0
      %3539 = vmatpush2.msra.mxu0 0.0
      %3540 = vmatprep.subr.mxu0 0.0
      %3541 = vmatpush2.msra.mxu0 0.0
      %3542 = vmatprep.subr.mxu0 0.0
      %3543 = vmatpush2.msra.mxu0 0.0
      %3544 = vmatprep.mubr.f32.mxu0 0.0
      %3545 = vmatmul.mubr.f32.gmra.mxu0 %v3478
      %v3546 = vpop.f32.mrf.mxu0
      %v3547 = vadd.f32 0.0, %v3546
      %v3548 = vpop.f32.mrf.mxu0
      %3549 = vdwg.mxu0
      %v3550 = vadd.f32 %v3474, %v3547
      %s3551 = scalar_lea.vmem %s407, 48
      %v3552 = vld [vmem:[%s3551] sm:$0xff]
      %v3553 = vrot.slane %v3096, 6
      %v3554 = vsel %vm3083, %v3553, 0
      %3556 = vmatprep.subr.mxu0 0.0
      %3557 = vmatpush1.msra.mxu0 0.0
      %3558 = vmatprep.subr.mxu0 0.0
      %3559 = vmatpush1.msra.mxu0 0.0
      %3560 = vmatprep.subr.mxu0 0.0
      %3561 = vmatpush1.msra.mxu0 0.0
      %3562 = vmatprep.subr.mxu0 0.0
      %3563 = vmatpush1.msra.mxu0 0.0
      %3564 = vmatprep.subr.mxu0 0.0
      %3565 = vmatpush1.msra.mxu0 0.0
      %3566 = vmatprep.subr.mxu0 0.0
      %3567 = vmatpush1.msra.mxu0 0.0
      %3568 = vmatprep.subr.mxu0 0.0
      %3569 = vmatpush1.msra.mxu0 0.0
      %3570 = vmatprep.subr.mxu0 0.0
      %3571 = vmatpush1.msra.mxu0 0.0
      %3572 = vmatprep.subr.mxu0 0.0
      %3573 = vmatpush1.msra.mxu0 0.0
      %3574 = vmatprep.subr.mxu0 0.0
      %3575 = vmatpush1.msra.mxu0 0.0
      %3576 = vmatprep.subr.mxu0 0.0
      %3577 = vmatpush1.msra.mxu0 0.0
      %3578 = vmatprep.subr.mxu0 0.0
      %3579 = vmatpush1.msra.mxu0 0.0
      %3580 = vmatprep.subr.mxu0 0.0
      %3581 = vmatpush1.msra.mxu0 0.0
      %3582 = vmatprep.subr.mxu0 0.0
      %3583 = vmatpush1.msra.mxu0 0.0
      %3584 = vmatprep.subr.mxu0 0.0
      %3585 = vmatpush1.msra.mxu0 0.0
      %3586 = vmatprep.subr.mxu0 0.0
      %3587 = vmatpush1.msra.mxu0 %v3552
      %3588 = vmatprep.subr.mxu0 0.0
      %3589 = vmatpush2.msra.mxu0 0.0
      %3590 = vmatprep.subr.mxu0 0.0
      %3591 = vmatpush2.msra.mxu0 0.0
      %3592 = vmatprep.subr.mxu0 0.0
      %3593 = vmatpush2.msra.mxu0 0.0
      %3594 = vmatprep.subr.mxu0 0.0
      %3595 = vmatpush2.msra.mxu0 0.0
      %3596 = vmatprep.subr.mxu0 0.0
      %3597 = vmatpush2.msra.mxu0 0.0
      %3598 = vmatprep.subr.mxu0 0.0
      %3599 = vmatpush2.msra.mxu0 0.0
      %3600 = vmatprep.subr.mxu0 0.0
      %3601 = vmatpush2.msra.mxu0 0.0
      %3602 = vmatprep.subr.mxu0 0.0
      %3603 = vmatpush2.msra.mxu0 0.0
      %3604 = vmatprep.subr.mxu0 0.0
      %3605 = vmatpush2.msra.mxu0 0.0
      %3606 = vmatprep.subr.mxu0 0.0
      %3607 = vmatpush2.msra.mxu0 0.0
      %3608 = vmatprep.subr.mxu0 0.0
      %3609 = vmatpush2.msra.mxu0 0.0
      %3610 = vmatprep.subr.mxu0 0.0
      %3611 = vmatpush2.msra.mxu0 0.0
      %3612 = vmatprep.subr.mxu0 0.0
      %3613 = vmatpush2.msra.mxu0 0.0
      %3614 = vmatprep.subr.mxu0 0.0
      %3615 = vmatpush2.msra.mxu0 0.0
      %3616 = vmatprep.subr.mxu0 0.0
      %3617 = vmatpush2.msra.mxu0 0.0
      %3618 = vmatprep.subr.mxu0 0.0
      %3619 = vmatpush2.msra.mxu0 0.0
      %3620 = vmatprep.mubr.f32.mxu0 0.0
      %3621 = vmatmul.mubr.f32.gmra.mxu0 %v3554
      %v3622 = vpop.f32.mrf.mxu0
      %v3623 = vadd.f32 0.0, %v3622
      %v3624 = vpop.f32.mrf.mxu0
      %3625 = vdwg.mxu0
      %v3626 = vadd.f32 %v3550, %v3623
      %s3627 = scalar_lea.vmem %s407, 56
      %v3628 = vld [vmem:[%s3627] sm:$0xff]
      %v3629 = vrot.slane %v3096, 7
      %v3630 = vsel %vm3083, %v3629, 0
      %3632 = vmatprep.subr.mxu0 0.0
      %3633 = vmatpush1.msra.mxu0 0.0
      %3634 = vmatprep.subr.mxu0 0.0
      %3635 = vmatpush1.msra.mxu0 0.0
      %3636 = vmatprep.subr.mxu0 0.0
      %3637 = vmatpush1.msra.mxu0 0.0
      %3638 = vmatprep.subr.mxu0 0.0
      %3639 = vmatpush1.msra.mxu0 0.0
      %3640 = vmatprep.subr.mxu0 0.0
      %3641 = vmatpush1.msra.mxu0 0.0
      %3642 = vmatprep.subr.mxu0 0.0
      %3643 = vmatpush1.msra.mxu0 0.0
      %3644 = vmatprep.subr.mxu0 0.0
      %3645 = vmatpush1.msra.mxu0 0.0
      %3646 = vmatprep.subr.mxu0 0.0
      %3647 = vmatpush1.msra.mxu0 0.0
      %3648 = vmatprep.subr.mxu0 0.0
      %3649 = vmatpush1.msra.mxu0 0.0
      %3650 = vmatprep.subr.mxu0 0.0
      %3651 = vmatpush1.msra.mxu0 0.0
      %3652 = vmatprep.subr.mxu0 0.0
      %3653 = vmatpush1.msra.mxu0 0.0
      %3654 = vmatprep.subr.mxu0 0.0
      %3655 = vmatpush1.msra.mxu0 0.0
      %3656 = vmatprep.subr.mxu0 0.0
      %3657 = vmatpush1.msra.mxu0 0.0
      %3658 = vmatprep.subr.mxu0 0.0
      %3659 = vmatpush1.msra.mxu0 0.0
      %3660 = vmatprep.subr.mxu0 0.0
      %3661 = vmatpush1.msra.mxu0 0.0
      %3662 = vmatprep.subr.mxu0 0.0
      %3663 = vmatpush1.msra.mxu0 %v3628
      %3664 = vmatprep.subr.mxu0 0.0
      %3665 = vmatpush2.msra.mxu0 0.0
      %3666 = vmatprep.subr.mxu0 0.0
      %3667 = vmatpush2.msra.mxu0 0.0
      %3668 = vmatprep.subr.mxu0 0.0
      %3669 = vmatpush2.msra.mxu0 0.0
      %3670 = vmatprep.subr.mxu0 0.0
      %3671 = vmatpush2.msra.mxu0 0.0
      %3672 = vmatprep.subr.mxu0 0.0
      %3673 = vmatpush2.msra.mxu0 0.0
      %3674 = vmatprep.subr.mxu0 0.0
      %3675 = vmatpush2.msra.mxu0 0.0
      %3676 = vmatprep.subr.mxu0 0.0
      %3677 = vmatpush2.msra.mxu0 0.0
      %3678 = vmatprep.subr.mxu0 0.0
      %3679 = vmatpush2.msra.mxu0 0.0
      %3680 = vmatprep.subr.mxu0 0.0
      %3681 = vmatpush2.msra.mxu0 0.0
      %3682 = vmatprep.subr.mxu0 0.0
      %3683 = vmatpush2.msra.mxu0 0.0
      %3684 = vmatprep.subr.mxu0 0.0
      %3685 = vmatpush2.msra.mxu0 0.0
      %3686 = vmatprep.subr.mxu0 0.0
      %3687 = vmatpush2.msra.mxu0 0.0
      %3688 = vmatprep.subr.mxu0 0.0
      %3689 = vmatpush2.msra.mxu0 0.0
      %3690 = vmatprep.subr.mxu0 0.0
      %3691 = vmatpush2.msra.mxu0 0.0
      %3692 = vmatprep.subr.mxu0 0.0
      %3693 = vmatpush2.msra.mxu0 0.0
      %3694 = vmatprep.subr.mxu0 0.0
      %3695 = vmatpush2.msra.mxu0 0.0
      %3696 = vmatprep.mubr.f32.mxu0 0.0
      %3697 = vmatmul.mubr.f32.gmra.mxu0 %v3630
      %v3698 = vpop.f32.mrf.mxu0
      %v3699 = vadd.f32 0.0, %v3698
      %v3700 = vpop.f32.mrf.mxu0
      %3701 = vdwg.mxu0
      %v3702 = vadd.f32 %v3626, %v3699
      %vm3703 = vcmask 212992
      %v3704 = vsel %vm3703, %v3702, -inf
      %3705 = vmax.xlane.f32.xlu0 %v3704
      %v3706 = vpop.xlane.xlu0 %3705
      %v3707 = vsub.f32 %v3702, %v3706
      %v3708 = vmul.f32 %v3707, 5.0
      %v3709 = vmul.f32 %v3708, 1.442695
      %v3710 = vpow.pop %v3709
      %v3711 = vsel %vm3703, %v3710, 0.0
      %3712 = vadd.xlane.f32.xlu0 %v3711
      %v3713 = vpop.xlane.xlu0 %3712
      %v3714 = vrcp.pop %v3713
      %v3715 = vmul.f32 %v3710, %v3714
      %v3716 = vld [vmem:[%s9] sm:$0x7]
      %v3717 = vlaneseq
      %v3718 = vshrl.u32 %v3717, 7
      %v3719 = vsub.s32 0, %v3718
      %v3720 = vrot.slane %v3715, %v3719
      %v3721 = vmul.f32 %v3716, %v3720
      %vm3722 = vcmask 215040
      %v3723 = vsel %vm3722, %v3721, 0.0
      %3724 = vadd.xlane.f32.xlu0 %v3723
      %v3725 = vpop.xlane.xlu0 %3724
      %vm3726 = vcmask 2048
      %3727 = vst.msk [vmem:[%s415] sm:$0x7] %vm3726, %v3725
      %p3728 = scmp.lt.s32.totalorder %s23, 1
      %s3729 = scalar_select %p3728, %s23, 1
      %s3730 = smul.addr %s3729, 8
      %s3731 = scalar_lea.vmem %s10, %s3730
      %p3732 = scmp.lt.s32.totalorder %s23, 1
      %s3733 = scalar_select %p3732, %s23, 1
      %s3734 = smul.addr %s3733, 4
      %s3735 = scalar_lea.vmem %s11, %s3734
      // Predicated region
      $region61: #{run_train.9} parent=59 // pred_check
        %p3736 = pneg %p261
      $region62: #{run_train.9} parent=59 // pred_check_branch
        %3738 = sbr.rel (%p3736) target = $region64
      $region63: #{run_train.9} parent=59 // pred_region
        _
      $region64: #{run_train.9} parent=59 // pred_fallthru
        _
      // Predicated region
      $region65: #{run_train.9} parent=59 // pred_check
        %p3739 = pneg %p287
      $region66: #{run_train.9} parent=59 // pred_check_branch
        %3741 = sbr.rel (%p3739) target = $region68
      $region67: #{run_train.9} parent=59 // pred_region
        _
      $region68: #{run_train.9} parent=59 // pred_fallthru
        _
    $region60: #{run_train.9} parent=5 // pred_fallthru
      _
    %p3742 = scmp.le.s32.totalorder 2, %s18
    // Predicated region
    $region69: #{run_train.9} parent=5 // pred_check
      %p3743 = pneg %p3742
    $region70: #{run_train.9} parent=5 // pred_check_branch
      %3745 = sbr.rel (%p3743) target = $region72
    $region71: #{run_train.9} parent=5 // pred_region
      %s3746 = ssub.s32 %s18, 2
      // Predicated region
      $region73: #{run_train.9} parent=71 // pred_check
        %p3747 = pneg %p267
      $region74: #{run_train.9} parent=71 // pred_check_branch
        %3749 = sbr.rel (%p3747) target = $region76
      $region75: #{run_train.9} parent=71 // pred_region
        %p3750 = scmp.lt.s32.totalorder %s24, 1
        %s3751 = scalar_select %p3750, %s24, 1
        %s3752 = smul.addr %s3751, 8
        %s3753 = scalar_lea.vmem %s10, %s3752
      $region76: #{run_train.9} parent=71 // pred_fallthru
        _
      // Predicated region
      $region77: #{run_train.9} parent=71 // pred_check
        %p3754 = pneg %p293
      $region78: #{run_train.9} parent=71 // pred_check_branch
        %3756 = sbr.rel (%p3754) target = $region80
      $region79: #{run_train.9} parent=71 // pred_region
        %p3757 = scmp.lt.s32.totalorder %s24, 1
        %s3758 = scalar_select %p3757, %s24, 1
        %s3759 = smul.addr %s3758, 4
        %s3760 = scalar_lea.vmem %s11, %s3759
      $region80: #{run_train.9} parent=71 // pred_fallthru
        _
    $region72: #{run_train.9} parent=5 // pred_fallthru
      _
  $region6: #{run_train.9} parent=0 // loop_footer
    %s22 = sadd.s32 1, %s18
  $region7: #{run_train.9} parent=0 // loop_footer_branch
    %17 = sbr.rel target = $region3
  $region8: #{run_train.9} parent=0 // loop_exit
    _

</llo_original>
